<compile_context>
chip_gen: v6e
topology: v6e:2x2x1
jax: 0.10.0
libtpu: 0.0.40
codegen_flags: <defaults>
</compile_context>

<pallas_src>
import jax
import jax.numpy as jnp
from jax import lax
from jax.experimental import pallas as pl
from jax.experimental.pallas import tpu as pltpu


def _round_up(x, m):
    return (x + m - 1) // m * m


# ---------------------------------------------------------------------------
# Pallas kernel: one direction per grid-axis-0 value, streamed over time chunks.
# ---------------------------------------------------------------------------
def lstm_dir_kernel(len_ref, gin_ref, whh_ref, out_ref, hid_ref, h_scr, c_scr):
    """grid = (2 directions ["parallel"], NC time-chunks ["arbitrary"]).

    len_ref : (Bp, 1)  int32     sequence lengths (padded rows have length 0)
    gin_ref : (Tc, Bp, 4*Hp) bf16  precomputed x@Wih + b for this direction/chunk
    whh_ref : (Hp, 4*Hp) bf16    hidden->gates weights (this direction), gates (i,f,o,g)
    out_ref : (Tc, Bp, Hp) f32   per-direction lane-dense outputs
    hid_ref : (Bp, Hp) f32       final hidden of this direction
    h_scr/c_scr : (Bp, Hp) f32   recurrent state carried across time-chunks
    """
    d = pl.program_id(0)              # 0 = forward, 1 = backward
    c = pl.program_id(1)              # chunk step in execution order
    num_chunks = pl.num_programs(1)
    Tc = gin_ref.shape[0]
    Hp = whh_ref.shape[0]

    @pl.when(c == 0)
    def _():
        h_scr[...] = jnp.zeros_like(h_scr)
        c_scr[...] = jnp.zeros_like(c_scr)

    lengths = len_ref[...]                                # (Bp, 1) int32
    # Actual chunk block loaded (forward walks 0..NC-1, backward walks NC-1..0).
    chunk_blk = (1 - d) * c + d * (num_chunks - 1 - c)
    base_t = chunk_blk * Tc

    def step(s, carry):
        # forward: in-chunk index s; backward: reversed within the chunk
        t = (1 - d) * s + d * (Tc - 1 - s)
        # Only serial matmul on the critical path: h @ Whh (bf16 MXU, f32 accumulate).
        gates = gin_ref[t].astype(jnp.float32) + jnp.dot(
            h_scr[...].astype(jnp.bfloat16), whh_ref[...],
            preferred_element_type=jnp.float32)
        # Gate order (i, f, o, g); each gate spans whole 128-lane groups.
        sig = jax.nn.sigmoid(gates[:, 0:3 * Hp])          # one EUP region for i,f,o
        i = sig[:, 0:Hp]
        f = sig[:, Hp:2 * Hp]
        o = sig[:, 2 * Hp:3 * Hp]
        g = jnp.tanh(gates[:, 3 * Hp:4 * Hp])
        c_new = f * c_scr[...] + i * g
        h_new = o * jnp.tanh(c_new)
        # Hoist the mask broadcast once; reuse it in all three selects.
        mask = jnp.broadcast_to(lengths > (base_t + t), h_new.shape)
        h_scr[...] = jnp.where(mask, h_new, h_scr[...])
        c_scr[...] = jnp.where(mask, c_new, c_scr[...])
        out_ref[t] = jnp.where(mask, h_new, 0.0)
        return carry

    lax.fori_loop(0, Tc, step, 0, unroll=min(8, Tc))

    @pl.when(c == num_chunks - 1)
    def _():
        hid_ref[...] = h_scr[...]


# ---------------------------------------------------------------------------
# Wrapper: big hoisted bf16 input projection + streamed pallas_call + un-padding.
# ---------------------------------------------------------------------------
def rnn_encoder_old(x, lengths, kparams, H):
    """Pallas equivalent of RNNEncoderOld.forward (lstm, 1 layer, bidirectional).

    x: (B, T, D) float32, lengths: (B,) int32
    returns (outputs (B, T, 2H), hidden (B, 2H))
    """
    B, T, D = x.shape
    wih, whh, b = kparams["wih"], kparams["whh"], kparams["b"]   # (2,D,4Hp)bf16,(2,Hp,4Hp)bf16,(2,4Hp)f32
    Hp = whh.shape[1]

    Bp = _round_up(B, 16)                   # sublane-pad batch (16 for bf16 tiles)

    # Per-chip streaming budget / VMEM cap.
    try:
        vmem_cap = int(getattr(pltpu.get_tpu_info(), "vmem_capacity_bytes",
                               64 * 1024 * 1024))
    except Exception:
        vmem_cap = 64 * 1024 * 1024
    small_vmem = vmem_cap <= 64 * 1024 * 1024
    stream_budget = (8 if small_vmem else 24) * 1024 * 1024

    # Time-chunk so streamed (gin bf16 + out f32) double-buffers fit the budget.
    per_t_bytes = Bp * (4 * Hp * 2 + Hp * 4) * 2
    Tc = int(max(1, min(T, stream_budget // per_t_bytes)))
    Tp = _round_up(T, Tc)
    NC = Tp // Tc

    # One big bf16 input projection for both directions (f32 accumulate), bias fused,
    # emitted time-major in bf16 so the dominant HBM stream is half-width.
    gin = jnp.einsum("btd,edg->etbg", x.astype(jnp.bfloat16), wih,
                     preferred_element_type=jnp.float32)
    gin = (gin + b[:, None, None, :]).astype(jnp.bfloat16)
    gin = jnp.pad(gin, ((0, 0), (0, Tp - T), (0, Bp - B), (0, 0)))   # (2,Tp,Bp,4Hp)
    len_p = jnp.pad(lengths.astype(jnp.int32), (0, Bp - B)).reshape(Bp, 1)

    def chunk_map(d, c):
        # forward direction walks chunks 0..NC-1, backward walks NC-1..0
        return (d, (1 - d) * c + d * (NC - 1 - c), 0, 0)

    vmem_need = (2 * Tc * Bp * 4 * Hp * 2      # gin blocks (bf16, double-buffered)
                 + 2 * Tc * Bp * Hp * 4        # output blocks (double-buffered)
                 + 2 * Hp * 4 * Hp * 2         # whh blocks (bf16)
                 + 2 * Bp * Hp * 4             # hid output blocks
                 + 2 * Bp * Hp * 4             # h/c scratch
                 + 2 * Bp * 128 * 4)           # lengths (lane-padded)
    vmem_cap_limit = (48 if small_vmem else 96) * 1024 * 1024
    vmem_limit = int(min(max(2 * vmem_need, 16 * 1024 * 1024), vmem_cap_limit))

    out, hid = pl.pallas_call(
        lstm_dir_kernel,
        out_shape=(jax.ShapeDtypeStruct((2, Tp, Bp, Hp), jnp.float32),
                   jax.ShapeDtypeStruct((2, Bp, Hp), jnp.float32)),
        grid_spec=pltpu.PrefetchScalarGridSpec(
            num_scalar_prefetch=0,
            grid=(2, NC),
            in_specs=[
                pl.BlockSpec((Bp, 1), lambda d, c: (0, 0)),              # lengths
                pl.BlockSpec((None, Tc, Bp, 4 * Hp), chunk_map),         # gates-in (bf16)
                pl.BlockSpec((None, Hp, 4 * Hp), lambda d, c: (d, 0, 0)),  # whh (bf16)
            ],
            out_specs=(
                pl.BlockSpec((None, Tc, Bp, Hp), chunk_map),             # outputs
                pl.BlockSpec((None, Bp, Hp), lambda d, c: (d, 0, 0)),    # final hidden
            ),
            scratch_shapes=[pltpu.VMEM((Bp, Hp), jnp.float32),
                            pltpu.VMEM((Bp, Hp), jnp.float32)],
        ),
        compiler_params=pltpu.CompilerParams(
            dimension_semantics=("parallel", "arbitrary"),
            vmem_limit_bytes=vmem_limit),
    )(len_p, gin, whh)

    out_f = out[0, :T, :B, :H]        # (T, B, H) lane-dense per-direction buffers
    out_b = out[1, :T, :B, :H]
    outputs = jnp.transpose(jnp.concatenate([out_f, out_b], axis=-1), (1, 0, 2))
    hidden = jnp.concatenate([hid[0, :B, :H], hid[1, :B, :H]], axis=-1)
    return outputs, hidden


# ---------------------------------------------------------------------------
# Parameters: raw PyTorch-shaped weights + kernel-side padded/packed layout.
# ---------------------------------------------------------------------------
def make_params(key, D, H):
    """PyTorch nn.LSTM(D, H, bidirectional=True) parameter shapes (gate order i,f,g,o)."""
    ks = jax.random.split(key, 8)
    scale = 1.0 / jnp.sqrt(jnp.float32(H))

    def u(k, shape):
        return jax.random.uniform(k, shape, jnp.float32, -scale, scale)

    return {
        "w_ih_f": u(ks[0], (4 * H, D)), "w_hh_f": u(ks[1], (4 * H, H)),
        "b_ih_f": u(ks[2], (4 * H,)),   "b_hh_f": u(ks[3], (4 * H,)),
        "w_ih_b": u(ks[4], (4 * H, D)), "w_hh_b": u(ks[5], (4 * H, H)),
        "b_ih_b": u(ks[6], (4 * H,)),   "b_hh_b": u(ks[7], (4 * H,)),
    }


def _pack_gates(w, H, Hp, gate_axis):
    """Split PyTorch's (i,f,g,o) gate axis, pad each gate to Hp (128-multiple) lanes,
    and re-pack in kernel order (i,f,o,g) so sigmoid covers one contiguous 3*Hp slice."""
    i, f, g, o = jnp.split(w, 4, axis=gate_axis)
    pad = [(0, 0)] * w.ndim
    pad[gate_axis] = (0, Hp - H)
    return jnp.concatenate([jnp.pad(p, pad) for p in (i, f, o, g)], axis=gate_axis)


def prepare_kernel_params(raw):
    """Pre-transpose, fuse biases, pad per-gate width to 128 lanes, reorder gates to
    (i,f,o,g), stack directions, and cast matmul operands to bf16 (f32 accumulate)."""
    H = raw["w_hh_f"].shape[1]
    Hp = _round_up(H, 128)

    def prep_dir(sfx):
        w_ih = _pack_gates(raw[f"w_ih_{sfx}"], H, Hp, 0)            # (4Hp, D)
        w_hh = _pack_gates(raw[f"w_hh_{sfx}"], H, Hp, 0)            # (4Hp, H)
        w_hh = jnp.pad(w_hh, ((0, 0), (0, Hp - H)))                 # (4Hp, Hp)
        bias = _pack_gates(raw[f"b_ih_{sfx}"] + raw[f"b_hh_{sfx}"], H, Hp, 0)
        return w_ih.T, w_hh.T, bias                                 # (D,4Hp),(Hp,4Hp),(4Hp,)

    wf, hf, bf = prep_dir("f")
    wb, hb, bb = prep_dir("b")
    return {
        "wih": jnp.stack([wf, wb]).astype(jnp.bfloat16),   # (2, D, 4Hp)
        "whh": jnp.stack([hf, hb]).astype(jnp.bfloat16),   # (2, Hp, 4Hp)
        "b": jnp.stack([bf, bb]),                          # (2, 4Hp) f32
    }


# ---------------------------------------------------------------------------
# Pure-JAX f32 reference (same math as torch.nn.LSTM on packed sequences).
# ---------------------------------------------------------------------------
def rnn_encoder_ref(x, lengths, raw):
    B, T, D = x.shape
    H = raw["w_hh_f"].shape[1]
    hi = jax.lax.Precision.HIGHEST

    def run_dir(sfx, reverse):
        wih = raw[f"w_ih_{sfx}"].T
        whh = raw[f"w_hh_{sfx}"].T
        b = raw[f"b_ih_{sfx}"] + raw[f"b_hh_{sfx}"]
        h = jnp.zeros((B, H), jnp.float32)
        c = jnp.zeros((B, H), jnp.float32)
        outs = [None] * T
        ts = range(T - 1, -1, -1) if reverse else range(T)
        for t in ts:
            gates = (jnp.dot(x[:, t, :], wih, precision=hi)
                     + jnp.dot(h, whh, precision=hi) + b)
            i = jax.nn.sigmoid(gates[:, :H])
            f = jax.nn.sigmoid(gates[:, H:2 * H])
            g = jnp.tanh(gates[:, 2 * H:3 * H])
            o = jax.nn.sigmoid(gates[:, 3 * H:])
            c_new = f * c + i * g
            h_new = o * jnp.tanh(c_new)
            m = (lengths > t)[:, None]
            h = jnp.where(m, h_new, h)
            c = jnp.where(m, c_new, c)
            outs[t] = jnp.where(m, h_new, 0.0)
        return jnp.stack(outs, axis=1), h

    of, hf = run_dir("f", False)
    ob, hb = run_dir("b", True)
    return jnp.concatenate([of, ob], -1), jnp.concatenate([hf, hb], -1)


if __name__ == "__main__":
    B, T, D, H = 2, 8, 16, 32  # batch, seq, word_embedding_size, hidden_size

    key = jax.random.PRNGKey(0)
    kx, kp = jax.random.split(key)
    x = jax.random.normal(kx, (B, T, D), jnp.float32)
    lengths = jnp.array([8, 5], jnp.int32)      # variable lengths, <= T
    raw = make_params(kp, D, H)
    kparams = prepare_kernel_params(raw)

    encode = jax.jit(lambda xx, ll: rnn_encoder_old(xx, ll, kparams, H))
    outputs, hidden = encode(x, lengths)
    jax.block_until_ready((outputs, hidden))

    ref_out, ref_hid = rnn_encoder_ref(x, lengths, raw)
    assert outputs.shape == (B, T, 2 * H) and hidden.shape == (B, 2 * H)
    # bf16 MXU operands (f32 accumulate) -> relaxed tolerance vs the f32 reference.
    assert jnp.allclose(outputs, ref_out, atol=3e-2, rtol=3e-2)
    assert jnp.allclose(hidden, ref_hid, atol=3e-2, rtol=3e-2)

    print("KERNEL_OK")
</pallas_src>

<mosaic_0001>
module attributes {stable_mosaic.version = 11 : i64} {
  func.func @lstm_dir_kernel(%arg0: i32, %arg1: i32, %arg2: memref<16x1xi32, #tpu.memory_space<vmem>>, %arg3: memref<1x8x16x512xbf16, #tpu.memory_space<vmem>>, %arg4: memref<1x128x512xbf16, #tpu.memory_space<vmem>>, %arg5: memref<1x8x16x128xf32, #tpu.memory_space<vmem>>, %arg6: memref<1x16x128xf32, #tpu.memory_space<vmem>>, %arg7: memref<16x128xf32, #tpu.memory_space<vmem>>, %arg8: memref<16x128xf32, #tpu.memory_space<vmem>>) attributes {dimension_semantics = [#tpu.dimension_semantics<parallel>, #tpu.dimension_semantics<arbitrary>], iteration_bounds = array<i64: 2, 1>, scalar_prefetch = 0 : i64, scratch_operands = 2 : i64, tpu.core_type = #tpu.core_type<tc>, window_params = [{pipeline_mode = #tpu.pipeline_mode<synchronous>, transform_indices = @transform_0, window_bounds = array<i64: 16, 1>}, {transform_indices = @transform_1, window_bounds = array<i64: 1, 8, 16, 512>}, {transform_indices = @transform_2, window_bounds = array<i64: 1, 128, 512>}, {transform_indices = @transform_3, window_bounds = array<i64: 1, 8, 16, 128>}, {transform_indices = @transform_4, window_bounds = array<i64: 1, 16, 128>}]} {
    %c0_i32 = arith.constant 0 : i32
    %0 = arith.cmpi eq, %arg1, %c0_i32 : i32
    %1 = arith.extui %0 : i1 to i32
    %c0_i32_0 = arith.constant 0 : i32
    %2 = arith.cmpi ne, %1, %c0_i32_0 : i32
    scf.if %2 {
      %cst_215 = arith.constant 0.000000e+00 : f32
      %405 = vector.broadcast %cst_215 : f32 to vector<16x128xf32>
      %c0_216 = arith.constant 0 : index
      %c0_217 = arith.constant 0 : index
      %406 = vector.load %arg7[%c0_216, %c0_217] : memref<16x128xf32, #tpu.memory_space<vmem>>, vector<16x128xf32>
      tpu.vector_store %arg7[%c0_216, %c0_217], %405 {strides = array<i32>} : memref<16x128xf32, #tpu.memory_space<vmem>>, vector<16x128xf32>,
      %cst_218 = arith.constant 0.000000e+00 : f32
      %407 = vector.broadcast %cst_218 : f32 to vector<16x128xf32>
      %c0_219 = arith.constant 0 : index
      %c0_220 = arith.constant 0 : index
      %408 = vector.load %arg8[%c0_219, %c0_220] : memref<16x128xf32, #tpu.memory_space<vmem>>, vector<16x128xf32>
      tpu.vector_store %arg8[%c0_219, %c0_220], %407 {strides = array<i32>} : memref<16x128xf32, #tpu.memory_space<vmem>>, vector<16x128xf32>,
    } else {
    }
    %c0 = arith.constant 0 : index
    %c0_1 = arith.constant 0 : index
    %3 = vector.load %arg2[%c0, %c0_1] : memref<16x1xi32, #tpu.memory_space<vmem>>, vector<16x1xi32>
    %c1_i32 = arith.constant 1 : i32
    %4 = arith.subi %c1_i32, %arg0 : i32
    %5 = arith.muli %4, %arg1 : i32
    %c0_i32_2 = arith.constant 0 : i32
    %6 = arith.subi %c0_i32_2, %arg1 : i32
    %7 = arith.muli %arg0, %6 : i32
    %8 = arith.addi %5, %7 : i32
    %c8_i32 = arith.constant 8 : i32
    %9 = arith.muli %8, %c8_i32 : i32
    %c0_i32_3 = arith.constant 0 : i32
    %c1_i32_4 = arith.constant 1 : i32
    %10 = arith.subi %c1_i32_4, %arg0 : i32
    %11 = arith.muli %10, %c0_i32_3 : i32
    %c7_i32 = arith.constant 7 : i32
    %12 = arith.subi %c7_i32, %c0_i32_3 : i32
    %13 = arith.muli %arg0, %12 : i32
    %14 = arith.addi %11, %13 : i32
    %c0_5 = arith.constant 0 : index
    %15 = arith.index_cast %14 : i32 to index
    %c0_6 = arith.constant 0 : index
    %c0_7 = arith.constant 0 : index
    %16 = vector.load %arg3[%c0_5, %15, %c0_6, %c0_7] : memref<1x8x16x512xbf16, #tpu.memory_space<vmem>>, vector<1x1x16x512xbf16>
    %17 = vector.shape_cast %16 : vector<1x1x16x512xbf16> to vector<16x512xbf16>
    %18 = arith.extf %17 : vector<16x512xbf16> to vector<16x512xf32>
    %c0_8 = arith.constant 0 : index
    %c0_9 = arith.constant 0 : index
    %19 = vector.load %arg7[%c0_8, %c0_9] : memref<16x128xf32, #tpu.memory_space<vmem>>, vector<16x128xf32>
    %20 = arith.truncf %19 : vector<16x128xf32> to vector<16x128xbf16>
    %c0_10 = arith.constant 0 : index
    %c0_11 = arith.constant 0 : index
    %c0_12 = arith.constant 0 : index
    %21 = vector.load %arg4[%c0_10, %c0_11, %c0_12] : memref<1x128x512xbf16, #tpu.memory_space<vmem>>, vector<1x128x512xbf16>
    %22 = vector.shape_cast %21 : vector<1x128x512xbf16> to vector<128x512xbf16>
    %cst = arith.constant dense<0.000000e+00> : vector<16x512xf32>
    %23 = tpu.matmul %20, %22, %cst {dimension_numbers = #tpu.dot_dimension_numbers<[1], [0], [0], [1], [0, 0, 1, 1], [], []>} : vector<16x128xbf16>, vector<128x512xbf16>, vector<16x512xf32> -> vector<16x512xf32>
    %24 = arith.addf %18, %23 : vector<16x512xf32>
    %25 = vector.extract_strided_slice %24 {offsets = [0, 0], sizes = [16, 384], strides = [1, 1]} : vector<16x512xf32> to vector<16x384xf32>
    %26 = arith.negf %25 : vector<16x384xf32>
    %27 = math.exp %26 : vector<16x384xf32>
    %cst_13 = arith.constant 1.000000e+00 : f32
    %28 = vector.broadcast %cst_13 : f32 to vector<16x384xf32>
    %29 = arith.addf %28, %27 : vector<16x384xf32>
    %30 = arith.divf %28, %29 : vector<16x384xf32>
    %31 = vector.extract_strided_slice %30 {offsets = [0, 0], sizes = [16, 128], strides = [1, 1]} : vector<16x384xf32> to vector<16x128xf32>
    %32 = vector.extract_strided_slice %30 {offsets = [0, 128], sizes = [16, 128], strides = [1, 1]} : vector<16x384xf32> to vector<16x128xf32>
    %33 = vector.extract_strided_slice %30 {offsets = [0, 256], sizes = [16, 128], strides = [1, 1]} : vector<16x384xf32> to vector<16x128xf32>
    %34 = vector.extract_strided_slice %24 {offsets = [0, 384], sizes = [16, 128], strides = [1, 1]} : vector<16x512xf32> to vector<16x128xf32>
    %35 = math.tanh %34 : vector<16x128xf32>
    %c0_14 = arith.constant 0 : index
    %c0_15 = arith.constant 0 : index
    %36 = vector.load %arg8[%c0_14, %c0_15] : memref<16x128xf32, #tpu.memory_space<vmem>>, vector<16x128xf32>
    %37 = arith.mulf %32, %36 : vector<16x128xf32>
    %38 = arith.mulf %31, %35 : vector<16x128xf32>
    %39 = arith.addf %37, %38 : vector<16x128xf32>
    %40 = math.tanh %39 : vector<16x128xf32>
    %41 = arith.mulf %33, %40 : vector<16x128xf32>
    %42 = arith.addi %9, %14 : i32
    %43 = vector.broadcast %42 : i32 to vector<16x1xi32>
    %44 = arith.cmpi sgt, %3, %43 : vector<16x1xi32>
    %45 = vector.shape_cast %44 : vector<16x1xi1> to vector<16x1xi1>
    %46 = vector.broadcast %45 : vector<16x1xi1> to vector<16x128xi1>
    %c0_16 = arith.constant 0 : index
    %c0_17 = arith.constant 0 : index
    %47 = vector.load %arg7[%c0_16, %c0_17] : memref<16x128xf32, #tpu.memory_space<vmem>>, vector<16x128xf32>
    %48 = arith.select %46, %41, %47 : vector<16x128xi1>, vector<16x128xf32>
    %c0_18 = arith.constant 0 : index
    %c0_19 = arith.constant 0 : index
    %49 = vector.load %arg7[%c0_18, %c0_19] : memref<16x128xf32, #tpu.memory_space<vmem>>, vector<16x128xf32>
    tpu.vector_store %arg7[%c0_18, %c0_19], %48 {strides = array<i32>} : memref<16x128xf32, #tpu.memory_space<vmem>>, vector<16x128xf32>,
    %c0_20 = arith.constant 0 : index
    %c0_21 = arith.constant 0 : index
    %50 = vector.load %arg8[%c0_20, %c0_21] : memref<16x128xf32, #tpu.memory_space<vmem>>, vector<16x128xf32>
    %51 = arith.select %46, %39, %50 : vector<16x128xi1>, vector<16x128xf32>
    %c0_22 = arith.constant 0 : index
    %c0_23 = arith.constant 0 : index
    %52 = vector.load %arg8[%c0_22, %c0_23] : memref<16x128xf32, #tpu.memory_space<vmem>>, vector<16x128xf32>
    tpu.vector_store %arg8[%c0_22, %c0_23], %51 {strides = array<i32>} : memref<16x128xf32, #tpu.memory_space<vmem>>, vector<16x128xf32>,
    %cst_24 = arith.constant 0.000000e+00 : f32
    %53 = vector.broadcast %cst_24 : f32 to vector<16x128xf32>
    %54 = arith.select %46, %41, %53 : vector<16x128xi1>, vector<16x128xf32>
    %c0_25 = arith.constant 0 : index
    %55 = arith.index_cast %14 : i32 to index
    %c0_26 = arith.constant 0 : index
    %c0_27 = arith.constant 0 : index
    %56 = vector.load %arg5[%c0_25, %55, %c0_26, %c0_27] : memref<1x8x16x128xf32, #tpu.memory_space<vmem>>, vector<1x1x16x128xf32>
    %57 = vector.shape_cast %56 : vector<1x1x16x128xf32> to vector<16x128xf32>
    %58 = vector.shape_cast %54 : vector<16x128xf32> to vector<1x1x16x128xf32>
    tpu.vector_store %arg5[%c0_25, %55, %c0_26, %c0_27], %58 {strides = array<i32>} : memref<1x8x16x128xf32, #tpu.memory_space<vmem>>, vector<1x1x16x128xf32>,
    %c1_i32_28 = arith.constant 1 : i32
    %c1_i32_29 = arith.constant 1 : i32
    %59 = arith.subi %c1_i32_29, %arg0 : i32
    %60 = arith.muli %59, %c1_i32_28 : i32
    %c7_i32_30 = arith.constant 7 : i32
    %61 = arith.subi %c7_i32_30, %c1_i32_28 : i32
    %62 = arith.muli %arg0, %61 : i32
    %63 = arith.addi %60, %62 : i32
    %c0_31 = arith.constant 0 : index
    %64 = arith.index_cast %63 : i32 to index
    %c0_32 = arith.constant 0 : index
    %c0_33 = arith.constant 0 : index
    %65 = vector.load %arg3[%c0_31, %64, %c0_32, %c0_33] : memref<1x8x16x512xbf16, #tpu.memory_space<vmem>>, vector<1x1x16x512xbf16>
    %66 = vector.shape_cast %65 : vector<1x1x16x512xbf16> to vector<16x512xbf16>
    %67 = arith.extf %66 : vector<16x512xbf16> to vector<16x512xf32>
    %c0_34 = arith.constant 0 : index
    %c0_35 = arith.constant 0 : index
    %68 = vector.load %arg7[%c0_34, %c0_35] : memref<16x128xf32, #tpu.memory_space<vmem>>, vector<16x128xf32>
    %69 = arith.truncf %68 : vector<16x128xf32> to vector<16x128xbf16>
    %c0_36 = arith.constant 0 : index
    %c0_37 = arith.constant 0 : index
    %c0_38 = arith.constant 0 : index
    %70 = vector.load %arg4[%c0_36, %c0_37, %c0_38] : memref<1x128x512xbf16, #tpu.memory_space<vmem>>, vector<1x128x512xbf16>
    %71 = vector.shape_cast %70 : vector<1x128x512xbf16> to vector<128x512xbf16>
    %cst_39 = arith.constant dense<0.000000e+00> : vector<16x512xf32>
    %72 = tpu.matmul %69, %71, %cst_39 {dimension_numbers = #tpu.dot_dimension_numbers<[1], [0], [0], [1], [0, 0, 1, 1], [], []>} : vector<16x128xbf16>, vector<128x512xbf16>, vector<16x512xf32> -> vector<16x512xf32>
    %73 = arith.addf %67, %72 : vector<16x512xf32>
    %74 = vector.extract_strided_slice %73 {offsets = [0, 0], sizes = [16, 384], strides = [1, 1]} : vector<16x512xf32> to vector<16x384xf32>
    %75 = arith.negf %74 : vector<16x384xf32>
    %76 = math.exp %75 : vector<16x384xf32>
    %cst_40 = arith.constant 1.000000e+00 : f32
    %77 = vector.broadcast %cst_40 : f32 to vector<16x384xf32>
    %78 = arith.addf %77, %76 : vector<16x384xf32>
    %79 = arith.divf %77, %78 : vector<16x384xf32>
    %80 = vector.extract_strided_slice %79 {offsets = [0, 0], sizes = [16, 128], strides = [1, 1]} : vector<16x384xf32> to vector<16x128xf32>
    %81 = vector.extract_strided_slice %79 {offsets = [0, 128], sizes = [16, 128], strides = [1, 1]} : vector<16x384xf32> to vector<16x128xf32>
    %82 = vector.extract_strided_slice %79 {offsets = [0, 256], sizes = [16, 128], strides = [1, 1]} : vector<16x384xf32> to vector<16x128xf32>
    %83 = vector.extract_strided_slice %73 {offsets = [0, 384], sizes = [16, 128], strides = [1, 1]} : vector<16x512xf32> to vector<16x128xf32>
    %84 = math.tanh %83 : vector<16x128xf32>
    %c0_41 = arith.constant 0 : index
    %c0_42 = arith.constant 0 : index
    %85 = vector.load %arg8[%c0_41, %c0_42] : memref<16x128xf32, #tpu.memory_space<vmem>>, vector<16x128xf32>
    %86 = arith.mulf %81, %85 : vector<16x128xf32>
    %87 = arith.mulf %80, %84 : vector<16x128xf32>
    %88 = arith.addf %86, %87 : vector<16x128xf32>
    %89 = math.tanh %88 : vector<16x128xf32>
    %90 = arith.mulf %82, %89 : vector<16x128xf32>
    %91 = arith.addi %9, %63 : i32
    %92 = vector.broadcast %91 : i32 to vector<16x1xi32>
    %93 = arith.cmpi sgt, %3, %92 : vector<16x1xi32>
    %94 = vector.shape_cast %93 : vector<16x1xi1> to vector<16x1xi1>
    %95 = vector.broadcast %94 : vector<16x1xi1> to vector<16x128xi1>
    %c0_43 = arith.constant 0 : index
    %c0_44 = arith.constant 0 : index
    %96 = vector.load %arg7[%c0_43, %c0_44] : memref<16x128xf32, #tpu.memory_space<vmem>>, vector<16x128xf32>
    %97 = arith.select %95, %90, %96 : vector<16x128xi1>, vector<16x128xf32>
    %c0_45 = arith.constant 0 : index
    %c0_46 = arith.constant 0 : index
    %98 = vector.load %arg7[%c0_45, %c0_46] : memref<16x128xf32, #tpu.memory_space<vmem>>, vector<16x128xf32>
    tpu.vector_store %arg7[%c0_45, %c0_46], %97 {strides = array<i32>} : memref<16x128xf32, #tpu.memory_space<vmem>>, vector<16x128xf32>,
    %c0_47 = arith.constant 0 : index
    %c0_48 = arith.constant 0 : index
    %99 = vector.load %arg8[%c0_47, %c0_48] : memref<16x128xf32, #tpu.memory_space<vmem>>, vector<16x128xf32>
    %100 = arith.select %95, %88, %99 : vector<16x128xi1>, vector<16x128xf32>
    %c0_49 = arith.constant 0 : index
    %c0_50 = arith.constant 0 : index
    %101 = vector.load %arg8[%c0_49, %c0_50] : memref<16x128xf32, #tpu.memory_space<vmem>>, vector<16x128xf32>
    tpu.vector_store %arg8[%c0_49, %c0_50], %100 {strides = array<i32>} : memref<16x128xf32, #tpu.memory_space<vmem>>, vector<16x128xf32>,
    %cst_51 = arith.constant 0.000000e+00 : f32
    %102 = vector.broadcast %cst_51 : f32 to vector<16x128xf32>
    %103 = arith.select %95, %90, %102 : vector<16x128xi1>, vector<16x128xf32>
    %c0_52 = arith.constant 0 : index
    %104 = arith.index_cast %63 : i32 to index
    %c0_53 = arith.constant 0 : index
    %c0_54 = arith.constant 0 : index
    %105 = vector.load %arg5[%c0_52, %104, %c0_53, %c0_54] : memref<1x8x16x128xf32, #tpu.memory_space<vmem>>, vector<1x1x16x128xf32>
    %106 = vector.shape_cast %105 : vector<1x1x16x128xf32> to vector<16x128xf32>
    %107 = vector.shape_cast %103 : vector<16x128xf32> to vector<1x1x16x128xf32>
    tpu.vector_store %arg5[%c0_52, %104, %c0_53, %c0_54], %107 {strides = array<i32>} : memref<1x8x16x128xf32, #tpu.memory_space<vmem>>, vector<1x1x16x128xf32>,
    %c2_i32 = arith.constant 2 : i32
    %c1_i32_55 = arith.constant 1 : i32
    %108 = arith.subi %c1_i32_55, %arg0 : i32
    %109 = arith.muli %108, %c2_i32 : i32
    %c7_i32_56 = arith.constant 7 : i32
    %110 = arith.subi %c7_i32_56, %c2_i32 : i32
    %111 = arith.muli %arg0, %110 : i32
    %112 = arith.addi %109, %111 : i32
    %c0_57 = arith.constant 0 : index
    %113 = arith.index_cast %112 : i32 to index
    %c0_58 = arith.constant 0 : index
    %c0_59 = arith.constant 0 : index
    %114 = vector.load %arg3[%c0_57, %113, %c0_58, %c0_59] : memref<1x8x16x512xbf16, #tpu.memory_space<vmem>>, vector<1x1x16x512xbf16>
    %115 = vector.shape_cast %114 : vector<1x1x16x512xbf16> to vector<16x512xbf16>
    %116 = arith.extf %115 : vector<16x512xbf16> to vector<16x512xf32>
    %c0_60 = arith.constant 0 : index
    %c0_61 = arith.constant 0 : index
    %117 = vector.load %arg7[%c0_60, %c0_61] : memref<16x128xf32, #tpu.memory_space<vmem>>, vector<16x128xf32>
    %118 = arith.truncf %117 : vector<16x128xf32> to vector<16x128xbf16>
    %c0_62 = arith.constant 0 : index
    %c0_63 = arith.constant 0 : index
    %c0_64 = arith.constant 0 : index
    %119 = vector.load %arg4[%c0_62, %c0_63, %c0_64] : memref<1x128x512xbf16, #tpu.memory_space<vmem>>, vector<1x128x512xbf16>
    %120 = vector.shape_cast %119 : vector<1x128x512xbf16> to vector<128x512xbf16>
    %cst_65 = arith.constant dense<0.000000e+00> : vector<16x512xf32>
    %121 = tpu.matmul %118, %120, %cst_65 {dimension_numbers = #tpu.dot_dimension_numbers<[1], [0], [0], [1], [0, 0, 1, 1], [], []>} : vector<16x128xbf16>, vector<128x512xbf16>, vector<16x512xf32> -> vector<16x512xf32>
    %122 = arith.addf %116, %121 : vector<16x512xf32>
    %123 = vector.extract_strided_slice %122 {offsets = [0, 0], sizes = [16, 384], strides = [1, 1]} : vector<16x512xf32> to vector<16x384xf32>
    %124 = arith.negf %123 : vector<16x384xf32>
    %125 = math.exp %124 : vector<16x384xf32>
    %cst_66 = arith.constant 1.000000e+00 : f32
    %126 = vector.broadcast %cst_66 : f32 to vector<16x384xf32>
    %127 = arith.addf %126, %125 : vector<16x384xf32>
    %128 = arith.divf %126, %127 : vector<16x384xf32>
    %129 = vector.extract_strided_slice %128 {offsets = [0, 0], sizes = [16, 128], strides = [1, 1]} : vector<16x384xf32> to vector<16x128xf32>
    %130 = vector.extract_strided_slice %128 {offsets = [0, 128], sizes = [16, 128], strides = [1, 1]} : vector<16x384xf32> to vector<16x128xf32>
    %131 = vector.extract_strided_slice %128 {offsets = [0, 256], sizes = [16, 128], strides = [1, 1]} : vector<16x384xf32> to vector<16x128xf32>
    %132 = vector.extract_strided_slice %122 {offsets = [0, 384], sizes = [16, 128], strides = [1, 1]} : vector<16x512xf32> to vector<16x128xf32>
    %133 = math.tanh %132 : vector<16x128xf32>
    %c0_67 = arith.constant 0 : index
    %c0_68 = arith.constant 0 : index
    %134 = vector.load %arg8[%c0_67, %c0_68] : memref<16x128xf32, #tpu.memory_space<vmem>>, vector<16x128xf32>
    %135 = arith.mulf %130, %134 : vector<16x128xf32>
    %136 = arith.mulf %129, %133 : vector<16x128xf32>
    %137 = arith.addf %135, %136 : vector<16x128xf32>
    %138 = math.tanh %137 : vector<16x128xf32>
    %139 = arith.mulf %131, %138 : vector<16x128xf32>
    %140 = arith.addi %9, %112 : i32
    %141 = vector.broadcast %140 : i32 to vector<16x1xi32>
    %142 = arith.cmpi sgt, %3, %141 : vector<16x1xi32>
    %143 = vector.shape_cast %142 : vector<16x1xi1> to vector<16x1xi1>
    %144 = vector.broadcast %143 : vector<16x1xi1> to vector<16x128xi1>
    %c0_69 = arith.constant 0 : index
    %c0_70 = arith.constant 0 : index
    %145 = vector.load %arg7[%c0_69, %c0_70] : memref<16x128xf32, #tpu.memory_space<vmem>>, vector<16x128xf32>
    %146 = arith.select %144, %139, %145 : vector<16x128xi1>, vector<16x128xf32>
    %c0_71 = arith.constant 0 : index
    %c0_72 = arith.constant 0 : index
    %147 = vector.load %arg7[%c0_71, %c0_72] : memref<16x128xf32, #tpu.memory_space<vmem>>, vector<16x128xf32>
    tpu.vector_store %arg7[%c0_71, %c0_72], %146 {strides = array<i32>} : memref<16x128xf32, #tpu.memory_space<vmem>>, vector<16x128xf32>,
    %c0_73 = arith.constant 0 : index
    %c0_74 = arith.constant 0 : index
    %148 = vector.load %arg8[%c0_73, %c0_74] : memref<16x128xf32, #tpu.memory_space<vmem>>, vector<16x128xf32>
    %149 = arith.select %144, %137, %148 : vector<16x128xi1>, vector<16x128xf32>
    %c0_75 = arith.constant 0 : index
    %c0_76 = arith.constant 0 : index
    %150 = vector.load %arg8[%c0_75, %c0_76] : memref<16x128xf32, #tpu.memory_space<vmem>>, vector<16x128xf32>
    tpu.vector_store %arg8[%c0_75, %c0_76], %149 {strides = array<i32>} : memref<16x128xf32, #tpu.memory_space<vmem>>, vector<16x128xf32>,
    %cst_77 = arith.constant 0.000000e+00 : f32
    %151 = vector.broadcast %cst_77 : f32 to vector<16x128xf32>
    %152 = arith.select %144, %139, %151 : vector<16x128xi1>, vector<16x128xf32>
    %c0_78 = arith.constant 0 : index
    %153 = arith.index_cast %112 : i32 to index
    %c0_79 = arith.constant 0 : index
    %c0_80 = arith.constant 0 : index
    %154 = vector.load %arg5[%c0_78, %153, %c0_79, %c0_80] : memref<1x8x16x128xf32, #tpu.memory_space<vmem>>, vector<1x1x16x128xf32>
    %155 = vector.shape_cast %154 : vector<1x1x16x128xf32> to vector<16x128xf32>
    %156 = vector.shape_cast %152 : vector<16x128xf32> to vector<1x1x16x128xf32>
    tpu.vector_store %arg5[%c0_78, %153, %c0_79, %c0_80], %156 {strides = array<i32>} : memref<1x8x16x128xf32, #tpu.memory_space<vmem>>, vector<1x1x16x128xf32>,
    %c3_i32 = arith.constant 3 : i32
    %c1_i32_81 = arith.constant 1 : i32
    %157 = arith.subi %c1_i32_81, %arg0 : i32
    %158 = arith.muli %157, %c3_i32 : i32
    %c7_i32_82 = arith.constant 7 : i32
    %159 = arith.subi %c7_i32_82, %c3_i32 : i32
    %160 = arith.muli %arg0, %159 : i32
    %161 = arith.addi %158, %160 : i32
    %c0_83 = arith.constant 0 : index
    %162 = arith.index_cast %161 : i32 to index
    %c0_84 = arith.constant 0 : index
    %c0_85 = arith.constant 0 : index
    %163 = vector.load %arg3[%c0_83, %162, %c0_84, %c0_85] : memref<1x8x16x512xbf16, #tpu.memory_space<vmem>>, vector<1x1x16x512xbf16>
    %164 = vector.shape_cast %163 : vector<1x1x16x512xbf16> to vector<16x512xbf16>
    %165 = arith.extf %164 : vector<16x512xbf16> to vector<16x512xf32>
    %c0_86 = arith.constant 0 : index
    %c0_87 = arith.constant 0 : index
    %166 = vector.load %arg7[%c0_86, %c0_87] : memref<16x128xf32, #tpu.memory_space<vmem>>, vector<16x128xf32>
    %167 = arith.truncf %166 : vector<16x128xf32> to vector<16x128xbf16>
    %c0_88 = arith.constant 0 : index
    %c0_89 = arith.constant 0 : index
    %c0_90 = arith.constant 0 : index
    %168 = vector.load %arg4[%c0_88, %c0_89, %c0_90] : memref<1x128x512xbf16, #tpu.memory_space<vmem>>, vector<1x128x512xbf16>
    %169 = vector.shape_cast %168 : vector<1x128x512xbf16> to vector<128x512xbf16>
    %cst_91 = arith.constant dense<0.000000e+00> : vector<16x512xf32>
    %170 = tpu.matmul %167, %169, %cst_91 {dimension_numbers = #tpu.dot_dimension_numbers<[1], [0], [0], [1], [0, 0, 1, 1], [], []>} : vector<16x128xbf16>, vector<128x512xbf16>, vector<16x512xf32> -> vector<16x512xf32>
    %171 = arith.addf %165, %170 : vector<16x512xf32>
    %172 = vector.extract_strided_slice %171 {offsets = [0, 0], sizes = [16, 384], strides = [1, 1]} : vector<16x512xf32> to vector<16x384xf32>
    %173 = arith.negf %172 : vector<16x384xf32>
    %174 = math.exp %173 : vector<16x384xf32>
    %cst_92 = arith.constant 1.000000e+00 : f32
    %175 = vector.broadcast %cst_92 : f32 to vector<16x384xf32>
    %176 = arith.addf %175, %174 : vector<16x384xf32>
    %177 = arith.divf %175, %176 : vector<16x384xf32>
    %178 = vector.extract_strided_slice %177 {offsets = [0, 0], sizes = [16, 128], strides = [1, 1]} : vector<16x384xf32> to vector<16x128xf32>
    %179 = vector.extract_strided_slice %177 {offsets = [0, 128], sizes = [16, 128], strides = [1, 1]} : vector<16x384xf32> to vector<16x128xf32>
    %180 = vector.extract_strided_slice %177 {offsets = [0, 256], sizes = [16, 128], strides = [1, 1]} : vector<16x384xf32> to vector<16x128xf32>
    %181 = vector.extract_strided_slice %171 {offsets = [0, 384], sizes = [16, 128], strides = [1, 1]} : vector<16x512xf32> to vector<16x128xf32>
    %182 = math.tanh %181 : vector<16x128xf32>
    %c0_93 = arith.constant 0 : index
    %c0_94 = arith.constant 0 : index
    %183 = vector.load %arg8[%c0_93, %c0_94] : memref<16x128xf32, #tpu.memory_space<vmem>>, vector<16x128xf32>
    %184 = arith.mulf %179, %183 : vector<16x128xf32>
    %185 = arith.mulf %178, %182 : vector<16x128xf32>
    %186 = arith.addf %184, %185 : vector<16x128xf32>
    %187 = math.tanh %186 : vector<16x128xf32>
    %188 = arith.mulf %180, %187 : vector<16x128xf32>
    %189 = arith.addi %9, %161 : i32
    %190 = vector.broadcast %189 : i32 to vector<16x1xi32>
    %191 = arith.cmpi sgt, %3, %190 : vector<16x1xi32>
    %192 = vector.shape_cast %191 : vector<16x1xi1> to vector<16x1xi1>
    %193 = vector.broadcast %192 : vector<16x1xi1> to vector<16x128xi1>
    %c0_95 = arith.constant 0 : index
    %c0_96 = arith.constant 0 : index
    %194 = vector.load %arg7[%c0_95, %c0_96] : memref<16x128xf32, #tpu.memory_space<vmem>>, vector<16x128xf32>
    %195 = arith.select %193, %188, %194 : vector<16x128xi1>, vector<16x128xf32>
    %c0_97 = arith.constant 0 : index
    %c0_98 = arith.constant 0 : index
    %196 = vector.load %arg7[%c0_97, %c0_98] : memref<16x128xf32, #tpu.memory_space<vmem>>, vector<16x128xf32>
    tpu.vector_store %arg7[%c0_97, %c0_98], %195 {strides = array<i32>} : memref<16x128xf32, #tpu.memory_space<vmem>>, vector<16x128xf32>,
    %c0_99 = arith.constant 0 : index
    %c0_100 = arith.constant 0 : index
    %197 = vector.load %arg8[%c0_99, %c0_100] : memref<16x128xf32, #tpu.memory_space<vmem>>, vector<16x128xf32>
    %198 = arith.select %193, %186, %197 : vector<16x128xi1>, vector<16x128xf32>
    %c0_101 = arith.constant 0 : index
    %c0_102 = arith.constant 0 : index
    %199 = vector.load %arg8[%c0_101, %c0_102] : memref<16x128xf32, #tpu.memory_space<vmem>>, vector<16x128xf32>
    tpu.vector_store %arg8[%c0_101, %c0_102], %198 {strides = array<i32>} : memref<16x128xf32, #tpu.memory_space<vmem>>, vector<16x128xf32>,
    %cst_103 = arith.constant 0.000000e+00 : f32
    %200 = vector.broadcast %cst_103 : f32 to vector<16x128xf32>
    %201 = arith.select %193, %188, %200 : vector<16x128xi1>, vector<16x128xf32>
    %c0_104 = arith.constant 0 : index
    %202 = arith.index_cast %161 : i32 to index
    %c0_105 = arith.constant 0 : index
    %c0_106 = arith.constant 0 : index
    %203 = vector.load %arg5[%c0_104, %202, %c0_105, %c0_106] : memref<1x8x16x128xf32, #tpu.memory_space<vmem>>, vector<1x1x16x128xf32>
    %204 = vector.shape_cast %203 : vector<1x1x16x128xf32> to vector<16x128xf32>
    %205 = vector.shape_cast %201 : vector<16x128xf32> to vector<1x1x16x128xf32>
    tpu.vector_store %arg5[%c0_104, %202, %c0_105, %c0_106], %205 {strides = array<i32>} : memref<1x8x16x128xf32, #tpu.memory_space<vmem>>, vector<1x1x16x128xf32>,
    %c4_i32 = arith.constant 4 : i32
    %c1_i32_107 = arith.constant 1 : i32
    %206 = arith.subi %c1_i32_107, %arg0 : i32
    %207 = arith.muli %206, %c4_i32 : i32
    %c7_i32_108 = arith.constant 7 : i32
    %208 = arith.subi %c7_i32_108, %c4_i32 : i32
    %209 = arith.muli %arg0, %208 : i32
    %210 = arith.addi %207, %209 : i32
    %c0_109 = arith.constant 0 : index
    %211 = arith.index_cast %210 : i32 to index
    %c0_110 = arith.constant 0 : index
    %c0_111 = arith.constant 0 : index
    %212 = vector.load %arg3[%c0_109, %211, %c0_110, %c0_111] : memref<1x8x16x512xbf16, #tpu.memory_space<vmem>>, vector<1x1x16x512xbf16>
    %213 = vector.shape_cast %212 : vector<1x1x16x512xbf16> to vector<16x512xbf16>
    %214 = arith.extf %213 : vector<16x512xbf16> to vector<16x512xf32>
    %c0_112 = arith.constant 0 : index
    %c0_113 = arith.constant 0 : index
    %215 = vector.load %arg7[%c0_112, %c0_113] : memref<16x128xf32, #tpu.memory_space<vmem>>, vector<16x128xf32>
    %216 = arith.truncf %215 : vector<16x128xf32> to vector<16x128xbf16>
    %c0_114 = arith.constant 0 : index
    %c0_115 = arith.constant 0 : index
    %c0_116 = arith.constant 0 : index
    %217 = vector.load %arg4[%c0_114, %c0_115, %c0_116] : memref<1x128x512xbf16, #tpu.memory_space<vmem>>, vector<1x128x512xbf16>
    %218 = vector.shape_cast %217 : vector<1x128x512xbf16> to vector<128x512xbf16>
    %cst_117 = arith.constant dense<0.000000e+00> : vector<16x512xf32>
    %219 = tpu.matmul %216, %218, %cst_117 {dimension_numbers = #tpu.dot_dimension_numbers<[1], [0], [0], [1], [0, 0, 1, 1], [], []>} : vector<16x128xbf16>, vector<128x512xbf16>, vector<16x512xf32> -> vector<16x512xf32>
    %220 = arith.addf %214, %219 : vector<16x512xf32>
    %221 = vector.extract_strided_slice %220 {offsets = [0, 0], sizes = [16, 384], strides = [1, 1]} : vector<16x512xf32> to vector<16x384xf32>
    %222 = arith.negf %221 : vector<16x384xf32>
    %223 = math.exp %222 : vector<16x384xf32>
    %cst_118 = arith.constant 1.000000e+00 : f32
    %224 = vector.broadcast %cst_118 : f32 to vector<16x384xf32>
    %225 = arith.addf %224, %223 : vector<16x384xf32>
    %226 = arith.divf %224, %225 : vector<16x384xf32>
    %227 = vector.extract_strided_slice %226 {offsets = [0, 0], sizes = [16, 128], strides = [1, 1]} : vector<16x384xf32> to vector<16x128xf32>
    %228 = vector.extract_strided_slice %226 {offsets = [0, 128], sizes = [16, 128], strides = [1, 1]} : vector<16x384xf32> to vector<16x128xf32>
    %229 = vector.extract_strided_slice %226 {offsets = [0, 256], sizes = [16, 128], strides = [1, 1]} : vector<16x384xf32> to vector<16x128xf32>
    %230 = vector.extract_strided_slice %220 {offsets = [0, 384], sizes = [16, 128], strides = [1, 1]} : vector<16x512xf32> to vector<16x128xf32>
    %231 = math.tanh %230 : vector<16x128xf32>
    %c0_119 = arith.constant 0 : index
    %c0_120 = arith.constant 0 : index
    %232 = vector.load %arg8[%c0_119, %c0_120] : memref<16x128xf32, #tpu.memory_space<vmem>>, vector<16x128xf32>
    %233 = arith.mulf %228, %232 : vector<16x128xf32>
    %234 = arith.mulf %227, %231 : vector<16x128xf32>
    %235 = arith.addf %233, %234 : vector<16x128xf32>
    %236 = math.tanh %235 : vector<16x128xf32>
    %237 = arith.mulf %229, %236 : vector<16x128xf32>
    %238 = arith.addi %9, %210 : i32
    %239 = vector.broadcast %238 : i32 to vector<16x1xi32>
    %240 = arith.cmpi sgt, %3, %239 : vector<16x1xi32>
    %241 = vector.shape_cast %240 : vector<16x1xi1> to vector<16x1xi1>
    %242 = vector.broadcast %241 : vector<16x1xi1> to vector<16x128xi1>
    %c0_121 = arith.constant 0 : index
    %c0_122 = arith.constant 0 : index
    %243 = vector.load %arg7[%c0_121, %c0_122] : memref<16x128xf32, #tpu.memory_space<vmem>>, vector<16x128xf32>
    %244 = arith.select %242, %237, %243 : vector<16x128xi1>, vector<16x128xf32>
    %c0_123 = arith.constant 0 : index
    %c0_124 = arith.constant 0 : index
    %245 = vector.load %arg7[%c0_123, %c0_124] : memref<16x128xf32, #tpu.memory_space<vmem>>, vector<16x128xf32>
    tpu.vector_store %arg7[%c0_123, %c0_124], %244 {strides = array<i32>} : memref<16x128xf32, #tpu.memory_space<vmem>>, vector<16x128xf32>,
    %c0_125 = arith.constant 0 : index
    %c0_126 = arith.constant 0 : index
    %246 = vector.load %arg8[%c0_125, %c0_126] : memref<16x128xf32, #tpu.memory_space<vmem>>, vector<16x128xf32>
    %247 = arith.select %242, %235, %246 : vector<16x128xi1>, vector<16x128xf32>
    %c0_127 = arith.constant 0 : index
    %c0_128 = arith.constant 0 : index
    %248 = vector.load %arg8[%c0_127, %c0_128] : memref<16x128xf32, #tpu.memory_space<vmem>>, vector<16x128xf32>
    tpu.vector_store %arg8[%c0_127, %c0_128], %247 {strides = array<i32>} : memref<16x128xf32, #tpu.memory_space<vmem>>, vector<16x128xf32>,
    %cst_129 = arith.constant 0.000000e+00 : f32
    %249 = vector.broadcast %cst_129 : f32 to vector<16x128xf32>
    %250 = arith.select %242, %237, %249 : vector<16x128xi1>, vector<16x128xf32>
    %c0_130 = arith.constant 0 : index
    %251 = arith.index_cast %210 : i32 to index
    %c0_131 = arith.constant 0 : index
    %c0_132 = arith.constant 0 : index
    %252 = vector.load %arg5[%c0_130, %251, %c0_131, %c0_132] : memref<1x8x16x128xf32, #tpu.memory_space<vmem>>, vector<1x1x16x128xf32>
    %253 = vector.shape_cast %252 : vector<1x1x16x128xf32> to vector<16x128xf32>
    %254 = vector.shape_cast %250 : vector<16x128xf32> to vector<1x1x16x128xf32>
    tpu.vector_store %arg5[%c0_130, %251, %c0_131, %c0_132], %254 {strides = array<i32>} : memref<1x8x16x128xf32, #tpu.memory_space<vmem>>, vector<1x1x16x128xf32>,
    %c5_i32 = arith.constant 5 : i32
    %c1_i32_133 = arith.constant 1 : i32
    %255 = arith.subi %c1_i32_133, %arg0 : i32
    %256 = arith.muli %255, %c5_i32 : i32
    %c7_i32_134 = arith.constant 7 : i32
    %257 = arith.subi %c7_i32_134, %c5_i32 : i32
    %258 = arith.muli %arg0, %257 : i32
    %259 = arith.addi %256, %258 : i32
    %c0_135 = arith.constant 0 : index
    %260 = arith.index_cast %259 : i32 to index
    %c0_136 = arith.constant 0 : index
    %c0_137 = arith.constant 0 : index
    %261 = vector.load %arg3[%c0_135, %260, %c0_136, %c0_137] : memref<1x8x16x512xbf16, #tpu.memory_space<vmem>>, vector<1x1x16x512xbf16>
    %262 = vector.shape_cast %261 : vector<1x1x16x512xbf16> to vector<16x512xbf16>
    %263 = arith.extf %262 : vector<16x512xbf16> to vector<16x512xf32>
    %c0_138 = arith.constant 0 : index
    %c0_139 = arith.constant 0 : index
    %264 = vector.load %arg7[%c0_138, %c0_139] : memref<16x128xf32, #tpu.memory_space<vmem>>, vector<16x128xf32>
    %265 = arith.truncf %264 : vector<16x128xf32> to vector<16x128xbf16>
    %c0_140 = arith.constant 0 : index
    %c0_141 = arith.constant 0 : index
    %c0_142 = arith.constant 0 : index
    %266 = vector.load %arg4[%c0_140, %c0_141, %c0_142] : memref<1x128x512xbf16, #tpu.memory_space<vmem>>, vector<1x128x512xbf16>
    %267 = vector.shape_cast %266 : vector<1x128x512xbf16> to vector<128x512xbf16>
    %cst_143 = arith.constant dense<0.000000e+00> : vector<16x512xf32>
    %268 = tpu.matmul %265, %267, %cst_143 {dimension_numbers = #tpu.dot_dimension_numbers<[1], [0], [0], [1], [0, 0, 1, 1], [], []>} : vector<16x128xbf16>, vector<128x512xbf16>, vector<16x512xf32> -> vector<16x512xf32>
    %269 = arith.addf %263, %268 : vector<16x512xf32>
    %270 = vector.extract_strided_slice %269 {offsets = [0, 0], sizes = [16, 384], strides = [1, 1]} : vector<16x512xf32> to vector<16x384xf32>
    %271 = arith.negf %270 : vector<16x384xf32>
    %272 = math.exp %271 : vector<16x384xf32>
    %cst_144 = arith.constant 1.000000e+00 : f32
    %273 = vector.broadcast %cst_144 : f32 to vector<16x384xf32>
    %274 = arith.addf %273, %272 : vector<16x384xf32>
    %275 = arith.divf %273, %274 : vector<16x384xf32>
    %276 = vector.extract_strided_slice %275 {offsets = [0, 0], sizes = [16, 128], strides = [1, 1]} : vector<16x384xf32> to vector<16x128xf32>
    %277 = vector.extract_strided_slice %275 {offsets = [0, 128], sizes = [16, 128], strides = [1, 1]} : vector<16x384xf32> to vector<16x128xf32>
    %278 = vector.extract_strided_slice %275 {offsets = [0, 256], sizes = [16, 128], strides = [1, 1]} : vector<16x384xf32> to vector<16x128xf32>
    %279 = vector.extract_strided_slice %269 {offsets = [0, 384], sizes = [16, 128], strides = [1, 1]} : vector<16x512xf32> to vector<16x128xf32>
    %280 = math.tanh %279 : vector<16x128xf32>
    %c0_145 = arith.constant 0 : index
    %c0_146 = arith.constant 0 : index
    %281 = vector.load %arg8[%c0_145, %c0_146] : memref<16x128xf32, #tpu.memory_space<vmem>>, vector<16x128xf32>
    %282 = arith.mulf %277, %281 : vector<16x128xf32>
    %283 = arith.mulf %276, %280 : vector<16x128xf32>
    %284 = arith.addf %282, %283 : vector<16x128xf32>
    %285 = math.tanh %284 : vector<16x128xf32>
    %286 = arith.mulf %278, %285 : vector<16x128xf32>
    %287 = arith.addi %9, %259 : i32
    %288 = vector.broadcast %287 : i32 to vector<16x1xi32>
    %289 = arith.cmpi sgt, %3, %288 : vector<16x1xi32>
    %290 = vector.shape_cast %289 : vector<16x1xi1> to vector<16x1xi1>
    %291 = vector.broadcast %290 : vector<16x1xi1> to vector<16x128xi1>
    %c0_147 = arith.constant 0 : index
    %c0_148 = arith.constant 0 : index
    %292 = vector.load %arg7[%c0_147, %c0_148] : memref<16x128xf32, #tpu.memory_space<vmem>>, vector<16x128xf32>
    %293 = arith.select %291, %286, %292 : vector<16x128xi1>, vector<16x128xf32>
    %c0_149 = arith.constant 0 : index
    %c0_150 = arith.constant 0 : index
    %294 = vector.load %arg7[%c0_149, %c0_150] : memref<16x128xf32, #tpu.memory_space<vmem>>, vector<16x128xf32>
    tpu.vector_store %arg7[%c0_149, %c0_150], %293 {strides = array<i32>} : memref<16x128xf32, #tpu.memory_space<vmem>>, vector<16x128xf32>,
    %c0_151 = arith.constant 0 : index
    %c0_152 = arith.constant 0 : index
    %295 = vector.load %arg8[%c0_151, %c0_152] : memref<16x128xf32, #tpu.memory_space<vmem>>, vector<16x128xf32>
    %296 = arith.select %291, %284, %295 : vector<16x128xi1>, vector<16x128xf32>
    %c0_153 = arith.constant 0 : index
    %c0_154 = arith.constant 0 : index
    %297 = vector.load %arg8[%c0_153, %c0_154] : memref<16x128xf32, #tpu.memory_space<vmem>>, vector<16x128xf32>
    tpu.vector_store %arg8[%c0_153, %c0_154], %296 {strides = array<i32>} : memref<16x128xf32, #tpu.memory_space<vmem>>, vector<16x128xf32>,
    %cst_155 = arith.constant 0.000000e+00 : f32
    %298 = vector.broadcast %cst_155 : f32 to vector<16x128xf32>
    %299 = arith.select %291, %286, %298 : vector<16x128xi1>, vector<16x128xf32>
    %c0_156 = arith.constant 0 : index
    %300 = arith.index_cast %259 : i32 to index
    %c0_157 = arith.constant 0 : index
    %c0_158 = arith.constant 0 : index
    %301 = vector.load %arg5[%c0_156, %300, %c0_157, %c0_158] : memref<1x8x16x128xf32, #tpu.memory_space<vmem>>, vector<1x1x16x128xf32>
    %302 = vector.shape_cast %301 : vector<1x1x16x128xf32> to vector<16x128xf32>
    %303 = vector.shape_cast %299 : vector<16x128xf32> to vector<1x1x16x128xf32>
    tpu.vector_store %arg5[%c0_156, %300, %c0_157, %c0_158], %303 {strides = array<i32>} : memref<1x8x16x128xf32, #tpu.memory_space<vmem>>, vector<1x1x16x128xf32>,
    %c6_i32 = arith.constant 6 : i32
    %c1_i32_159 = arith.constant 1 : i32
    %304 = arith.subi %c1_i32_159, %arg0 : i32
    %305 = arith.muli %304, %c6_i32 : i32
    %c7_i32_160 = arith.constant 7 : i32
    %306 = arith.subi %c7_i32_160, %c6_i32 : i32
    %307 = arith.muli %arg0, %306 : i32
    %308 = arith.addi %305, %307 : i32
    %c0_161 = arith.constant 0 : index
    %309 = arith.index_cast %308 : i32 to index
    %c0_162 = arith.constant 0 : index
    %c0_163 = arith.constant 0 : index
    %310 = vector.load %arg3[%c0_161, %309, %c0_162, %c0_163] : memref<1x8x16x512xbf16, #tpu.memory_space<vmem>>, vector<1x1x16x512xbf16>
    %311 = vector.shape_cast %310 : vector<1x1x16x512xbf16> to vector<16x512xbf16>
    %312 = arith.extf %311 : vector<16x512xbf16> to vector<16x512xf32>
    %c0_164 = arith.constant 0 : index
    %c0_165 = arith.constant 0 : index
    %313 = vector.load %arg7[%c0_164, %c0_165] : memref<16x128xf32, #tpu.memory_space<vmem>>, vector<16x128xf32>
    %314 = arith.truncf %313 : vector<16x128xf32> to vector<16x128xbf16>
    %c0_166 = arith.constant 0 : index
    %c0_167 = arith.constant 0 : index
    %c0_168 = arith.constant 0 : index
    %315 = vector.load %arg4[%c0_166, %c0_167, %c0_168] : memref<1x128x512xbf16, #tpu.memory_space<vmem>>, vector<1x128x512xbf16>
    %316 = vector.shape_cast %315 : vector<1x128x512xbf16> to vector<128x512xbf16>
    %cst_169 = arith.constant dense<0.000000e+00> : vector<16x512xf32>
    %317 = tpu.matmul %314, %316, %cst_169 {dimension_numbers = #tpu.dot_dimension_numbers<[1], [0], [0], [1], [0, 0, 1, 1], [], []>} : vector<16x128xbf16>, vector<128x512xbf16>, vector<16x512xf32> -> vector<16x512xf32>
    %318 = arith.addf %312, %317 : vector<16x512xf32>
    %319 = vector.extract_strided_slice %318 {offsets = [0, 0], sizes = [16, 384], strides = [1, 1]} : vector<16x512xf32> to vector<16x384xf32>
    %320 = arith.negf %319 : vector<16x384xf32>
    %321 = math.exp %320 : vector<16x384xf32>
    %cst_170 = arith.constant 1.000000e+00 : f32
    %322 = vector.broadcast %cst_170 : f32 to vector<16x384xf32>
    %323 = arith.addf %322, %321 : vector<16x384xf32>
    %324 = arith.divf %322, %323 : vector<16x384xf32>
    %325 = vector.extract_strided_slice %324 {offsets = [0, 0], sizes = [16, 128], strides = [1, 1]} : vector<16x384xf32> to vector<16x128xf32>
    %326 = vector.extract_strided_slice %324 {offsets = [0, 128], sizes = [16, 128], strides = [1, 1]} : vector<16x384xf32> to vector<16x128xf32>
    %327 = vector.extract_strided_slice %324 {offsets = [0, 256], sizes = [16, 128], strides = [1, 1]} : vector<16x384xf32> to vector<16x128xf32>
    %328 = vector.extract_strided_slice %318 {offsets = [0, 384], sizes = [16, 128], strides = [1, 1]} : vector<16x512xf32> to vector<16x128xf32>
    %329 = math.tanh %328 : vector<16x128xf32>
    %c0_171 = arith.constant 0 : index
    %c0_172 = arith.constant 0 : index
    %330 = vector.load %arg8[%c0_171, %c0_172] : memref<16x128xf32, #tpu.memory_space<vmem>>, vector<16x128xf32>
    %331 = arith.mulf %326, %330 : vector<16x128xf32>
    %332 = arith.mulf %325, %329 : vector<16x128xf32>
    %333 = arith.addf %331, %332 : vector<16x128xf32>
    %334 = math.tanh %333 : vector<16x128xf32>
    %335 = arith.mulf %327, %334 : vector<16x128xf32>
    %336 = arith.addi %9, %308 : i32
    %337 = vector.broadcast %336 : i32 to vector<16x1xi32>
    %338 = arith.cmpi sgt, %3, %337 : vector<16x1xi32>
    %339 = vector.shape_cast %338 : vector<16x1xi1> to vector<16x1xi1>
    %340 = vector.broadcast %339 : vector<16x1xi1> to vector<16x128xi1>
    %c0_173 = arith.constant 0 : index
    %c0_174 = arith.constant 0 : index
    %341 = vector.load %arg7[%c0_173, %c0_174] : memref<16x128xf32, #tpu.memory_space<vmem>>, vector<16x128xf32>
    %342 = arith.select %340, %335, %341 : vector<16x128xi1>, vector<16x128xf32>
    %c0_175 = arith.constant 0 : index
    %c0_176 = arith.constant 0 : index
    %343 = vector.load %arg7[%c0_175, %c0_176] : memref<16x128xf32, #tpu.memory_space<vmem>>, vector<16x128xf32>
    tpu.vector_store %arg7[%c0_175, %c0_176], %342 {strides = array<i32>} : memref<16x128xf32, #tpu.memory_space<vmem>>, vector<16x128xf32>,
    %c0_177 = arith.constant 0 : index
    %c0_178 = arith.constant 0 : index
    %344 = vector.load %arg8[%c0_177, %c0_178] : memref<16x128xf32, #tpu.memory_space<vmem>>, vector<16x128xf32>
    %345 = arith.select %340, %333, %344 : vector<16x128xi1>, vector<16x128xf32>
    %c0_179 = arith.constant 0 : index
    %c0_180 = arith.constant 0 : index
    %346 = vector.load %arg8[%c0_179, %c0_180] : memref<16x128xf32, #tpu.memory_space<vmem>>, vector<16x128xf32>
    tpu.vector_store %arg8[%c0_179, %c0_180], %345 {strides = array<i32>} : memref<16x128xf32, #tpu.memory_space<vmem>>, vector<16x128xf32>,
    %cst_181 = arith.constant 0.000000e+00 : f32
    %347 = vector.broadcast %cst_181 : f32 to vector<16x128xf32>
    %348 = arith.select %340, %335, %347 : vector<16x128xi1>, vector<16x128xf32>
    %c0_182 = arith.constant 0 : index
    %349 = arith.index_cast %308 : i32 to index
    %c0_183 = arith.constant 0 : index
    %c0_184 = arith.constant 0 : index
    %350 = vector.load %arg5[%c0_182, %349, %c0_183, %c0_184] : memref<1x8x16x128xf32, #tpu.memory_space<vmem>>, vector<1x1x16x128xf32>
    %351 = vector.shape_cast %350 : vector<1x1x16x128xf32> to vector<16x128xf32>
    %352 = vector.shape_cast %348 : vector<16x128xf32> to vector<1x1x16x128xf32>
    tpu.vector_store %arg5[%c0_182, %349, %c0_183, %c0_184], %352 {strides = array<i32>} : memref<1x8x16x128xf32, #tpu.memory_space<vmem>>, vector<1x1x16x128xf32>,
    %c7_i32_185 = arith.constant 7 : i32
    %c1_i32_186 = arith.constant 1 : i32
    %353 = arith.subi %c1_i32_186, %arg0 : i32
    %354 = arith.muli %353, %c7_i32_185 : i32
    %c7_i32_187 = arith.constant 7 : i32
    %355 = arith.subi %c7_i32_187, %c7_i32_185 : i32
    %356 = arith.muli %arg0, %355 : i32
    %357 = arith.addi %354, %356 : i32
    %c0_188 = arith.constant 0 : index
    %358 = arith.index_cast %357 : i32 to index
    %c0_189 = arith.constant 0 : index
    %c0_190 = arith.constant 0 : index
    %359 = vector.load %arg3[%c0_188, %358, %c0_189, %c0_190] : memref<1x8x16x512xbf16, #tpu.memory_space<vmem>>, vector<1x1x16x512xbf16>
    %360 = vector.shape_cast %359 : vector<1x1x16x512xbf16> to vector<16x512xbf16>
    %361 = arith.extf %360 : vector<16x512xbf16> to vector<16x512xf32>
    %c0_191 = arith.constant 0 : index
    %c0_192 = arith.constant 0 : index
    %362 = vector.load %arg7[%c0_191, %c0_192] : memref<16x128xf32, #tpu.memory_space<vmem>>, vector<16x128xf32>
    %363 = arith.truncf %362 : vector<16x128xf32> to vector<16x128xbf16>
    %c0_193 = arith.constant 0 : index
    %c0_194 = arith.constant 0 : index
    %c0_195 = arith.constant 0 : index
    %364 = vector.load %arg4[%c0_193, %c0_194, %c0_195] : memref<1x128x512xbf16, #tpu.memory_space<vmem>>, vector<1x128x512xbf16>
    %365 = vector.shape_cast %364 : vector<1x128x512xbf16> to vector<128x512xbf16>
    %cst_196 = arith.constant dense<0.000000e+00> : vector<16x512xf32>
    %366 = tpu.matmul %363, %365, %cst_196 {dimension_numbers = #tpu.dot_dimension_numbers<[1], [0], [0], [1], [0, 0, 1, 1], [], []>} : vector<16x128xbf16>, vector<128x512xbf16>, vector<16x512xf32> -> vector<16x512xf32>
    %367 = arith.addf %361, %366 : vector<16x512xf32>
    %368 = vector.extract_strided_slice %367 {offsets = [0, 0], sizes = [16, 384], strides = [1, 1]} : vector<16x512xf32> to vector<16x384xf32>
    %369 = arith.negf %368 : vector<16x384xf32>
    %370 = math.exp %369 : vector<16x384xf32>
    %cst_197 = arith.constant 1.000000e+00 : f32
    %371 = vector.broadcast %cst_197 : f32 to vector<16x384xf32>
    %372 = arith.addf %371, %370 : vector<16x384xf32>
    %373 = arith.divf %371, %372 : vector<16x384xf32>
    %374 = vector.extract_strided_slice %373 {offsets = [0, 0], sizes = [16, 128], strides = [1, 1]} : vector<16x384xf32> to vector<16x128xf32>
    %375 = vector.extract_strided_slice %373 {offsets = [0, 128], sizes = [16, 128], strides = [1, 1]} : vector<16x384xf32> to vector<16x128xf32>
    %376 = vector.extract_strided_slice %373 {offsets = [0, 256], sizes = [16, 128], strides = [1, 1]} : vector<16x384xf32> to vector<16x128xf32>
    %377 = vector.extract_strided_slice %367 {offsets = [0, 384], sizes = [16, 128], strides = [1, 1]} : vector<16x512xf32> to vector<16x128xf32>
    %378 = math.tanh %377 : vector<16x128xf32>
    %c0_198 = arith.constant 0 : index
    %c0_199 = arith.constant 0 : index
    %379 = vector.load %arg8[%c0_198, %c0_199] : memref<16x128xf32, #tpu.memory_space<vmem>>, vector<16x128xf32>
    %380 = arith.mulf %375, %379 : vector<16x128xf32>
    %381 = arith.mulf %374, %378 : vector<16x128xf32>
    %382 = arith.addf %380, %381 : vector<16x128xf32>
    %383 = math.tanh %382 : vector<16x128xf32>
    %384 = arith.mulf %376, %383 : vector<16x128xf32>
    %385 = arith.addi %9, %357 : i32
    %386 = vector.broadcast %385 : i32 to vector<16x1xi32>
    %387 = arith.cmpi sgt, %3, %386 : vector<16x1xi32>
    %388 = vector.shape_cast %387 : vector<16x1xi1> to vector<16x1xi1>
    %389 = vector.broadcast %388 : vector<16x1xi1> to vector<16x128xi1>
    %c0_200 = arith.constant 0 : index
    %c0_201 = arith.constant 0 : index
    %390 = vector.load %arg7[%c0_200, %c0_201] : memref<16x128xf32, #tpu.memory_space<vmem>>, vector<16x128xf32>
    %391 = arith.select %389, %384, %390 : vector<16x128xi1>, vector<16x128xf32>
    %c0_202 = arith.constant 0 : index
    %c0_203 = arith.constant 0 : index
    %392 = vector.load %arg7[%c0_202, %c0_203] : memref<16x128xf32, #tpu.memory_space<vmem>>, vector<16x128xf32>
    tpu.vector_store %arg7[%c0_202, %c0_203], %391 {strides = array<i32>} : memref<16x128xf32, #tpu.memory_space<vmem>>, vector<16x128xf32>,
    %c0_204 = arith.constant 0 : index
    %c0_205 = arith.constant 0 : index
    %393 = vector.load %arg8[%c0_204, %c0_205] : memref<16x128xf32, #tpu.memory_space<vmem>>, vector<16x128xf32>
    %394 = arith.select %389, %382, %393 : vector<16x128xi1>, vector<16x128xf32>
    %c0_206 = arith.constant 0 : index
    %c0_207 = arith.constant 0 : index
    %395 = vector.load %arg8[%c0_206, %c0_207] : memref<16x128xf32, #tpu.memory_space<vmem>>, vector<16x128xf32>
    tpu.vector_store %arg8[%c0_206, %c0_207], %394 {strides = array<i32>} : memref<16x128xf32, #tpu.memory_space<vmem>>, vector<16x128xf32>,
    %cst_208 = arith.constant 0.000000e+00 : f32
    %396 = vector.broadcast %cst_208 : f32 to vector<16x128xf32>
    %397 = arith.select %389, %384, %396 : vector<16x128xi1>, vector<16x128xf32>
    %c0_209 = arith.constant 0 : index
    %398 = arith.index_cast %357 : i32 to index
    %c0_210 = arith.constant 0 : index
    %c0_211 = arith.constant 0 : index
    %399 = vector.load %arg5[%c0_209, %398, %c0_210, %c0_211] : memref<1x8x16x128xf32, #tpu.memory_space<vmem>>, vector<1x1x16x128xf32>
    %400 = vector.shape_cast %399 : vector<1x1x16x128xf32> to vector<16x128xf32>
    %401 = vector.shape_cast %397 : vector<16x128xf32> to vector<1x1x16x128xf32>
    tpu.vector_store %arg5[%c0_209, %398, %c0_210, %c0_211], %401 {strides = array<i32>} : memref<1x8x16x128xf32, #tpu.memory_space<vmem>>, vector<1x1x16x128xf32>,
    %c8_i32_212 = arith.constant 8 : i32
    %c0_i32_213 = arith.constant 0 : i32
    %402 = arith.cmpi eq, %arg1, %c0_i32_213 : i32
    %403 = arith.extui %402 : i1 to i32
    %c0_i32_214 = arith.constant 0 : i32
    %404 = arith.cmpi ne, %403, %c0_i32_214 : i32
    scf.if %404 {
      %c0_215 = arith.constant 0 : index
      %c0_216 = arith.constant 0 : index
      %405 = vector.load %arg7[%c0_215, %c0_216] : memref<16x128xf32, #tpu.memory_space<vmem>>, vector<16x128xf32>
      %c0_217 = arith.constant 0 : index
      %c0_218 = arith.constant 0 : index
      %c0_219 = arith.constant 0 : index
      %406 = vector.load %arg6[%c0_217, %c0_218, %c0_219] : memref<1x16x128xf32, #tpu.memory_space<vmem>>, vector<1x16x128xf32>
      %407 = vector.shape_cast %406 : vector<1x16x128xf32> to vector<16x128xf32>
      %408 = vector.shape_cast %405 : vector<16x128xf32> to vector<1x16x128xf32>
      tpu.vector_store %arg6[%c0_217, %c0_218, %c0_219], %408 {strides = array<i32>} : memref<1x16x128xf32, #tpu.memory_space<vmem>>, vector<1x16x128xf32>,
    } else {
    }
    return
  }
  func.func @transform_0(%arg0: i32, %arg1: i32) -> (i32, i32) {
    %c0_i32 = arith.constant 0 : i32
    %c0_i32_0 = arith.constant 0 : i32
    %c0_i32_1 = arith.constant 0 : i32
    return %c0_i32, %c0_i32_0 : i32, i32
  }
  func.func @transform_1(%arg0: i32, %arg1: i32) -> (i32, i32, i32, i32) {
    %c1_i32 = arith.constant 1 : i32
    %0 = arith.subi %c1_i32, %arg0 : i32
    %1 = arith.muli %0, %arg1 : i32
    %c0_i32 = arith.constant 0 : i32
    %2 = arith.subi %c0_i32, %arg1 : i32
    %3 = arith.muli %arg0, %2 : i32
    %4 = arith.addi %1, %3 : i32
    %c0_i32_0 = arith.constant 0 : i32
    %c0_i32_1 = arith.constant 0 : i32
    %c0_i32_2 = arith.constant 0 : i32
    return %arg0, %4, %c0_i32_0, %c0_i32_1 : i32, i32, i32, i32
  }
  func.func @transform_2(%arg0: i32, %arg1: i32) -> (i32, i32, i32) {
    %c0_i32 = arith.constant 0 : i32
    %c0_i32_0 = arith.constant 0 : i32
    %c0_i32_1 = arith.constant 0 : i32
    return %arg0, %c0_i32, %c0_i32_0 : i32, i32, i32
  }
  func.func @transform_3(%arg0: i32, %arg1: i32) -> (i32, i32, i32, i32) {
    %c1_i32 = arith.constant 1 : i32
    %0 = arith.subi %c1_i32, %arg0 : i32
    %1 = arith.muli %0, %arg1 : i32
    %c0_i32 = arith.constant 0 : i32
    %2 = arith.subi %c0_i32, %arg1 : i32
    %3 = arith.muli %arg0, %2 : i32
    %4 = arith.addi %1, %3 : i32
    %c0_i32_0 = arith.constant 0 : i32
    %c0_i32_1 = arith.constant 0 : i32
    %c0_i32_2 = arith.constant 0 : i32
    return %arg0, %4, %c0_i32_0, %c0_i32_1 : i32, i32, i32, i32
  }
  func.func @transform_4(%arg0: i32, %arg1: i32) -> (i32, i32, i32) {
    %c0_i32 = arith.constant 0 : i32
    %c0_i32_0 = arith.constant 0 : i32
    %c0_i32_1 = arith.constant 0 : i32
    return %arg0, %c0_i32, %c0_i32_0 : i32, i32, i32
  }
}

</mosaic_0001>

<llo_original>
// kernel: _lambda_.1
$region0: #{_lambda_.1}
  #allocation0 [shape = 'u32[]', space=smem, size = 0x4, offset = 0x4, fixed_abs, tag = 'smem constant byte address 0x4 - core index']
  #allocation1 [shape = 'u32[144,128]{1,0:T(1,128)}', space=vmem, size = 0x12000, scoped, tag = 'internal scratch']
  #allocation2 [shape = 'f32[16,128]{1,0:T(8,128)}', space=vmem, size = 0x2000, scoped, tag = 'scratch operand']
  #allocation3 [shape = 'f32[16,128]{1,0:T(8,128)}', space=vmem, size = 0x2000, scoped, tag = 'scratch operand']
  %s0 = inlined_call_operand.vmem [shape: s32[16,1], index: 0, kind: input, shape index: {}]
  %s1 = inlined_call_operand.vmem [shape: bf16[2,8,16,512], index: 1, kind: input, shape index: {}]
  %s2 = inlined_call_operand.vmem [shape: bf16[2,128,512], index: 2, kind: input, shape index: {}]
  %s3 = inlined_call_operand.vmem [shape: f32[2,8,16,128], index: 3, kind: output, shape index: {0}]
  %s4 = inlined_call_operand.vmem [shape: f32[2,16,128], index: 4, kind: output, shape index: {1}]
  %5 = xla_tuple %s3, %s4
  %s6 = sld [smem:[#allocation0]]
  $region61: #{_lambda_.1} parent=0
    _
  %s8 = ssub.s32 1, %s6
  %s9 = scalar_select 0, %s8, %s6
  loop: start=0, step=1, limit=4
  $region2: #{_lambda_.1} parent=0 // loop_pre_header
    _
  $region3: #{_lambda_.1} parent=0 // loop_header
    %s11 = sphi 0, %s15
    %p12 = scmp.ge.s32.totalorder %s11, 4
    %s18 = sphi 0, %s30
    %s19 = sphi 0, %s26
    %s20 = sphi 0, %s18
    %s21 = sphi 0, %s19
    %s22 = sphi 0, %s20
    %s23 = sphi 0, %s21
    %s31 = sphi 0, %s31
    %s33 = sphi 0, %s31
    %s34 = sphi 0, %s33
    %s48 = sphi 0, %s34
    %s66 = sphi 0, %s68
    %s69 = sphi 0, %s66
    %s70 = sphi 0, %s69
    %s86 = sphi 0, %s70
    %s92 = sphi 0, %s94
    %s95 = sphi 0, %s92
    %s96 = sphi 0, %s95
    %s112 = sphi 0, %s96
    %s130 = sphi 0, %s132
    %s133 = sphi 0, %s130
    %s134 = sphi 0, %s133
    %s150 = sphi 0, %s134
    %s156 = sphi 0, %s158
    %s159 = sphi 0, %s156
    %s160 = sphi 0, %s159
    %s176 = sphi 0, %s160
  $region4: #{_lambda_.1} parent=0 // loop_header_branch
    %14 = sbr.rel (%p12) target = $region8
  $region5: #{_lambda_.1} parent=0 // loop_body
    %s16 = ssub.s32 %s11, 1
    %s17 = ssub.s32 %s11, 2
    %s24 = sadd.s32 1, %s19
    %p25 = scmp.ge.s32.totalorder %s24, 1
    %s26 = scalar_select %p25, 0, %s24
    %s27 = sadd.s32 1, %s18
    %s28 = scalar_select %p25, %s27, %s18
    %p29 = scmp.ge.s32.totalorder %s28, 2
    %s30 = scalar_select %p29, 0, %s28
    %s32 = sadd.s32 %s31, 1
    %p35 = scmp.eq.s32.totalorder %s11, 1
    %p36 = scmp.ne.s32.totalorder %s31, %s33
    %p37 = scmp.eq.s32.totalorder %s11, 0
    %p38 = por %p36, %p37
    %p39 = scmp.ne.s32.totalorder %s31, %s33
    %p40 = scmp.eq.s32.totalorder %s16, 1
    %p41 = por %p39, %p40
    %p42 = scmp.ne.s32.totalorder %s33, %s34
    %p43 = scmp.eq.s32.totalorder %s16, 0
    %p44 = por %p42, %p43
    %p45 = scmp.ne.s32.totalorder %s33, %s34
    %p46 = scmp.eq.s32.totalorder %s17, 1
    %p47 = por %p45, %p46
    %p49 = scmp.ne.s32.totalorder %s34, %s48
    %p50 = scmp.eq.s32.totalorder %s17, 0
    %p51 = por %p49, %p50
    %s52 = ssub.s32 1, %s18
    %s53 = smul.u32 %s52, %s19
    %s54 = ssub.s32 0, %s19
    %s55 = smul.u32 %s18, %s54
    %s56 = sadd.s32 %s53, %s55
    %s57 = ssub.s32 1, %s30
    %s58 = smul.u32 %s57, %s26
    %s59 = ssub.s32 0, %s26
    %s60 = smul.u32 %s30, %s59
    %s61 = sadd.s32 %s58, %s60
    %s62 = ssub.s32 %s18, %s30
    %s63 = ssub.s32 %s56, %s61
    %s64 = sor.u32 %s62, %s63
    %p65 = scmp.eq.s32.totalorder %s64, 0
    %s67 = sadd.s32 %s66, 1
    %s68 = scalar_select %p65, %s66, %s67
    %p71 = pneg %p65
    %p72 = scmp.eq.s32.totalorder %s11, 1
    %p73 = por %p71, %p72
    %p74 = scmp.ne.s32.totalorder %s66, %s69
    %p75 = scmp.eq.s32.totalorder %s11, 0
    %p76 = por %p74, %p75
    %p77 = scmp.ne.s32.totalorder %s66, %s69
    %p78 = scmp.eq.s32.totalorder %s16, 1
    %p79 = por %p77, %p78
    %p80 = scmp.ne.s32.totalorder %s69, %s70
    %p81 = scmp.eq.s32.totalorder %s16, 0
    %p82 = por %p80, %p81
    %p83 = scmp.ne.s32.totalorder %s69, %s70
    %p84 = scmp.eq.s32.totalorder %s17, 1
    %p85 = por %p83, %p84
    %p87 = scmp.ne.s32.totalorder %s70, %s86
    %p88 = scmp.eq.s32.totalorder %s17, 0
    %p89 = por %p87, %p88
    %s90 = ssub.s32 %s18, %s30
    %p91 = scmp.eq.s32.totalorder %s90, 0
    %s93 = sadd.s32 %s92, 1
    %s94 = scalar_select %p91, %s92, %s93
    %p97 = pneg %p91
    %p98 = scmp.eq.s32.totalorder %s11, 1
    %p99 = por %p97, %p98
    %p100 = scmp.ne.s32.totalorder %s92, %s95
    %p101 = scmp.eq.s32.totalorder %s11, 0
    %p102 = por %p100, %p101
    %p103 = scmp.ne.s32.totalorder %s92, %s95
    %p104 = scmp.eq.s32.totalorder %s16, 1
    %p105 = por %p103, %p104
    %p106 = scmp.ne.s32.totalorder %s95, %s96
    %p107 = scmp.eq.s32.totalorder %s16, 0
    %p108 = por %p106, %p107
    %p109 = scmp.ne.s32.totalorder %s95, %s96
    %p110 = scmp.eq.s32.totalorder %s17, 1
    %p111 = por %p109, %p110
    %p113 = scmp.ne.s32.totalorder %s96, %s112
    %p114 = scmp.eq.s32.totalorder %s17, 0
    %p115 = por %p113, %p114
    %s116 = ssub.s32 1, %s18
    %s117 = smul.u32 %s116, %s19
    %s118 = ssub.s32 0, %s19
    %s119 = smul.u32 %s18, %s118
    %s120 = sadd.s32 %s117, %s119
    %s121 = ssub.s32 1, %s30
    %s122 = smul.u32 %s121, %s26
    %s123 = ssub.s32 0, %s26
    %s124 = smul.u32 %s30, %s123
    %s125 = sadd.s32 %s122, %s124
    %s126 = ssub.s32 %s18, %s30
    %s127 = ssub.s32 %s120, %s125
    %s128 = sor.u32 %s126, %s127
    %p129 = scmp.eq.s32.totalorder %s128, 0
    %s131 = sadd.s32 %s130, 1
    %s132 = scalar_select %p129, %s130, %s131
    %p135 = pneg %p129
    %p136 = scmp.eq.s32.totalorder %s11, 1
    %p137 = por %p135, %p136
    %p138 = scmp.ne.s32.totalorder %s130, %s133
    %p139 = scmp.eq.s32.totalorder %s11, 0
    %p140 = por %p138, %p139
    %p141 = scmp.ne.s32.totalorder %s130, %s133
    %p142 = scmp.eq.s32.totalorder %s16, 1
    %p143 = por %p141, %p142
    %p144 = scmp.ne.s32.totalorder %s133, %s134
    %p145 = scmp.eq.s32.totalorder %s16, 0
    %p146 = por %p144, %p145
    %p147 = scmp.ne.s32.totalorder %s133, %s134
    %p148 = scmp.eq.s32.totalorder %s17, 1
    %p149 = por %p147, %p148
    %p151 = scmp.ne.s32.totalorder %s134, %s150
    %p152 = scmp.eq.s32.totalorder %s17, 0
    %p153 = por %p151, %p152
    %s154 = ssub.s32 %s18, %s30
    %p155 = scmp.eq.s32.totalorder %s154, 0
    %s157 = sadd.s32 %s156, 1
    %s158 = scalar_select %p155, %s156, %s157
    %p161 = pneg %p155
    %p162 = scmp.eq.s32.totalorder %s11, 1
    %p163 = por %p161, %p162
    %p164 = scmp.ne.s32.totalorder %s156, %s159
    %p165 = scmp.eq.s32.totalorder %s11, 0
    %p166 = por %p164, %p165
    %p167 = scmp.ne.s32.totalorder %s156, %s159
    %p168 = scmp.eq.s32.totalorder %s16, 1
    %p169 = por %p167, %p168
    %p170 = scmp.ne.s32.totalorder %s159, %s160
    %p171 = scmp.eq.s32.totalorder %s16, 0
    %p172 = por %p170, %p171
    %p173 = scmp.ne.s32.totalorder %s159, %s160
    %p174 = scmp.eq.s32.totalorder %s17, 1
    %p175 = por %p173, %p174
    %p177 = scmp.ne.s32.totalorder %s160, %s176
    %p178 = scmp.eq.s32.totalorder %s17, 0
    %p179 = por %p177, %p178
    %p180 = scmp.le.s32.totalorder 1, %s11
    %p181 = scmp.lt.s32.totalorder %s11, 3
    %p182 = pnand %p180, %p181
    %p183 = pneg %p182
    // Predicated region
    $region9: #{_lambda_.1} parent=5 // pred_check
      _
    $region10: #{_lambda_.1} parent=5 // pred_check_branch
      %185 = sbr.rel (%p182) target = $region12
    $region11: #{_lambda_.1} parent=5 // pred_region
      %s186 = ssub.s32 %s11, 1
      // Predicated region
      $region13: #{_lambda_.1} parent=11 // pred_check
        %p187 = pneg %p44
      $region14: #{_lambda_.1} parent=11 // pred_check_branch
        %189 = sbr.rel (%p187) target = $region16
      $region15: #{_lambda_.1} parent=11 // pred_region
        _
      $region16: #{_lambda_.1} parent=11 // pred_fallthru
        _
    $region12: #{_lambda_.1} parent=5 // pred_fallthru
      _
    %p190 = scmp.lt.s32.totalorder %s11, 2
    // Predicated region
    $region17: #{_lambda_.1} parent=5 // pred_check
      %p191 = pneg %p190
    $region18: #{_lambda_.1} parent=5 // pred_check_branch
      %193 = sbr.rel (%p191) target = $region20
    $region19: #{_lambda_.1} parent=5 // pred_region
      // Predicated region
      $region21: #{_lambda_.1} parent=19 // pred_check
        %p194 = pneg %p76
      $region22: #{_lambda_.1} parent=19 // pred_check_branch
        %196 = sbr.rel (%p194) target = $region24
      $region23: #{_lambda_.1} parent=19 // pred_region
        %s197 = ssub.s32 1, %s18
        %s198 = smul.u32 %s197, %s19
        %s199 = ssub.s32 0, %s19
        %s200 = smul.u32 %s18, %s199
        %s201 = sadd.s32 %s198, %s200
        %s202 = smul.u32 8, %s201
        %p203 = scmp.lt.s32.totalorder %s18, 1
        %s204 = scalar_select %p203, %s18, 1
        %p205 = scmp.lt.s32.totalorder %s202, 7
        %s206 = scalar_select %p205, %s202, 7
        %s207 = smul.addr %s206, 8
        %s208 = smul.addr %s204, 64
        %s209 = sadd.s32 %s207, %s208
        %s210 = smul.addr %s209, 4
        %s211 = scalar_lea.vmem %s1, %s210
        %s212 = ssub.s32 1, %s18
        %s213 = smul.u32 %s212, %s19
        %s214 = ssub.s32 0, %s19
        %s215 = smul.u32 %s18, %s214
        %s216 = sadd.s32 %s213, %s215
        %s217 = smul.u32 8, %s216
      $region24: #{_lambda_.1} parent=19 // pred_fallthru
        _
      // Predicated region
      $region25: #{_lambda_.1} parent=19 // pred_check
        %p218 = pneg %p102
      $region26: #{_lambda_.1} parent=19 // pred_check_branch
        %220 = sbr.rel (%p218) target = $region28
      $region27: #{_lambda_.1} parent=19 // pred_region
        %p221 = scmp.lt.s32.totalorder %s18, 1
        %s222 = scalar_select %p221, %s18, 1
        %s223 = smul.addr %s222, 64
        %s224 = smul.addr %s223, 4
        %s225 = scalar_lea.vmem %s2, %s224
      $region28: #{_lambda_.1} parent=19 // pred_fallthru
        _
    $region20: #{_lambda_.1} parent=5 // pred_fallthru
      _
    %p226 = scmp.le.s32.totalorder 1, %s11
    %p227 = scmp.lt.s32.totalorder %s11, 3
    %p228 = pnand %p226, %p227
    %p229 = pneg %p228
    // Predicated region
    $region29: #{_lambda_.1} parent=5 // pred_check
      _
    $region30: #{_lambda_.1} parent=5 // pred_check_branch
      %231 = sbr.rel (%p228) target = $region32
    $region31: #{_lambda_.1} parent=5 // pred_region
      %s232 = ssub.s32 %s11, 1
      %p233 = pneg %p44
      %p234 = pneg %p41
      %s235 = ssub.s32 1, %s20
      %s236 = smul.u32 %s235, %s21
      %s237 = ssub.s32 0, %s21
      %s238 = smul.u32 %s20, %s237
      %s239 = sadd.s32 %s236, %s238
      %s240 = smul.u32 8, %s239
      %p241 = scmp.lt.s32.totalorder %s20, 1
      %s242 = scalar_select %p241, %s20, 1
      %p243 = scmp.lt.s32.totalorder %s240, 7
      %s244 = scalar_select %p243, %s240, 7
      %s245 = smul.addr %s244, 8
      %s246 = smul.addr %s242, 64
      %s247 = sadd.s32 %s245, %s246
      %s248 = smul.addr %s247, 4
      %s249 = scalar_lea.vmem %s1, %s248
      %p250 = pneg %p82
      %p251 = pneg %p79
      %p252 = scmp.lt.s32.totalorder %s20, 1
      %s253 = scalar_select %p252, %s20, 1
      %s254 = smul.addr %s253, 64
      %s255 = smul.addr %s254, 4
      %s256 = scalar_lea.vmem %s2, %s255
      %p257 = pneg %p108
      %p258 = pneg %p105
      %p259 = pneg %p146
      %p260 = pneg %p143
      %s261 = ssub.s32 1, %s20
      %s262 = smul.u32 %s261, %s21
      %s263 = ssub.s32 0, %s21
      %s264 = smul.u32 %s20, %s263
      %s265 = sadd.s32 %s262, %s264
      %s266 = smul.u32 8, %s265
      %p267 = scmp.lt.s32.totalorder %s20, 1
      %s268 = scalar_select %p267, %s20, 1
      %p269 = scmp.lt.s32.totalorder %s266, 7
      %s270 = scalar_select %p269, %s266, 7
      %s271 = smul.addr %s270, 2
      %s272 = smul.addr %s268, 16
      %s273 = sadd.s32 %s271, %s272
      %s274 = smul.addr %s273, 8
      %s275 = scalar_lea.vmem %s3, %s274
      %p276 = pneg %p172
      %p277 = pneg %p169
      %p278 = scmp.lt.s32.totalorder %s20, 1
      %s279 = scalar_select %p278, %s20, 1
      %s280 = smul.addr %s279, 2
      %s281 = smul.addr %s280, 8
      %s282 = scalar_lea.vmem %s4, %s281
      %s283 = ssub.s32 1, %s20
      %s284 = smul.u32 %s283, %s21
      %s285 = ssub.s32 0, %s21
      %s286 = smul.u32 %s20, %s285
      %s287 = sadd.s32 %s284, %s286
      %s288 = smul.u32 8, %s287
      %p289 = scmp.lt.s32.totalorder %s20, 1
      %s290 = scalar_select %p289, %s20, 1
      %p291 = scmp.lt.s32.totalorder %s288, 7
      %s292 = scalar_select %p291, %s288, 7
      %s293 = smul.addr %s292, 8
      %s294 = smul.addr %s290, 64
      %s295 = sadd.s32 %s293, %s294
      %s296 = smul.addr %s295, 4
      %s297 = scalar_lea.vmem %s1, %s296
      %s298 = ssub.s32 1, %s20
      %s299 = smul.u32 %s298, %s21
      %s300 = ssub.s32 0, %s21
      %s301 = smul.u32 %s20, %s300
      %s302 = sadd.s32 %s299, %s301
      %s303 = smul.u32 8, %s302
      %p304 = scmp.lt.s32.totalorder %s20, 1
      %s305 = scalar_select %p304, %s20, 1
      %s306 = smul.addr %s305, 64
      %s307 = smul.addr %s306, 4
      %s308 = scalar_lea.vmem %s2, %s307
      %s309 = ssub.s32 1, %s20
      %s310 = smul.u32 %s309, %s21
      %s311 = ssub.s32 0, %s21
      %s312 = smul.u32 %s20, %s311
      %s313 = sadd.s32 %s310, %s312
      %s314 = smul.u32 8, %s313
      %p315 = scmp.lt.s32.totalorder %s20, 1
      %s316 = scalar_select %p315, %s20, 1
      %p317 = scmp.lt.s32.totalorder %s314, 7
      %s318 = scalar_select %p317, %s314, 7
      %s319 = smul.addr %s318, 2
      %s320 = smul.addr %s316, 16
      %s321 = sadd.s32 %s319, %s320
      %s322 = smul.addr %s321, 8
      %s323 = scalar_lea.vmem %s3, %s322
      %s324 = ssub.s32 1, %s20
      %s325 = smul.u32 %s324, %s21
      %s326 = ssub.s32 0, %s21
      %s327 = smul.u32 %s20, %s326
      %s328 = sadd.s32 %s325, %s327
      %s329 = smul.u32 8, %s328
      %p330 = scmp.lt.s32.totalorder %s20, 1
      %s331 = scalar_select %p330, %s20, 1
      %s332 = smul.addr %s331, 2
      %s333 = smul.addr %s332, 8
      %s334 = scalar_lea.vmem %s4, %s333
      %p336 = scmp.eq.s32.totalorder %s21, 0
      // Predicated region
      $region33: #{_lambda_.1} parent=31 // pred_check
        %p337 = pneg %p336
      $region34: #{_lambda_.1} parent=31 // pred_check_branch
        %339 = sbr.rel (%p337) target = $region36
      $region35: #{_lambda_.1} parent=31 // pred_region
        %340 = vst [vmem:[#allocation2] sm:$0xff] 0.0
        %341 = vst [vmem:[#allocation2 + $0x8] sm:$0xff] 0.0
        %342 = vst [vmem:[#allocation3] sm:$0xff] 0.0
        %343 = vst [vmem:[#allocation3 + $0x8] sm:$0xff] 0.0
      $region36: #{_lambda_.1} parent=31 // pred_fallthru
        _
      %v344 = vld [vmem:[%s0] sm:$0xff]
      %v345 = vld [vmem:[%s0 + $0x8] sm:$0xff]
      %s346 = ssub.s32 1, %s20
      %s347 = smul.u32 %s346, %s21
      %s348 = ssub.s32 0, %s21
      %s349 = smul.u32 %s20, %s348
      %s350 = sadd.s32 %s347, %s349
      %s351 = smul.u32 %s350, 8
      %s352 = smul.u32 %s20, 7
      %s353 = smul.u32 %s352, 8
      %s354 = smul.addr %s353, 4
      %s355 = scalar_lea.vmem %s297, %s354
      %v356 = vld [vmem:[%s355] sm:$0xff]
      %v357 = vld [vmem:[%s355 + $0x8] sm:$0xff]
      %v358 = vld [vmem:[%s355 + $0x10] sm:$0xff]
      %v359 = vld [vmem:[%s355 + $0x18] sm:$0xff]
      %v360 = vunpack.c.l.bf16 %v356
      %v361 = vunpack.c.h.bf16 %v356
      %v362 = vunpack.c.l.bf16 %v357
      %v363 = vunpack.c.h.bf16 %v357
      %v364 = vunpack.c.l.bf16 %v358
      %v365 = vunpack.c.h.bf16 %v358
      %v366 = vunpack.c.l.bf16 %v359
      %v367 = vunpack.c.h.bf16 %v359
      %v368 = vld [vmem:[#allocation2] sm:$0xff]
      %v369 = vld [vmem:[#allocation2 + $0x8] sm:$0xff]
      %v370 = vpack.c.bf16 %v369, %v368
      %v371 = vld [vmem:[%s308] sm:$0xff]
      %v372 = vld [vmem:[%s308 + $0x8] sm:$0xff]
      %v373 = vld [vmem:[%s308 + $0x10] sm:$0xff]
      %v374 = vld [vmem:[%s308 + $0x18] sm:$0xff]
      %v375 = vld [vmem:[%s308 + $0x20] sm:$0xff]
      %v376 = vld [vmem:[%s308 + $0x28] sm:$0xff]
      %v377 = vld [vmem:[%s308 + $0x30] sm:$0xff]
      %v378 = vld [vmem:[%s308 + $0x38] sm:$0xff]
      %v379 = vld [vmem:[%s308 + $0x40] sm:$0xff]
      %v380 = vld [vmem:[%s308 + $0x48] sm:$0xff]
      %v381 = vld [vmem:[%s308 + $0x50] sm:$0xff]
      %v382 = vld [vmem:[%s308 + $0x58] sm:$0xff]
      %v383 = vld [vmem:[%s308 + $0x60] sm:$0xff]
      %v384 = vld [vmem:[%s308 + $0x68] sm:$0xff]
      %v385 = vld [vmem:[%s308 + $0x70] sm:$0xff]
      %v386 = vld [vmem:[%s308 + $0x78] sm:$0xff]
      %v387 = vld [vmem:[%s308 + $0x80] sm:$0xff]
      %v388 = vld [vmem:[%s308 + $0x88] sm:$0xff]
      %v389 = vld [vmem:[%s308 + $0x90] sm:$0xff]
      %v390 = vld [vmem:[%s308 + $0x98] sm:$0xff]
      %v391 = vld [vmem:[%s308 + $0xa0] sm:$0xff]
      %v392 = vld [vmem:[%s308 + $0xa8] sm:$0xff]
      %v393 = vld [vmem:[%s308 + $0xb0] sm:$0xff]
      %v394 = vld [vmem:[%s308 + $0xb8] sm:$0xff]
      %v395 = vld [vmem:[%s308 + $0xc0] sm:$0xff]
      %v396 = vld [vmem:[%s308 + $0xc8] sm:$0xff]
      %v397 = vld [vmem:[%s308 + $0xd0] sm:$0xff]
      %v398 = vld [vmem:[%s308 + $0xd8] sm:$0xff]
      %v399 = vld [vmem:[%s308 + $0xe0] sm:$0xff]
      %v400 = vld [vmem:[%s308 + $0xe8] sm:$0xff]
      %v401 = vld [vmem:[%s308 + $0xf0] sm:$0xff]
      %v402 = vld [vmem:[%s308 + $0xf8] sm:$0xff]
      %v435 = vunpack.c.l.b16 %v371
      %v436 = vunpack.c.h.b16 %v371
      %v437 = vunpack.c.l.b16 %v372
      %v438 = vunpack.c.h.b16 %v372
      %v439 = vunpack.c.l.b16 %v373
      %v440 = vunpack.c.h.b16 %v373
      %v441 = vunpack.c.l.b16 %v374
      %v442 = vunpack.c.h.b16 %v374
      %v443 = vunpack.c.l.b16 %v375
      %v444 = vunpack.c.h.b16 %v375
      %v445 = vunpack.c.l.b16 %v376
      %v446 = vunpack.c.h.b16 %v376
      %v447 = vunpack.c.l.b16 %v377
      %v448 = vunpack.c.h.b16 %v377
      %v449 = vunpack.c.l.b16 %v378
      %v450 = vunpack.c.h.b16 %v378
      %v451 = vunpack.c.l.b16 %v379
      %v452 = vunpack.c.h.b16 %v379
      %v453 = vunpack.c.l.b16 %v380
      %v454 = vunpack.c.h.b16 %v380
      %v455 = vunpack.c.l.b16 %v381
      %v456 = vunpack.c.h.b16 %v381
      %v457 = vunpack.c.l.b16 %v382
      %v458 = vunpack.c.h.b16 %v382
      %v459 = vunpack.c.l.b16 %v383
      %v460 = vunpack.c.h.b16 %v383
      %v461 = vunpack.c.l.b16 %v384
      %v462 = vunpack.c.h.b16 %v384
      %v463 = vunpack.c.l.b16 %v385
      %v464 = vunpack.c.h.b16 %v385
      %v465 = vunpack.c.l.b16 %v386
      %v466 = vunpack.c.h.b16 %v386
      %v467 = vunpack.c.l.b16 %v387
      %v468 = vunpack.c.h.b16 %v387
      %v469 = vunpack.c.l.b16 %v388
      %v470 = vunpack.c.h.b16 %v388
      %v471 = vunpack.c.l.b16 %v389
      %v472 = vunpack.c.h.b16 %v389
      %v473 = vunpack.c.l.b16 %v390
      %v474 = vunpack.c.h.b16 %v390
      %v475 = vunpack.c.l.b16 %v391
      %v476 = vunpack.c.h.b16 %v391
      %v477 = vunpack.c.l.b16 %v392
      %v478 = vunpack.c.h.b16 %v392
      %v479 = vunpack.c.l.b16 %v393
      %v480 = vunpack.c.h.b16 %v393
      %v481 = vunpack.c.l.b16 %v394
      %v482 = vunpack.c.h.b16 %v394
      %v483 = vunpack.c.l.b16 %v395
      %v484 = vunpack.c.h.b16 %v395
      %v485 = vunpack.c.l.b16 %v396
      %v486 = vunpack.c.h.b16 %v396
      %v487 = vunpack.c.l.b16 %v397
      %v488 = vunpack.c.h.b16 %v397
      %v489 = vunpack.c.l.b16 %v398
      %v490 = vunpack.c.h.b16 %v398
      %v491 = vunpack.c.l.b16 %v399
      %v492 = vunpack.c.h.b16 %v399
      %v493 = vunpack.c.l.b16 %v400
      %v494 = vunpack.c.h.b16 %v400
      %v495 = vunpack.c.l.b16 %v401
      %v496 = vunpack.c.h.b16 %v401
      %v497 = vunpack.c.l.b16 %v402
      %v498 = vunpack.c.h.b16 %v402
      %v499 = vpack.c.b16 %v439, %v435
      %v500 = vpack.c.b16 %v440, %v436
      %v501 = vpack.c.b16 %v441, %v437
      %v502 = vpack.c.b16 %v442, %v438
      %v503 = vpack.c.b16 %v447, %v443
      %v504 = vpack.c.b16 %v448, %v444
      %v505 = vpack.c.b16 %v449, %v445
      %v506 = vpack.c.b16 %v450, %v446
      %v507 = vpack.c.b16 %v455, %v451
      %v508 = vpack.c.b16 %v456, %v452
      %v509 = vpack.c.b16 %v457, %v453
      %v510 = vpack.c.b16 %v458, %v454
      %v511 = vpack.c.b16 %v463, %v459
      %v512 = vpack.c.b16 %v464, %v460
      %v513 = vpack.c.b16 %v465, %v461
      %v514 = vpack.c.b16 %v466, %v462
      %v515 = vpack.c.b16 %v471, %v467
      %v516 = vpack.c.b16 %v472, %v468
      %v517 = vpack.c.b16 %v473, %v469
      %v518 = vpack.c.b16 %v474, %v470
      %v519 = vpack.c.b16 %v479, %v475
      %v520 = vpack.c.b16 %v480, %v476
      %v521 = vpack.c.b16 %v481, %v477
      %v522 = vpack.c.b16 %v482, %v478
      %v523 = vpack.c.b16 %v487, %v483
      %v524 = vpack.c.b16 %v488, %v484
      %v525 = vpack.c.b16 %v489, %v485
      %v526 = vpack.c.b16 %v490, %v486
      %v527 = vpack.c.b16 %v495, %v491
      %v528 = vpack.c.b16 %v496, %v492
      %v529 = vpack.c.b16 %v497, %v493
      %v530 = vpack.c.b16 %v498, %v494
      %563 = vmatprep.subr.bf16.mxu0 %v528
      %564 = vmatpush1.bf16.msra.mxu0 %v527
      %565 = vmatprep.subr.bf16.mxu0 %v524
      %566 = vmatpush1.bf16.msra.mxu0 %v523
      %567 = vmatprep.subr.bf16.mxu0 %v520
      %568 = vmatpush1.bf16.msra.mxu0 %v519
      %569 = vmatprep.subr.bf16.mxu0 %v516
      %570 = vmatpush1.bf16.msra.mxu0 %v515
      %571 = vmatprep.subr.bf16.mxu0 %v512
      %572 = vmatpush1.bf16.msra.mxu0 %v511
      %573 = vmatprep.subr.bf16.mxu0 %v508
      %574 = vmatpush1.bf16.msra.mxu0 %v507
      %575 = vmatprep.subr.bf16.mxu0 %v504
      %576 = vmatpush1.bf16.msra.mxu0 %v503
      %577 = vmatprep.subr.bf16.mxu0 %v500
      %578 = vmatpush1.bf16.msra.mxu0 %v499
      %579 = vmatprep.subr.bf16.mxu0 0
      %580 = vmatpush2.bf16.msra.mxu0 0
      %581 = vmatprep.subr.bf16.mxu0 0
      %582 = vmatpush2.bf16.msra.mxu0 0
      %583 = vmatprep.subr.bf16.mxu0 0
      %584 = vmatpush2.bf16.msra.mxu0 0
      %585 = vmatprep.subr.bf16.mxu0 0
      %586 = vmatpush2.bf16.msra.mxu0 0
      %587 = vmatprep.subr.bf16.mxu0 0
      %588 = vmatpush2.bf16.msra.mxu0 0
      %589 = vmatprep.subr.bf16.mxu0 0
      %590 = vmatpush2.bf16.msra.mxu0 0
      %591 = vmatprep.subr.bf16.mxu0 0
      %592 = vmatpush2.bf16.msra.mxu0 0
      %593 = vmatprep.subr.bf16.mxu0 0
      %594 = vmatpush2.bf16.msra.mxu0 0
      %595 = vmatprep.mubr.bf16.mxu0 0
      %596 = vmatmul.mubr.bf16.gmra.mxu0 %v370
      %v597 = vpop.f32.mrf.mxu0
      %v598 = vadd.f32 0.0, %v597
      %v599 = vpop.f32.mrf.mxu0
      %v600 = vadd.f32 0.0, %v599
      %v601 = vpop.f32.mrf.mxu0
      %v602 = vadd.f32 0.0, %v601
      %v603 = vpop.f32.mrf.mxu0
      %v604 = vadd.f32 0.0, %v603
      %605 = vdwg.mxu0
      %606 = vmatprep.subr.bf16.mxu0 %v530
      %607 = vmatpush1.bf16.msra.mxu0 %v529
      %608 = vmatprep.subr.bf16.mxu0 %v526
      %609 = vmatpush1.bf16.msra.mxu0 %v525
      %610 = vmatprep.subr.bf16.mxu0 %v522
      %611 = vmatpush1.bf16.msra.mxu0 %v521
      %612 = vmatprep.subr.bf16.mxu0 %v518
      %613 = vmatpush1.bf16.msra.mxu0 %v517
      %614 = vmatprep.subr.bf16.mxu0 %v514
      %615 = vmatpush1.bf16.msra.mxu0 %v513
      %616 = vmatprep.subr.bf16.mxu0 %v510
      %617 = vmatpush1.bf16.msra.mxu0 %v509
      %618 = vmatprep.subr.bf16.mxu0 %v506
      %619 = vmatpush1.bf16.msra.mxu0 %v505
      %620 = vmatprep.subr.bf16.mxu0 %v502
      %621 = vmatpush1.bf16.msra.mxu0 %v501
      %622 = vmatprep.subr.bf16.mxu0 0
      %623 = vmatpush2.bf16.msra.mxu0 0
      %624 = vmatprep.subr.bf16.mxu0 0
      %625 = vmatpush2.bf16.msra.mxu0 0
      %626 = vmatprep.subr.bf16.mxu0 0
      %627 = vmatpush2.bf16.msra.mxu0 0
      %628 = vmatprep.subr.bf16.mxu0 0
      %629 = vmatpush2.bf16.msra.mxu0 0
      %630 = vmatprep.subr.bf16.mxu0 0
      %631 = vmatpush2.bf16.msra.mxu0 0
      %632 = vmatprep.subr.bf16.mxu0 0
      %633 = vmatpush2.bf16.msra.mxu0 0
      %634 = vmatprep.subr.bf16.mxu0 0
      %635 = vmatpush2.bf16.msra.mxu0 0
      %636 = vmatprep.subr.bf16.mxu0 0
      %637 = vmatpush2.bf16.msra.mxu0 0
      %638 = vmatprep.mubr.bf16.mxu0 0
      %639 = vmatmul.mubr.bf16.gmra.mxu0 %v370
      %v640 = vpop.f32.mrf.mxu0
      %v641 = vadd.f32 0.0, %v640
      %v642 = vpop.f32.mrf.mxu0
      %v643 = vadd.f32 0.0, %v642
      %v644 = vpop.f32.mrf.mxu0
      %v645 = vadd.f32 0.0, %v644
      %v646 = vpop.f32.mrf.mxu0
      %v647 = vadd.f32 0.0, %v646
      %648 = vdwg.mxu0
      %v649 = vadd.f32 %v360, %v598
      %v650 = vadd.f32 %v361, %v600
      %v651 = vadd.f32 %v362, %v641
      %v652 = vadd.f32 %v363, %v643
      %v653 = vadd.f32 %v364, %v602
      %v654 = vadd.f32 %v365, %v604
      %v655 = vadd.f32 %v366, %v645
      %v656 = vadd.f32 %v367, %v647
      %v657 = vxor.u32 %v649, 2147483648
      %v658 = vxor.u32 %v650, 2147483648
      %v659 = vxor.u32 %v651, 2147483648
      %v660 = vxor.u32 %v653, 2147483648
      %v661 = vxor.u32 %v654, 2147483648
      %v662 = vxor.u32 %v655, 2147483648
      %v663 = vmul.f32 %v657, 1.442695
      %v664 = vpow.pop %v663
      %v665 = vmul.f32 %v658, 1.442695
      %v666 = vpow.pop %v665
      %v667 = vmul.f32 %v659, 1.442695
      %v668 = vpow.pop %v667
      %v669 = vmul.f32 %v660, 1.442695
      %v670 = vpow.pop %v669
      %v671 = vmul.f32 %v661, 1.442695
      %v672 = vpow.pop %v671
      %v673 = vmul.f32 %v662, 1.442695
      %v674 = vpow.pop %v673
      %v675 = vadd.f32 %v664, 1.0
      %v676 = vadd.f32 %v666, 1.0
      %v677 = vadd.f32 %v668, 1.0
      %v678 = vadd.f32 %v670, 1.0
      %v679 = vadd.f32 %v672, 1.0
      %v680 = vadd.f32 %v674, 1.0
      %v681 = vrcp.pop %v675
      %v682 = vmul.f32 1.0, %v681
      %v683 = vrcp.pop %v676
      %v684 = vmul.f32 1.0, %v683
      %v685 = vrcp.pop %v677
      %v686 = vmul.f32 1.0, %v685
      %v687 = vrcp.pop %v678
      %v688 = vmul.f32 1.0, %v687
      %v689 = vrcp.pop %v679
      %v690 = vmul.f32 1.0, %v689
      %v691 = vrcp.pop %v680
      %v692 = vmul.f32 1.0, %v691
      %v693 = vtanh.pop %v652
      %v694 = vtanh.pop %v656
      %v695 = vld [vmem:[#allocation3] sm:$0xff]
      %v696 = vld [vmem:[#allocation3 + $0x8] sm:$0xff]
      %v697 = vmul.f32 %v684, %v695
      %v698 = vmul.f32 %v690, %v696
      %v699 = vmul.f32 %v682, %v693
      %v700 = vmul.f32 %v688, %v694
      %v701 = vadd.f32 %v697, %v699
      %v702 = vadd.f32 %v698, %v700
      %v703 = vtanh.pop %v701
      %v704 = vtanh.pop %v702
      %v705 = vmul.f32 %v686, %v703
      %v706 = vmul.f32 %v692, %v704
      %s707 = sadd.s32 %s351, %s352
      %v708 = vstv %s707
      %vm709 = vcmp.gt.s32.totalorder %v344, %v708
      %vm710 = vcmp.gt.s32.totalorder %v345, %v708
      %v711 = vsel %vm709, 1, 0
      %v712 = vsel %vm710, 1, 0
      %713 = vset.pattern.permute.xlu0 0
      %714 = vperm.xlu0 %713, %v711
      %v715 = vpop.permute.xlu0 %714
      %716 = vset.pattern.permute.xlu0 0
      %717 = vperm.xlu0 %716, %v712
      %v718 = vpop.permute.xlu0 %717
      %vm719 = vcmp.eq.s32.totalorder %v715, 1
      %vm720 = vcmp.eq.s32.totalorder %v718, 1
      %v721 = vsel %vm719, %v705, %v368
      %v722 = vsel %vm720, %v706, %v369
      %723 = vst [vmem:[#allocation2] sm:$0xff] %v721
      %724 = vst [vmem:[#allocation2 + $0x8] sm:$0xff] %v722
      %v725 = vld [vmem:[#allocation3] sm:$0xff]
      %v726 = vld [vmem:[#allocation3 + $0x8] sm:$0xff]
      %v727 = vsel %vm719, %v701, %v725
      %v728 = vsel %vm720, %v702, %v726
      %729 = vst [vmem:[#allocation3] sm:$0xff] %v727
      %730 = vst [vmem:[#allocation3 + $0x8] sm:$0xff] %v728
      %v731 = vsel %vm719, %v705, 0.0
      %v732 = vsel %vm720, %v706, 0.0
      %s733 = smul.u32 %s352, 16
      %s734 = scalar_lea.vmem %s323, %s733
      %735 = vst [vmem:[%s734] sm:$0xff] %v731
      %736 = vst [vmem:[%s734 + $0x8] sm:$0xff] %v732
      %s737 = smul.u32 %s20, 6
      %s738 = sadd.s32 %s346, %s737
      %s739 = smul.u32 %s738, 8
      %s740 = smul.addr %s739, 4
      %s741 = scalar_lea.vmem %s297, %s740
      %v742 = vld [vmem:[%s741] sm:$0xff]
      %v743 = vld [vmem:[%s741 + $0x8] sm:$0xff]
      %v744 = vld [vmem:[%s741 + $0x10] sm:$0xff]
      %v745 = vld [vmem:[%s741 + $0x18] sm:$0xff]
      %v746 = vunpack.c.l.bf16 %v742
      %v747 = vunpack.c.h.bf16 %v742
      %v748 = vunpack.c.l.bf16 %v743
      %v749 = vunpack.c.h.bf16 %v743
      %v750 = vunpack.c.l.bf16 %v744
      %v751 = vunpack.c.h.bf16 %v744
      %v752 = vunpack.c.l.bf16 %v745
      %v753 = vunpack.c.h.bf16 %v745
      %v754 = vld [vmem:[#allocation2] sm:$0xff]
      %v755 = vld [vmem:[#allocation2 + $0x8] sm:$0xff]
      %v756 = vpack.c.bf16 %v755, %v754
      %v757 = vld [vmem:[%s308] sm:$0xff]
      %v758 = vld [vmem:[%s308 + $0x8] sm:$0xff]
      %v759 = vld [vmem:[%s308 + $0x10] sm:$0xff]
      %v760 = vld [vmem:[%s308 + $0x18] sm:$0xff]
      %v761 = vld [vmem:[%s308 + $0x20] sm:$0xff]
      %v762 = vld [vmem:[%s308 + $0x28] sm:$0xff]
      %v763 = vld [vmem:[%s308 + $0x30] sm:$0xff]
      %v764 = vld [vmem:[%s308 + $0x38] sm:$0xff]
      %v765 = vld [vmem:[%s308 + $0x40] sm:$0xff]
      %v766 = vld [vmem:[%s308 + $0x48] sm:$0xff]
      %v767 = vld [vmem:[%s308 + $0x50] sm:$0xff]
      %v768 = vld [vmem:[%s308 + $0x58] sm:$0xff]
      %v769 = vld [vmem:[%s308 + $0x60] sm:$0xff]
      %v770 = vld [vmem:[%s308 + $0x68] sm:$0xff]
      %v771 = vld [vmem:[%s308 + $0x70] sm:$0xff]
      %v772 = vld [vmem:[%s308 + $0x78] sm:$0xff]
      %v773 = vld [vmem:[%s308 + $0x80] sm:$0xff]
      %v774 = vld [vmem:[%s308 + $0x88] sm:$0xff]
      %v775 = vld [vmem:[%s308 + $0x90] sm:$0xff]
      %v776 = vld [vmem:[%s308 + $0x98] sm:$0xff]
      %v777 = vld [vmem:[%s308 + $0xa0] sm:$0xff]
      %v778 = vld [vmem:[%s308 + $0xa8] sm:$0xff]
      %v779 = vld [vmem:[%s308 + $0xb0] sm:$0xff]
      %v780 = vld [vmem:[%s308 + $0xb8] sm:$0xff]
      %v781 = vld [vmem:[%s308 + $0xc0] sm:$0xff]
      %v782 = vld [vmem:[%s308 + $0xc8] sm:$0xff]
      %v783 = vld [vmem:[%s308 + $0xd0] sm:$0xff]
      %v784 = vld [vmem:[%s308 + $0xd8] sm:$0xff]
      %v785 = vld [vmem:[%s308 + $0xe0] sm:$0xff]
      %v786 = vld [vmem:[%s308 + $0xe8] sm:$0xff]
      %v787 = vld [vmem:[%s308 + $0xf0] sm:$0xff]
      %v788 = vld [vmem:[%s308 + $0xf8] sm:$0xff]
      %v821 = vunpack.c.l.b16 %v757
      %v822 = vunpack.c.h.b16 %v757
      %v823 = vunpack.c.l.b16 %v758
      %v824 = vunpack.c.h.b16 %v758
      %v825 = vunpack.c.l.b16 %v759
      %v826 = vunpack.c.h.b16 %v759
      %v827 = vunpack.c.l.b16 %v760
      %v828 = vunpack.c.h.b16 %v760
      %v829 = vunpack.c.l.b16 %v761
      %v830 = vunpack.c.h.b16 %v761
      %v831 = vunpack.c.l.b16 %v762
      %v832 = vunpack.c.h.b16 %v762
      %v833 = vunpack.c.l.b16 %v763
      %v834 = vunpack.c.h.b16 %v763
      %v835 = vunpack.c.l.b16 %v764
      %v836 = vunpack.c.h.b16 %v764
      %v837 = vunpack.c.l.b16 %v765
      %v838 = vunpack.c.h.b16 %v765
      %v839 = vunpack.c.l.b16 %v766
      %v840 = vunpack.c.h.b16 %v766
      %v841 = vunpack.c.l.b16 %v767
      %v842 = vunpack.c.h.b16 %v767
      %v843 = vunpack.c.l.b16 %v768
      %v844 = vunpack.c.h.b16 %v768
      %v845 = vunpack.c.l.b16 %v769
      %v846 = vunpack.c.h.b16 %v769
      %v847 = vunpack.c.l.b16 %v770
      %v848 = vunpack.c.h.b16 %v770
      %v849 = vunpack.c.l.b16 %v771
      %v850 = vunpack.c.h.b16 %v771
      %v851 = vunpack.c.l.b16 %v772
      %v852 = vunpack.c.h.b16 %v772
      %v853 = vunpack.c.l.b16 %v773
      %v854 = vunpack.c.h.b16 %v773
      %v855 = vunpack.c.l.b16 %v774
      %v856 = vunpack.c.h.b16 %v774
      %v857 = vunpack.c.l.b16 %v775
      %v858 = vunpack.c.h.b16 %v775
      %v859 = vunpack.c.l.b16 %v776
      %v860 = vunpack.c.h.b16 %v776
      %v861 = vunpack.c.l.b16 %v777
      %v862 = vunpack.c.h.b16 %v777
      %v863 = vunpack.c.l.b16 %v778
      %v864 = vunpack.c.h.b16 %v778
      %v865 = vunpack.c.l.b16 %v779
      %v866 = vunpack.c.h.b16 %v779
      %v867 = vunpack.c.l.b16 %v780
      %v868 = vunpack.c.h.b16 %v780
      %v869 = vunpack.c.l.b16 %v781
      %v870 = vunpack.c.h.b16 %v781
      %v871 = vunpack.c.l.b16 %v782
      %v872 = vunpack.c.h.b16 %v782
      %v873 = vunpack.c.l.b16 %v783
      %v874 = vunpack.c.h.b16 %v783
      %v875 = vunpack.c.l.b16 %v784
      %v876 = vunpack.c.h.b16 %v784
      %v877 = vunpack.c.l.b16 %v785
      %v878 = vunpack.c.h.b16 %v785
      %v879 = vunpack.c.l.b16 %v786
      %v880 = vunpack.c.h.b16 %v786
      %v881 = vunpack.c.l.b16 %v787
      %v882 = vunpack.c.h.b16 %v787
      %v883 = vunpack.c.l.b16 %v788
      %v884 = vunpack.c.h.b16 %v788
      %v885 = vpack.c.b16 %v825, %v821
      %v886 = vpack.c.b16 %v826, %v822
      %v887 = vpack.c.b16 %v827, %v823
      %v888 = vpack.c.b16 %v828, %v824
      %v889 = vpack.c.b16 %v833, %v829
      %v890 = vpack.c.b16 %v834, %v830
      %v891 = vpack.c.b16 %v835, %v831
      %v892 = vpack.c.b16 %v836, %v832
      %v893 = vpack.c.b16 %v841, %v837
      %v894 = vpack.c.b16 %v842, %v838
      %v895 = vpack.c.b16 %v843, %v839
      %v896 = vpack.c.b16 %v844, %v840
      %v897 = vpack.c.b16 %v849, %v845
      %v898 = vpack.c.b16 %v850, %v846
      %v899 = vpack.c.b16 %v851, %v847
      %v900 = vpack.c.b16 %v852, %v848
      %v901 = vpack.c.b16 %v857, %v853
      %v902 = vpack.c.b16 %v858, %v854
      %v903 = vpack.c.b16 %v859, %v855
      %v904 = vpack.c.b16 %v860, %v856
      %v905 = vpack.c.b16 %v865, %v861
      %v906 = vpack.c.b16 %v866, %v862
      %v907 = vpack.c.b16 %v867, %v863
      %v908 = vpack.c.b16 %v868, %v864
      %v909 = vpack.c.b16 %v873, %v869
      %v910 = vpack.c.b16 %v874, %v870
      %v911 = vpack.c.b16 %v875, %v871
      %v912 = vpack.c.b16 %v876, %v872
      %v913 = vpack.c.b16 %v881, %v877
      %v914 = vpack.c.b16 %v882, %v878
      %v915 = vpack.c.b16 %v883, %v879
      %v916 = vpack.c.b16 %v884, %v880
      %949 = vmatprep.subr.bf16.mxu0 %v914
      %950 = vmatpush1.bf16.msra.mxu0 %v913
      %951 = vmatprep.subr.bf16.mxu0 %v910
      %952 = vmatpush1.bf16.msra.mxu0 %v909
      %953 = vmatprep.subr.bf16.mxu0 %v906
      %954 = vmatpush1.bf16.msra.mxu0 %v905
      %955 = vmatprep.subr.bf16.mxu0 %v902
      %956 = vmatpush1.bf16.msra.mxu0 %v901
      %957 = vmatprep.subr.bf16.mxu0 %v898
      %958 = vmatpush1.bf16.msra.mxu0 %v897
      %959 = vmatprep.subr.bf16.mxu0 %v894
      %960 = vmatpush1.bf16.msra.mxu0 %v893
      %961 = vmatprep.subr.bf16.mxu0 %v890
      %962 = vmatpush1.bf16.msra.mxu0 %v889
      %963 = vmatprep.subr.bf16.mxu0 %v886
      %964 = vmatpush1.bf16.msra.mxu0 %v885
      %965 = vmatprep.subr.bf16.mxu0 0
      %966 = vmatpush2.bf16.msra.mxu0 0
      %967 = vmatprep.subr.bf16.mxu0 0
      %968 = vmatpush2.bf16.msra.mxu0 0
      %969 = vmatprep.subr.bf16.mxu0 0
      %970 = vmatpush2.bf16.msra.mxu0 0
      %971 = vmatprep.subr.bf16.mxu0 0
      %972 = vmatpush2.bf16.msra.mxu0 0
      %973 = vmatprep.subr.bf16.mxu0 0
      %974 = vmatpush2.bf16.msra.mxu0 0
      %975 = vmatprep.subr.bf16.mxu0 0
      %976 = vmatpush2.bf16.msra.mxu0 0
      %977 = vmatprep.subr.bf16.mxu0 0
      %978 = vmatpush2.bf16.msra.mxu0 0
      %979 = vmatprep.subr.bf16.mxu0 0
      %980 = vmatpush2.bf16.msra.mxu0 0
      %981 = vmatprep.mubr.bf16.mxu0 0
      %982 = vmatmul.mubr.bf16.gmra.mxu0 %v756
      %v983 = vpop.f32.mrf.mxu0
      %v984 = vadd.f32 0.0, %v983
      %v985 = vpop.f32.mrf.mxu0
      %v986 = vadd.f32 0.0, %v985
      %v987 = vpop.f32.mrf.mxu0
      %v988 = vadd.f32 0.0, %v987
      %v989 = vpop.f32.mrf.mxu0
      %v990 = vadd.f32 0.0, %v989
      %991 = vdwg.mxu0
      %992 = vmatprep.subr.bf16.mxu0 %v916
      %993 = vmatpush1.bf16.msra.mxu0 %v915
      %994 = vmatprep.subr.bf16.mxu0 %v912
      %995 = vmatpush1.bf16.msra.mxu0 %v911
      %996 = vmatprep.subr.bf16.mxu0 %v908
      %997 = vmatpush1.bf16.msra.mxu0 %v907
      %998 = vmatprep.subr.bf16.mxu0 %v904
      %999 = vmatpush1.bf16.msra.mxu0 %v903
      %1000 = vmatprep.subr.bf16.mxu0 %v900
      %1001 = vmatpush1.bf16.msra.mxu0 %v899
      %1002 = vmatprep.subr.bf16.mxu0 %v896
      %1003 = vmatpush1.bf16.msra.mxu0 %v895
      %1004 = vmatprep.subr.bf16.mxu0 %v892
      %1005 = vmatpush1.bf16.msra.mxu0 %v891
      %1006 = vmatprep.subr.bf16.mxu0 %v888
      %1007 = vmatpush1.bf16.msra.mxu0 %v887
      %1008 = vmatprep.subr.bf16.mxu0 0
      %1009 = vmatpush2.bf16.msra.mxu0 0
      %1010 = vmatprep.subr.bf16.mxu0 0
      %1011 = vmatpush2.bf16.msra.mxu0 0
      %1012 = vmatprep.subr.bf16.mxu0 0
      %1013 = vmatpush2.bf16.msra.mxu0 0
      %1014 = vmatprep.subr.bf16.mxu0 0
      %1015 = vmatpush2.bf16.msra.mxu0 0
      %1016 = vmatprep.subr.bf16.mxu0 0
      %1017 = vmatpush2.bf16.msra.mxu0 0
      %1018 = vmatprep.subr.bf16.mxu0 0
      %1019 = vmatpush2.bf16.msra.mxu0 0
      %1020 = vmatprep.subr.bf16.mxu0 0
      %1021 = vmatpush2.bf16.msra.mxu0 0
      %1022 = vmatprep.subr.bf16.mxu0 0
      %1023 = vmatpush2.bf16.msra.mxu0 0
      %1024 = vmatprep.mubr.bf16.mxu0 0
      %1025 = vmatmul.mubr.bf16.gmra.mxu0 %v756
      %v1026 = vpop.f32.mrf.mxu0
      %v1027 = vadd.f32 0.0, %v1026
      %v1028 = vpop.f32.mrf.mxu0
      %v1029 = vadd.f32 0.0, %v1028
      %v1030 = vpop.f32.mrf.mxu0
      %v1031 = vadd.f32 0.0, %v1030
      %v1032 = vpop.f32.mrf.mxu0
      %v1033 = vadd.f32 0.0, %v1032
      %1034 = vdwg.mxu0
      %v1035 = vadd.f32 %v746, %v984
      %v1036 = vadd.f32 %v747, %v986
      %v1037 = vadd.f32 %v748, %v1027
      %v1038 = vadd.f32 %v749, %v1029
      %v1039 = vadd.f32 %v750, %v988
      %v1040 = vadd.f32 %v751, %v990
      %v1041 = vadd.f32 %v752, %v1031
      %v1042 = vadd.f32 %v753, %v1033
      %v1043 = vxor.u32 %v1035, 2147483648
      %v1044 = vxor.u32 %v1036, 2147483648
      %v1045 = vxor.u32 %v1037, 2147483648
      %v1046 = vxor.u32 %v1039, 2147483648
      %v1047 = vxor.u32 %v1040, 2147483648
      %v1048 = vxor.u32 %v1041, 2147483648
      %v1049 = vmul.f32 %v1043, 1.442695
      %v1050 = vpow.pop %v1049
      %v1051 = vmul.f32 %v1044, 1.442695
      %v1052 = vpow.pop %v1051
      %v1053 = vmul.f32 %v1045, 1.442695
      %v1054 = vpow.pop %v1053
      %v1055 = vmul.f32 %v1046, 1.442695
      %v1056 = vpow.pop %v1055
      %v1057 = vmul.f32 %v1047, 1.442695
      %v1058 = vpow.pop %v1057
      %v1059 = vmul.f32 %v1048, 1.442695
      %v1060 = vpow.pop %v1059
      %v1061 = vadd.f32 %v1050, 1.0
      %v1062 = vadd.f32 %v1052, 1.0
      %v1063 = vadd.f32 %v1054, 1.0
      %v1064 = vadd.f32 %v1056, 1.0
      %v1065 = vadd.f32 %v1058, 1.0
      %v1066 = vadd.f32 %v1060, 1.0
      %v1067 = vrcp.pop %v1061
      %v1068 = vmul.f32 1.0, %v1067
      %v1069 = vrcp.pop %v1062
      %v1070 = vmul.f32 1.0, %v1069
      %v1071 = vrcp.pop %v1063
      %v1072 = vmul.f32 1.0, %v1071
      %v1073 = vrcp.pop %v1064
      %v1074 = vmul.f32 1.0, %v1073
      %v1075 = vrcp.pop %v1065
      %v1076 = vmul.f32 1.0, %v1075
      %v1077 = vrcp.pop %v1066
      %v1078 = vmul.f32 1.0, %v1077
      %v1079 = vtanh.pop %v1038
      %v1080 = vtanh.pop %v1042
      %v1081 = vld [vmem:[#allocation3] sm:$0xff]
      %v1082 = vld [vmem:[#allocation3 + $0x8] sm:$0xff]
      %v1083 = vmul.f32 %v1070, %v1081
      %v1084 = vmul.f32 %v1076, %v1082
      %v1085 = vmul.f32 %v1068, %v1079
      %v1086 = vmul.f32 %v1074, %v1080
      %v1087 = vadd.f32 %v1083, %v1085
      %v1088 = vadd.f32 %v1084, %v1086
      %v1089 = vtanh.pop %v1087
      %v1090 = vtanh.pop %v1088
      %v1091 = vmul.f32 %v1072, %v1089
      %v1092 = vmul.f32 %v1078, %v1090
      %s1093 = sadd.s32 %s351, %s738
      %v1094 = vstv %s1093
      %vm1095 = vcmp.gt.s32.totalorder %v344, %v1094
      %vm1096 = vcmp.gt.s32.totalorder %v345, %v1094
      %v1097 = vsel %vm1095, 1, 0
      %v1098 = vsel %vm1096, 1, 0
      %1099 = vset.pattern.permute.xlu0 0
      %1100 = vperm.xlu0 %1099, %v1097
      %v1101 = vpop.permute.xlu0 %1100
      %1102 = vset.pattern.permute.xlu0 0
      %1103 = vperm.xlu0 %1102, %v1098
      %v1104 = vpop.permute.xlu0 %1103
      %vm1105 = vcmp.eq.s32.totalorder %v1101, 1
      %vm1106 = vcmp.eq.s32.totalorder %v1104, 1
      %v1107 = vsel %vm1105, %v1091, %v754
      %v1108 = vsel %vm1106, %v1092, %v755
      %1109 = vst [vmem:[#allocation2] sm:$0xff] %v1107
      %1110 = vst [vmem:[#allocation2 + $0x8] sm:$0xff] %v1108
      %v1111 = vld [vmem:[#allocation3] sm:$0xff]
      %v1112 = vld [vmem:[#allocation3 + $0x8] sm:$0xff]
      %v1113 = vsel %vm1105, %v1087, %v1111
      %v1114 = vsel %vm1106, %v1088, %v1112
      %1115 = vst [vmem:[#allocation3] sm:$0xff] %v1113
      %1116 = vst [vmem:[#allocation3 + $0x8] sm:$0xff] %v1114
      %v1117 = vsel %vm1105, %v1091, 0.0
      %v1118 = vsel %vm1106, %v1092, 0.0
      %s1119 = smul.u32 %s738, 16
      %s1120 = scalar_lea.vmem %s323, %s1119
      %1121 = vst [vmem:[%s1120] sm:$0xff] %v1117
      %1122 = vst [vmem:[%s1120 + $0x8] sm:$0xff] %v1118
      %s1123 = smul.u32 %s346, 2
      %s1124 = smul.u32 %s20, 5
      %s1125 = sadd.s32 %s1123, %s1124
      %s1126 = smul.u32 %s1125, 8
      %s1127 = smul.addr %s1126, 4
      %s1128 = scalar_lea.vmem %s297, %s1127
      %v1129 = vld [vmem:[%s1128] sm:$0xff]
      %v1130 = vld [vmem:[%s1128 + $0x8] sm:$0xff]
      %v1131 = vld [vmem:[%s1128 + $0x10] sm:$0xff]
      %v1132 = vld [vmem:[%s1128 + $0x18] sm:$0xff]
      %v1133 = vunpack.c.l.bf16 %v1129
      %v1134 = vunpack.c.h.bf16 %v1129
      %v1135 = vunpack.c.l.bf16 %v1130
      %v1136 = vunpack.c.h.bf16 %v1130
      %v1137 = vunpack.c.l.bf16 %v1131
      %v1138 = vunpack.c.h.bf16 %v1131
      %v1139 = vunpack.c.l.bf16 %v1132
      %v1140 = vunpack.c.h.bf16 %v1132
      %v1141 = vld [vmem:[#allocation2] sm:$0xff]
      %v1142 = vld [vmem:[#allocation2 + $0x8] sm:$0xff]
      %v1143 = vpack.c.bf16 %v1142, %v1141
      %v1144 = vld [vmem:[%s308] sm:$0xff]
      %v1145 = vld [vmem:[%s308 + $0x8] sm:$0xff]
      %v1146 = vld [vmem:[%s308 + $0x10] sm:$0xff]
      %v1147 = vld [vmem:[%s308 + $0x18] sm:$0xff]
      %v1148 = vld [vmem:[%s308 + $0x20] sm:$0xff]
      %v1149 = vld [vmem:[%s308 + $0x28] sm:$0xff]
      %v1150 = vld [vmem:[%s308 + $0x30] sm:$0xff]
      %v1151 = vld [vmem:[%s308 + $0x38] sm:$0xff]
      %v1152 = vld [vmem:[%s308 + $0x40] sm:$0xff]
      %v1153 = vld [vmem:[%s308 + $0x48] sm:$0xff]
      %v1154 = vld [vmem:[%s308 + $0x50] sm:$0xff]
      %v1155 = vld [vmem:[%s308 + $0x58] sm:$0xff]
      %v1156 = vld [vmem:[%s308 + $0x60] sm:$0xff]
      %v1157 = vld [vmem:[%s308 + $0x68] sm:$0xff]
      %v1158 = vld [vmem:[%s308 + $0x70] sm:$0xff]
      %v1159 = vld [vmem:[%s308 + $0x78] sm:$0xff]
      %v1160 = vld [vmem:[%s308 + $0x80] sm:$0xff]
      %v1161 = vld [vmem:[%s308 + $0x88] sm:$0xff]
      %v1162 = vld [vmem:[%s308 + $0x90] sm:$0xff]
      %v1163 = vld [vmem:[%s308 + $0x98] sm:$0xff]
      %v1164 = vld [vmem:[%s308 + $0xa0] sm:$0xff]
      %v1165 = vld [vmem:[%s308 + $0xa8] sm:$0xff]
      %v1166 = vld [vmem:[%s308 + $0xb0] sm:$0xff]
      %v1167 = vld [vmem:[%s308 + $0xb8] sm:$0xff]
      %v1168 = vld [vmem:[%s308 + $0xc0] sm:$0xff]
      %v1169 = vld [vmem:[%s308 + $0xc8] sm:$0xff]
      %v1170 = vld [vmem:[%s308 + $0xd0] sm:$0xff]
      %v1171 = vld [vmem:[%s308 + $0xd8] sm:$0xff]
      %v1172 = vld [vmem:[%s308 + $0xe0] sm:$0xff]
      %v1173 = vld [vmem:[%s308 + $0xe8] sm:$0xff]
      %v1174 = vld [vmem:[%s308 + $0xf0] sm:$0xff]
      %v1175 = vld [vmem:[%s308 + $0xf8] sm:$0xff]
      %v1208 = vunpack.c.l.b16 %v1144
      %v1209 = vunpack.c.h.b16 %v1144
      %v1210 = vunpack.c.l.b16 %v1145
      %v1211 = vunpack.c.h.b16 %v1145
      %v1212 = vunpack.c.l.b16 %v1146
      %v1213 = vunpack.c.h.b16 %v1146
      %v1214 = vunpack.c.l.b16 %v1147
      %v1215 = vunpack.c.h.b16 %v1147
      %v1216 = vunpack.c.l.b16 %v1148
      %v1217 = vunpack.c.h.b16 %v1148
      %v1218 = vunpack.c.l.b16 %v1149
      %v1219 = vunpack.c.h.b16 %v1149
      %v1220 = vunpack.c.l.b16 %v1150
      %v1221 = vunpack.c.h.b16 %v1150
      %v1222 = vunpack.c.l.b16 %v1151
      %v1223 = vunpack.c.h.b16 %v1151
      %v1224 = vunpack.c.l.b16 %v1152
      %v1225 = vunpack.c.h.b16 %v1152
      %v1226 = vunpack.c.l.b16 %v1153
      %v1227 = vunpack.c.h.b16 %v1153
      %v1228 = vunpack.c.l.b16 %v1154
      %v1229 = vunpack.c.h.b16 %v1154
      %v1230 = vunpack.c.l.b16 %v1155
      %v1231 = vunpack.c.h.b16 %v1155
      %v1232 = vunpack.c.l.b16 %v1156
      %v1233 = vunpack.c.h.b16 %v1156
      %v1234 = vunpack.c.l.b16 %v1157
      %v1235 = vunpack.c.h.b16 %v1157
      %v1236 = vunpack.c.l.b16 %v1158
      %v1237 = vunpack.c.h.b16 %v1158
      %v1238 = vunpack.c.l.b16 %v1159
      %v1239 = vunpack.c.h.b16 %v1159
      %v1240 = vunpack.c.l.b16 %v1160
      %v1241 = vunpack.c.h.b16 %v1160
      %v1242 = vunpack.c.l.b16 %v1161
      %v1243 = vunpack.c.h.b16 %v1161
      %v1244 = vunpack.c.l.b16 %v1162
      %v1245 = vunpack.c.h.b16 %v1162
      %v1246 = vunpack.c.l.b16 %v1163
      %v1247 = vunpack.c.h.b16 %v1163
      %v1248 = vunpack.c.l.b16 %v1164
      %v1249 = vunpack.c.h.b16 %v1164
      %v1250 = vunpack.c.l.b16 %v1165
      %v1251 = vunpack.c.h.b16 %v1165
      %v1252 = vunpack.c.l.b16 %v1166
      %v1253 = vunpack.c.h.b16 %v1166
      %v1254 = vunpack.c.l.b16 %v1167
      %v1255 = vunpack.c.h.b16 %v1167
      %v1256 = vunpack.c.l.b16 %v1168
      %v1257 = vunpack.c.h.b16 %v1168
      %v1258 = vunpack.c.l.b16 %v1169
      %v1259 = vunpack.c.h.b16 %v1169
      %v1260 = vunpack.c.l.b16 %v1170
      %v1261 = vunpack.c.h.b16 %v1170
      %v1262 = vunpack.c.l.b16 %v1171
      %v1263 = vunpack.c.h.b16 %v1171
      %v1264 = vunpack.c.l.b16 %v1172
      %v1265 = vunpack.c.h.b16 %v1172
      %v1266 = vunpack.c.l.b16 %v1173
      %v1267 = vunpack.c.h.b16 %v1173
      %v1268 = vunpack.c.l.b16 %v1174
      %v1269 = vunpack.c.h.b16 %v1174
      %v1270 = vunpack.c.l.b16 %v1175
      %v1271 = vunpack.c.h.b16 %v1175
      %v1272 = vpack.c.b16 %v1212, %v1208
      %v1273 = vpack.c.b16 %v1213, %v1209
      %v1274 = vpack.c.b16 %v1214, %v1210
      %v1275 = vpack.c.b16 %v1215, %v1211
      %v1276 = vpack.c.b16 %v1220, %v1216
      %v1277 = vpack.c.b16 %v1221, %v1217
      %v1278 = vpack.c.b16 %v1222, %v1218
      %v1279 = vpack.c.b16 %v1223, %v1219
      %v1280 = vpack.c.b16 %v1228, %v1224
      %v1281 = vpack.c.b16 %v1229, %v1225
      %v1282 = vpack.c.b16 %v1230, %v1226
      %v1283 = vpack.c.b16 %v1231, %v1227
      %v1284 = vpack.c.b16 %v1236, %v1232
      %v1285 = vpack.c.b16 %v1237, %v1233
      %v1286 = vpack.c.b16 %v1238, %v1234
      %v1287 = vpack.c.b16 %v1239, %v1235
      %v1288 = vpack.c.b16 %v1244, %v1240
      %v1289 = vpack.c.b16 %v1245, %v1241
      %v1290 = vpack.c.b16 %v1246, %v1242
      %v1291 = vpack.c.b16 %v1247, %v1243
      %v1292 = vpack.c.b16 %v1252, %v1248
      %v1293 = vpack.c.b16 %v1253, %v1249
      %v1294 = vpack.c.b16 %v1254, %v1250
      %v1295 = vpack.c.b16 %v1255, %v1251
      %v1296 = vpack.c.b16 %v1260, %v1256
      %v1297 = vpack.c.b16 %v1261, %v1257
      %v1298 = vpack.c.b16 %v1262, %v1258
      %v1299 = vpack.c.b16 %v1263, %v1259
      %v1300 = vpack.c.b16 %v1268, %v1264
      %v1301 = vpack.c.b16 %v1269, %v1265
      %v1302 = vpack.c.b16 %v1270, %v1266
      %v1303 = vpack.c.b16 %v1271, %v1267
      %1336 = vmatprep.subr.bf16.mxu0 %v1301
      %1337 = vmatpush1.bf16.msra.mxu0 %v1300
      %1338 = vmatprep.subr.bf16.mxu0 %v1297
      %1339 = vmatpush1.bf16.msra.mxu0 %v1296
      %1340 = vmatprep.subr.bf16.mxu0 %v1293
      %1341 = vmatpush1.bf16.msra.mxu0 %v1292
      %1342 = vmatprep.subr.bf16.mxu0 %v1289
      %1343 = vmatpush1.bf16.msra.mxu0 %v1288
      %1344 = vmatprep.subr.bf16.mxu0 %v1285
      %1345 = vmatpush1.bf16.msra.mxu0 %v1284
      %1346 = vmatprep.subr.bf16.mxu0 %v1281
      %1347 = vmatpush1.bf16.msra.mxu0 %v1280
      %1348 = vmatprep.subr.bf16.mxu0 %v1277
      %1349 = vmatpush1.bf16.msra.mxu0 %v1276
      %1350 = vmatprep.subr.bf16.mxu0 %v1273
      %1351 = vmatpush1.bf16.msra.mxu0 %v1272
      %1352 = vmatprep.subr.bf16.mxu0 0
      %1353 = vmatpush2.bf16.msra.mxu0 0
      %1354 = vmatprep.subr.bf16.mxu0 0
      %1355 = vmatpush2.bf16.msra.mxu0 0
      %1356 = vmatprep.subr.bf16.mxu0 0
      %1357 = vmatpush2.bf16.msra.mxu0 0
      %1358 = vmatprep.subr.bf16.mxu0 0
      %1359 = vmatpush2.bf16.msra.mxu0 0
      %1360 = vmatprep.subr.bf16.mxu0 0
      %1361 = vmatpush2.bf16.msra.mxu0 0
      %1362 = vmatprep.subr.bf16.mxu0 0
      %1363 = vmatpush2.bf16.msra.mxu0 0
      %1364 = vmatprep.subr.bf16.mxu0 0
      %1365 = vmatpush2.bf16.msra.mxu0 0
      %1366 = vmatprep.subr.bf16.mxu0 0
      %1367 = vmatpush2.bf16.msra.mxu0 0
      %1368 = vmatprep.mubr.bf16.mxu0 0
      %1369 = vmatmul.mubr.bf16.gmra.mxu0 %v1143
      %v1370 = vpop.f32.mrf.mxu0
      %v1371 = vadd.f32 0.0, %v1370
      %v1372 = vpop.f32.mrf.mxu0
      %v1373 = vadd.f32 0.0, %v1372
      %v1374 = vpop.f32.mrf.mxu0
      %v1375 = vadd.f32 0.0, %v1374
      %v1376 = vpop.f32.mrf.mxu0
      %v1377 = vadd.f32 0.0, %v1376
      %1378 = vdwg.mxu0
      %1379 = vmatprep.subr.bf16.mxu0 %v1303
      %1380 = vmatpush1.bf16.msra.mxu0 %v1302
      %1381 = vmatprep.subr.bf16.mxu0 %v1299
      %1382 = vmatpush1.bf16.msra.mxu0 %v1298
      %1383 = vmatprep.subr.bf16.mxu0 %v1295
      %1384 = vmatpush1.bf16.msra.mxu0 %v1294
      %1385 = vmatprep.subr.bf16.mxu0 %v1291
      %1386 = vmatpush1.bf16.msra.mxu0 %v1290
      %1387 = vmatprep.subr.bf16.mxu0 %v1287
      %1388 = vmatpush1.bf16.msra.mxu0 %v1286
      %1389 = vmatprep.subr.bf16.mxu0 %v1283
      %1390 = vmatpush1.bf16.msra.mxu0 %v1282
      %1391 = vmatprep.subr.bf16.mxu0 %v1279
      %1392 = vmatpush1.bf16.msra.mxu0 %v1278
      %1393 = vmatprep.subr.bf16.mxu0 %v1275
      %1394 = vmatpush1.bf16.msra.mxu0 %v1274
      %1395 = vmatprep.subr.bf16.mxu0 0
      %1396 = vmatpush2.bf16.msra.mxu0 0
      %1397 = vmatprep.subr.bf16.mxu0 0
      %1398 = vmatpush2.bf16.msra.mxu0 0
      %1399 = vmatprep.subr.bf16.mxu0 0
      %1400 = vmatpush2.bf16.msra.mxu0 0
      %1401 = vmatprep.subr.bf16.mxu0 0
      %1402 = vmatpush2.bf16.msra.mxu0 0
      %1403 = vmatprep.subr.bf16.mxu0 0
      %1404 = vmatpush2.bf16.msra.mxu0 0
      %1405 = vmatprep.subr.bf16.mxu0 0
      %1406 = vmatpush2.bf16.msra.mxu0 0
      %1407 = vmatprep.subr.bf16.mxu0 0
      %1408 = vmatpush2.bf16.msra.mxu0 0
      %1409 = vmatprep.subr.bf16.mxu0 0
      %1410 = vmatpush2.bf16.msra.mxu0 0
      %1411 = vmatprep.mubr.bf16.mxu0 0
      %1412 = vmatmul.mubr.bf16.gmra.mxu0 %v1143
      %v1413 = vpop.f32.mrf.mxu0
      %v1414 = vadd.f32 0.0, %v1413
      %v1415 = vpop.f32.mrf.mxu0
      %v1416 = vadd.f32 0.0, %v1415
      %v1417 = vpop.f32.mrf.mxu0
      %v1418 = vadd.f32 0.0, %v1417
      %v1419 = vpop.f32.mrf.mxu0
      %v1420 = vadd.f32 0.0, %v1419
      %1421 = vdwg.mxu0
      %v1422 = vadd.f32 %v1133, %v1371
      %v1423 = vadd.f32 %v1134, %v1373
      %v1424 = vadd.f32 %v1135, %v1414
      %v1425 = vadd.f32 %v1136, %v1416
      %v1426 = vadd.f32 %v1137, %v1375
      %v1427 = vadd.f32 %v1138, %v1377
      %v1428 = vadd.f32 %v1139, %v1418
      %v1429 = vadd.f32 %v1140, %v1420
      %v1430 = vxor.u32 %v1422, 2147483648
      %v1431 = vxor.u32 %v1423, 2147483648
      %v1432 = vxor.u32 %v1424, 2147483648
      %v1433 = vxor.u32 %v1426, 2147483648
      %v1434 = vxor.u32 %v1427, 2147483648
      %v1435 = vxor.u32 %v1428, 2147483648
      %v1436 = vmul.f32 %v1430, 1.442695
      %v1437 = vpow.pop %v1436
      %v1438 = vmul.f32 %v1431, 1.442695
      %v1439 = vpow.pop %v1438
      %v1440 = vmul.f32 %v1432, 1.442695
      %v1441 = vpow.pop %v1440
      %v1442 = vmul.f32 %v1433, 1.442695
      %v1443 = vpow.pop %v1442
      %v1444 = vmul.f32 %v1434, 1.442695
      %v1445 = vpow.pop %v1444
      %v1446 = vmul.f32 %v1435, 1.442695
      %v1447 = vpow.pop %v1446
      %v1448 = vadd.f32 %v1437, 1.0
      %v1449 = vadd.f32 %v1439, 1.0
      %v1450 = vadd.f32 %v1441, 1.0
      %v1451 = vadd.f32 %v1443, 1.0
      %v1452 = vadd.f32 %v1445, 1.0
      %v1453 = vadd.f32 %v1447, 1.0
      %v1454 = vrcp.pop %v1448
      %v1455 = vmul.f32 1.0, %v1454
      %v1456 = vrcp.pop %v1449
      %v1457 = vmul.f32 1.0, %v1456
      %v1458 = vrcp.pop %v1450
      %v1459 = vmul.f32 1.0, %v1458
      %v1460 = vrcp.pop %v1451
      %v1461 = vmul.f32 1.0, %v1460
      %v1462 = vrcp.pop %v1452
      %v1463 = vmul.f32 1.0, %v1462
      %v1464 = vrcp.pop %v1453
      %v1465 = vmul.f32 1.0, %v1464
      %v1466 = vtanh.pop %v1425
      %v1467 = vtanh.pop %v1429
      %v1468 = vld [vmem:[#allocation3] sm:$0xff]
      %v1469 = vld [vmem:[#allocation3 + $0x8] sm:$0xff]
      %v1470 = vmul.f32 %v1457, %v1468
      %v1471 = vmul.f32 %v1463, %v1469
      %v1472 = vmul.f32 %v1455, %v1466
      %v1473 = vmul.f32 %v1461, %v1467
      %v1474 = vadd.f32 %v1470, %v1472
      %v1475 = vadd.f32 %v1471, %v1473
      %v1476 = vtanh.pop %v1474
      %v1477 = vtanh.pop %v1475
      %v1478 = vmul.f32 %v1459, %v1476
      %v1479 = vmul.f32 %v1465, %v1477
      %s1480 = sadd.s32 %s351, %s1125
      %v1481 = vstv %s1480
      %vm1482 = vcmp.gt.s32.totalorder %v344, %v1481
      %vm1483 = vcmp.gt.s32.totalorder %v345, %v1481
      %v1484 = vsel %vm1482, 1, 0
      %v1485 = vsel %vm1483, 1, 0
      %1486 = vset.pattern.permute.xlu0 0
      %1487 = vperm.xlu0 %1486, %v1484
      %v1488 = vpop.permute.xlu0 %1487
      %1489 = vset.pattern.permute.xlu0 0
      %1490 = vperm.xlu0 %1489, %v1485
      %v1491 = vpop.permute.xlu0 %1490
      %vm1492 = vcmp.eq.s32.totalorder %v1488, 1
      %vm1493 = vcmp.eq.s32.totalorder %v1491, 1
      %v1494 = vsel %vm1492, %v1478, %v1141
      %v1495 = vsel %vm1493, %v1479, %v1142
      %1496 = vst [vmem:[#allocation2] sm:$0xff] %v1494
      %1497 = vst [vmem:[#allocation2 + $0x8] sm:$0xff] %v1495
      %v1498 = vld [vmem:[#allocation3] sm:$0xff]
      %v1499 = vld [vmem:[#allocation3 + $0x8] sm:$0xff]
      %v1500 = vsel %vm1492, %v1474, %v1498
      %v1501 = vsel %vm1493, %v1475, %v1499
      %1502 = vst [vmem:[#allocation3] sm:$0xff] %v1500
      %1503 = vst [vmem:[#allocation3 + $0x8] sm:$0xff] %v1501
      %v1504 = vsel %vm1492, %v1478, 0.0
      %v1505 = vsel %vm1493, %v1479, 0.0
      %s1506 = smul.u32 %s1125, 16
      %s1507 = scalar_lea.vmem %s323, %s1506
      %1508 = vst [vmem:[%s1507] sm:$0xff] %v1504
      %1509 = vst [vmem:[%s1507 + $0x8] sm:$0xff] %v1505
      %s1510 = smul.u32 %s346, 3
      %s1511 = smul.u32 %s20, 4
      %s1512 = sadd.s32 %s1510, %s1511
      %s1513 = smul.u32 %s1512, 8
      %s1514 = smul.addr %s1513, 4
      %s1515 = scalar_lea.vmem %s297, %s1514
      %v1516 = vld [vmem:[%s1515] sm:$0xff]
      %v1517 = vld [vmem:[%s1515 + $0x8] sm:$0xff]
      %v1518 = vld [vmem:[%s1515 + $0x10] sm:$0xff]
      %v1519 = vld [vmem:[%s1515 + $0x18] sm:$0xff]
      %v1520 = vunpack.c.l.bf16 %v1516
      %v1521 = vunpack.c.h.bf16 %v1516
      %v1522 = vunpack.c.l.bf16 %v1517
      %v1523 = vunpack.c.h.bf16 %v1517
      %v1524 = vunpack.c.l.bf16 %v1518
      %v1525 = vunpack.c.h.bf16 %v1518
      %v1526 = vunpack.c.l.bf16 %v1519
      %v1527 = vunpack.c.h.bf16 %v1519
      %v1528 = vld [vmem:[#allocation2] sm:$0xff]
      %v1529 = vld [vmem:[#allocation2 + $0x8] sm:$0xff]
      %v1530 = vpack.c.bf16 %v1529, %v1528
      %v1531 = vld [vmem:[%s308] sm:$0xff]
      %v1532 = vld [vmem:[%s308 + $0x8] sm:$0xff]
      %v1533 = vld [vmem:[%s308 + $0x10] sm:$0xff]
      %v1534 = vld [vmem:[%s308 + $0x18] sm:$0xff]
      %v1535 = vld [vmem:[%s308 + $0x20] sm:$0xff]
      %v1536 = vld [vmem:[%s308 + $0x28] sm:$0xff]
      %v1537 = vld [vmem:[%s308 + $0x30] sm:$0xff]
      %v1538 = vld [vmem:[%s308 + $0x38] sm:$0xff]
      %v1539 = vld [vmem:[%s308 + $0x40] sm:$0xff]
      %v1540 = vld [vmem:[%s308 + $0x48] sm:$0xff]
      %v1541 = vld [vmem:[%s308 + $0x50] sm:$0xff]
      %v1542 = vld [vmem:[%s308 + $0x58] sm:$0xff]
      %v1543 = vld [vmem:[%s308 + $0x60] sm:$0xff]
      %v1544 = vld [vmem:[%s308 + $0x68] sm:$0xff]
      %v1545 = vld [vmem:[%s308 + $0x70] sm:$0xff]
      %v1546 = vld [vmem:[%s308 + $0x78] sm:$0xff]
      %v1547 = vld [vmem:[%s308 + $0x80] sm:$0xff]
      %v1548 = vld [vmem:[%s308 + $0x88] sm:$0xff]
      %v1549 = vld [vmem:[%s308 + $0x90] sm:$0xff]
      %v1550 = vld [vmem:[%s308 + $0x98] sm:$0xff]
      %v1551 = vld [vmem:[%s308 + $0xa0] sm:$0xff]
      %v1552 = vld [vmem:[%s308 + $0xa8] sm:$0xff]
      %v1553 = vld [vmem:[%s308 + $0xb0] sm:$0xff]
      %v1554 = vld [vmem:[%s308 + $0xb8] sm:$0xff]
      %v1555 = vld [vmem:[%s308 + $0xc0] sm:$0xff]
      %v1556 = vld [vmem:[%s308 + $0xc8] sm:$0xff]
      %v1557 = vld [vmem:[%s308 + $0xd0] sm:$0xff]
      %v1558 = vld [vmem:[%s308 + $0xd8] sm:$0xff]
      %v1559 = vld [vmem:[%s308 + $0xe0] sm:$0xff]
      %v1560 = vld [vmem:[%s308 + $0xe8] sm:$0xff]
      %v1561 = vld [vmem:[%s308 + $0xf0] sm:$0xff]
      %v1562 = vld [vmem:[%s308 + $0xf8] sm:$0xff]
      %v1595 = vunpack.c.l.b16 %v1531
      %v1596 = vunpack.c.h.b16 %v1531
      %v1597 = vunpack.c.l.b16 %v1532
      %v1598 = vunpack.c.h.b16 %v1532
      %v1599 = vunpack.c.l.b16 %v1533
      %v1600 = vunpack.c.h.b16 %v1533
      %v1601 = vunpack.c.l.b16 %v1534
      %v1602 = vunpack.c.h.b16 %v1534
      %v1603 = vunpack.c.l.b16 %v1535
      %v1604 = vunpack.c.h.b16 %v1535
      %v1605 = vunpack.c.l.b16 %v1536
      %v1606 = vunpack.c.h.b16 %v1536
      %v1607 = vunpack.c.l.b16 %v1537
      %v1608 = vunpack.c.h.b16 %v1537
      %v1609 = vunpack.c.l.b16 %v1538
      %v1610 = vunpack.c.h.b16 %v1538
      %v1611 = vunpack.c.l.b16 %v1539
      %v1612 = vunpack.c.h.b16 %v1539
      %v1613 = vunpack.c.l.b16 %v1540
      %v1614 = vunpack.c.h.b16 %v1540
      %v1615 = vunpack.c.l.b16 %v1541
      %v1616 = vunpack.c.h.b16 %v1541
      %v1617 = vunpack.c.l.b16 %v1542
      %v1618 = vunpack.c.h.b16 %v1542
      %v1619 = vunpack.c.l.b16 %v1543
      %v1620 = vunpack.c.h.b16 %v1543
      %v1621 = vunpack.c.l.b16 %v1544
      %v1622 = vunpack.c.h.b16 %v1544
      %v1623 = vunpack.c.l.b16 %v1545
      %v1624 = vunpack.c.h.b16 %v1545
      %v1625 = vunpack.c.l.b16 %v1546
      %v1626 = vunpack.c.h.b16 %v1546
      %v1627 = vunpack.c.l.b16 %v1547
      %v1628 = vunpack.c.h.b16 %v1547
      %v1629 = vunpack.c.l.b16 %v1548
      %v1630 = vunpack.c.h.b16 %v1548
      %v1631 = vunpack.c.l.b16 %v1549
      %v1632 = vunpack.c.h.b16 %v1549
      %v1633 = vunpack.c.l.b16 %v1550
      %v1634 = vunpack.c.h.b16 %v1550
      %v1635 = vunpack.c.l.b16 %v1551
      %v1636 = vunpack.c.h.b16 %v1551
      %v1637 = vunpack.c.l.b16 %v1552
      %v1638 = vunpack.c.h.b16 %v1552
      %v1639 = vunpack.c.l.b16 %v1553
      %v1640 = vunpack.c.h.b16 %v1553
      %v1641 = vunpack.c.l.b16 %v1554
      %v1642 = vunpack.c.h.b16 %v1554
      %v1643 = vunpack.c.l.b16 %v1555
      %v1644 = vunpack.c.h.b16 %v1555
      %v1645 = vunpack.c.l.b16 %v1556
      %v1646 = vunpack.c.h.b16 %v1556
      %v1647 = vunpack.c.l.b16 %v1557
      %v1648 = vunpack.c.h.b16 %v1557
      %v1649 = vunpack.c.l.b16 %v1558
      %v1650 = vunpack.c.h.b16 %v1558
      %v1651 = vunpack.c.l.b16 %v1559
      %v1652 = vunpack.c.h.b16 %v1559
      %v1653 = vunpack.c.l.b16 %v1560
      %v1654 = vunpack.c.h.b16 %v1560
      %v1655 = vunpack.c.l.b16 %v1561
      %v1656 = vunpack.c.h.b16 %v1561
      %v1657 = vunpack.c.l.b16 %v1562
      %v1658 = vunpack.c.h.b16 %v1562
      %v1659 = vpack.c.b16 %v1599, %v1595
      %v1660 = vpack.c.b16 %v1600, %v1596
      %v1661 = vpack.c.b16 %v1601, %v1597
      %v1662 = vpack.c.b16 %v1602, %v1598
      %v1663 = vpack.c.b16 %v1607, %v1603
      %v1664 = vpack.c.b16 %v1608, %v1604
      %v1665 = vpack.c.b16 %v1609, %v1605
      %v1666 = vpack.c.b16 %v1610, %v1606
      %v1667 = vpack.c.b16 %v1615, %v1611
      %v1668 = vpack.c.b16 %v1616, %v1612
      %v1669 = vpack.c.b16 %v1617, %v1613
      %v1670 = vpack.c.b16 %v1618, %v1614
      %v1671 = vpack.c.b16 %v1623, %v1619
      %v1672 = vpack.c.b16 %v1624, %v1620
      %v1673 = vpack.c.b16 %v1625, %v1621
      %v1674 = vpack.c.b16 %v1626, %v1622
      %v1675 = vpack.c.b16 %v1631, %v1627
      %v1676 = vpack.c.b16 %v1632, %v1628
      %v1677 = vpack.c.b16 %v1633, %v1629
      %v1678 = vpack.c.b16 %v1634, %v1630
      %v1679 = vpack.c.b16 %v1639, %v1635
      %v1680 = vpack.c.b16 %v1640, %v1636
      %v1681 = vpack.c.b16 %v1641, %v1637
      %v1682 = vpack.c.b16 %v1642, %v1638
      %v1683 = vpack.c.b16 %v1647, %v1643
      %v1684 = vpack.c.b16 %v1648, %v1644
      %v1685 = vpack.c.b16 %v1649, %v1645
      %v1686 = vpack.c.b16 %v1650, %v1646
      %v1687 = vpack.c.b16 %v1655, %v1651
      %v1688 = vpack.c.b16 %v1656, %v1652
      %v1689 = vpack.c.b16 %v1657, %v1653
      %v1690 = vpack.c.b16 %v1658, %v1654
      %1723 = vmatprep.subr.bf16.mxu0 %v1688
      %1724 = vmatpush1.bf16.msra.mxu0 %v1687
      %1725 = vmatprep.subr.bf16.mxu0 %v1684
      %1726 = vmatpush1.bf16.msra.mxu0 %v1683
      %1727 = vmatprep.subr.bf16.mxu0 %v1680
      %1728 = vmatpush1.bf16.msra.mxu0 %v1679
      %1729 = vmatprep.subr.bf16.mxu0 %v1676
      %1730 = vmatpush1.bf16.msra.mxu0 %v1675
      %1731 = vmatprep.subr.bf16.mxu0 %v1672
      %1732 = vmatpush1.bf16.msra.mxu0 %v1671
      %1733 = vmatprep.subr.bf16.mxu0 %v1668
      %1734 = vmatpush1.bf16.msra.mxu0 %v1667
      %1735 = vmatprep.subr.bf16.mxu0 %v1664
      %1736 = vmatpush1.bf16.msra.mxu0 %v1663
      %1737 = vmatprep.subr.bf16.mxu0 %v1660
      %1738 = vmatpush1.bf16.msra.mxu0 %v1659
      %1739 = vmatprep.subr.bf16.mxu0 0
      %1740 = vmatpush2.bf16.msra.mxu0 0
      %1741 = vmatprep.subr.bf16.mxu0 0
      %1742 = vmatpush2.bf16.msra.mxu0 0
      %1743 = vmatprep.subr.bf16.mxu0 0
      %1744 = vmatpush2.bf16.msra.mxu0 0
      %1745 = vmatprep.subr.bf16.mxu0 0
      %1746 = vmatpush2.bf16.msra.mxu0 0
      %1747 = vmatprep.subr.bf16.mxu0 0
      %1748 = vmatpush2.bf16.msra.mxu0 0
      %1749 = vmatprep.subr.bf16.mxu0 0
      %1750 = vmatpush2.bf16.msra.mxu0 0
      %1751 = vmatprep.subr.bf16.mxu0 0
      %1752 = vmatpush2.bf16.msra.mxu0 0
      %1753 = vmatprep.subr.bf16.mxu0 0
      %1754 = vmatpush2.bf16.msra.mxu0 0
      %1755 = vmatprep.mubr.bf16.mxu0 0
      %1756 = vmatmul.mubr.bf16.gmra.mxu0 %v1530
      %v1757 = vpop.f32.mrf.mxu0
      %v1758 = vadd.f32 0.0, %v1757
      %v1759 = vpop.f32.mrf.mxu0
      %v1760 = vadd.f32 0.0, %v1759
      %v1761 = vpop.f32.mrf.mxu0
      %v1762 = vadd.f32 0.0, %v1761
      %v1763 = vpop.f32.mrf.mxu0
      %v1764 = vadd.f32 0.0, %v1763
      %1765 = vdwg.mxu0
      %1766 = vmatprep.subr.bf16.mxu0 %v1690
      %1767 = vmatpush1.bf16.msra.mxu0 %v1689
      %1768 = vmatprep.subr.bf16.mxu0 %v1686
      %1769 = vmatpush1.bf16.msra.mxu0 %v1685
      %1770 = vmatprep.subr.bf16.mxu0 %v1682
      %1771 = vmatpush1.bf16.msra.mxu0 %v1681
      %1772 = vmatprep.subr.bf16.mxu0 %v1678
      %1773 = vmatpush1.bf16.msra.mxu0 %v1677
      %1774 = vmatprep.subr.bf16.mxu0 %v1674
      %1775 = vmatpush1.bf16.msra.mxu0 %v1673
      %1776 = vmatprep.subr.bf16.mxu0 %v1670
      %1777 = vmatpush1.bf16.msra.mxu0 %v1669
      %1778 = vmatprep.subr.bf16.mxu0 %v1666
      %1779 = vmatpush1.bf16.msra.mxu0 %v1665
      %1780 = vmatprep.subr.bf16.mxu0 %v1662
      %1781 = vmatpush1.bf16.msra.mxu0 %v1661
      %1782 = vmatprep.subr.bf16.mxu0 0
      %1783 = vmatpush2.bf16.msra.mxu0 0
      %1784 = vmatprep.subr.bf16.mxu0 0
      %1785 = vmatpush2.bf16.msra.mxu0 0
      %1786 = vmatprep.subr.bf16.mxu0 0
      %1787 = vmatpush2.bf16.msra.mxu0 0
      %1788 = vmatprep.subr.bf16.mxu0 0
      %1789 = vmatpush2.bf16.msra.mxu0 0
      %1790 = vmatprep.subr.bf16.mxu0 0
      %1791 = vmatpush2.bf16.msra.mxu0 0
      %1792 = vmatprep.subr.bf16.mxu0 0
      %1793 = vmatpush2.bf16.msra.mxu0 0
      %1794 = vmatprep.subr.bf16.mxu0 0
      %1795 = vmatpush2.bf16.msra.mxu0 0
      %1796 = vmatprep.subr.bf16.mxu0 0
      %1797 = vmatpush2.bf16.msra.mxu0 0
      %1798 = vmatprep.mubr.bf16.mxu0 0
      %1799 = vmatmul.mubr.bf16.gmra.mxu0 %v1530
      %v1800 = vpop.f32.mrf.mxu0
      %v1801 = vadd.f32 0.0, %v1800
      %v1802 = vpop.f32.mrf.mxu0
      %v1803 = vadd.f32 0.0, %v1802
      %v1804 = vpop.f32.mrf.mxu0
      %v1805 = vadd.f32 0.0, %v1804
      %v1806 = vpop.f32.mrf.mxu0
      %v1807 = vadd.f32 0.0, %v1806
      %1808 = vdwg.mxu0
      %v1809 = vadd.f32 %v1520, %v1758
      %v1810 = vadd.f32 %v1521, %v1760
      %v1811 = vadd.f32 %v1522, %v1801
      %v1812 = vadd.f32 %v1523, %v1803
      %v1813 = vadd.f32 %v1524, %v1762
      %v1814 = vadd.f32 %v1525, %v1764
      %v1815 = vadd.f32 %v1526, %v1805
      %v1816 = vadd.f32 %v1527, %v1807
      %v1817 = vxor.u32 %v1809, 2147483648
      %v1818 = vxor.u32 %v1810, 2147483648
      %v1819 = vxor.u32 %v1811, 2147483648
      %v1820 = vxor.u32 %v1813, 2147483648
      %v1821 = vxor.u32 %v1814, 2147483648
      %v1822 = vxor.u32 %v1815, 2147483648
      %v1823 = vmul.f32 %v1817, 1.442695
      %v1824 = vpow.pop %v1823
      %v1825 = vmul.f32 %v1818, 1.442695
      %v1826 = vpow.pop %v1825
      %v1827 = vmul.f32 %v1819, 1.442695
      %v1828 = vpow.pop %v1827
      %v1829 = vmul.f32 %v1820, 1.442695
      %v1830 = vpow.pop %v1829
      %v1831 = vmul.f32 %v1821, 1.442695
      %v1832 = vpow.pop %v1831
      %v1833 = vmul.f32 %v1822, 1.442695
      %v1834 = vpow.pop %v1833
      %v1835 = vadd.f32 %v1824, 1.0
      %v1836 = vadd.f32 %v1826, 1.0
      %v1837 = vadd.f32 %v1828, 1.0
      %v1838 = vadd.f32 %v1830, 1.0
      %v1839 = vadd.f32 %v1832, 1.0
      %v1840 = vadd.f32 %v1834, 1.0
      %v1841 = vrcp.pop %v1835
      %v1842 = vmul.f32 1.0, %v1841
      %v1843 = vrcp.pop %v1836
      %v1844 = vmul.f32 1.0, %v1843
      %v1845 = vrcp.pop %v1837
      %v1846 = vmul.f32 1.0, %v1845
      %v1847 = vrcp.pop %v1838
      %v1848 = vmul.f32 1.0, %v1847
      %v1849 = vrcp.pop %v1839
      %v1850 = vmul.f32 1.0, %v1849
      %v1851 = vrcp.pop %v1840
      %v1852 = vmul.f32 1.0, %v1851
      %v1853 = vtanh.pop %v1812
      %v1854 = vtanh.pop %v1816
      %v1855 = vld [vmem:[#allocation3] sm:$0xff]
      %v1856 = vld [vmem:[#allocation3 + $0x8] sm:$0xff]
      %v1857 = vmul.f32 %v1844, %v1855
      %v1858 = vmul.f32 %v1850, %v1856
      %v1859 = vmul.f32 %v1842, %v1853
      %v1860 = vmul.f32 %v1848, %v1854
      %v1861 = vadd.f32 %v1857, %v1859
      %v1862 = vadd.f32 %v1858, %v1860
      %v1863 = vtanh.pop %v1861
      %v1864 = vtanh.pop %v1862
      %v1865 = vmul.f32 %v1846, %v1863
      %v1866 = vmul.f32 %v1852, %v1864
      %s1867 = sadd.s32 %s351, %s1512
      %v1868 = vstv %s1867
      %vm1869 = vcmp.gt.s32.totalorder %v344, %v1868
      %vm1870 = vcmp.gt.s32.totalorder %v345, %v1868
      %v1871 = vsel %vm1869, 1, 0
      %v1872 = vsel %vm1870, 1, 0
      %1873 = vset.pattern.permute.xlu0 0
      %1874 = vperm.xlu0 %1873, %v1871
      %v1875 = vpop.permute.xlu0 %1874
      %1876 = vset.pattern.permute.xlu0 0
      %1877 = vperm.xlu0 %1876, %v1872
      %v1878 = vpop.permute.xlu0 %1877
      %vm1879 = vcmp.eq.s32.totalorder %v1875, 1
      %vm1880 = vcmp.eq.s32.totalorder %v1878, 1
      %v1881 = vsel %vm1879, %v1865, %v1528
      %v1882 = vsel %vm1880, %v1866, %v1529
      %1883 = vst [vmem:[#allocation2] sm:$0xff] %v1881
      %1884 = vst [vmem:[#allocation2 + $0x8] sm:$0xff] %v1882
      %v1885 = vld [vmem:[#allocation3] sm:$0xff]
      %v1886 = vld [vmem:[#allocation3 + $0x8] sm:$0xff]
      %v1887 = vsel %vm1879, %v1861, %v1885
      %v1888 = vsel %vm1880, %v1862, %v1886
      %1889 = vst [vmem:[#allocation3] sm:$0xff] %v1887
      %1890 = vst [vmem:[#allocation3 + $0x8] sm:$0xff] %v1888
      %v1891 = vsel %vm1879, %v1865, 0.0
      %v1892 = vsel %vm1880, %v1866, 0.0
      %s1893 = smul.u32 %s1512, 16
      %s1894 = scalar_lea.vmem %s323, %s1893
      %1895 = vst [vmem:[%s1894] sm:$0xff] %v1891
      %1896 = vst [vmem:[%s1894 + $0x8] sm:$0xff] %v1892
      %s1897 = smul.u32 %s346, 4
      %s1898 = smul.u32 %s20, 3
      %s1899 = sadd.s32 %s1897, %s1898
      %s1900 = smul.u32 %s1899, 8
      %s1901 = smul.addr %s1900, 4
      %s1902 = scalar_lea.vmem %s297, %s1901
      %v1903 = vld [vmem:[%s1902] sm:$0xff]
      %v1904 = vld [vmem:[%s1902 + $0x8] sm:$0xff]
      %v1905 = vld [vmem:[%s1902 + $0x10] sm:$0xff]
      %v1906 = vld [vmem:[%s1902 + $0x18] sm:$0xff]
      %v1907 = vunpack.c.l.bf16 %v1903
      %v1908 = vunpack.c.h.bf16 %v1903
      %v1909 = vunpack.c.l.bf16 %v1904
      %v1910 = vunpack.c.h.bf16 %v1904
      %v1911 = vunpack.c.l.bf16 %v1905
      %v1912 = vunpack.c.h.bf16 %v1905
      %v1913 = vunpack.c.l.bf16 %v1906
      %v1914 = vunpack.c.h.bf16 %v1906
      %v1915 = vld [vmem:[#allocation2] sm:$0xff]
      %v1916 = vld [vmem:[#allocation2 + $0x8] sm:$0xff]
      %v1917 = vpack.c.bf16 %v1916, %v1915
      %v1918 = vld [vmem:[%s308] sm:$0xff]
      %v1919 = vld [vmem:[%s308 + $0x8] sm:$0xff]
      %v1920 = vld [vmem:[%s308 + $0x10] sm:$0xff]
      %v1921 = vld [vmem:[%s308 + $0x18] sm:$0xff]
      %v1922 = vld [vmem:[%s308 + $0x20] sm:$0xff]
      %v1923 = vld [vmem:[%s308 + $0x28] sm:$0xff]
      %v1924 = vld [vmem:[%s308 + $0x30] sm:$0xff]
      %v1925 = vld [vmem:[%s308 + $0x38] sm:$0xff]
      %v1926 = vld [vmem:[%s308 + $0x40] sm:$0xff]
      %v1927 = vld [vmem:[%s308 + $0x48] sm:$0xff]
      %v1928 = vld [vmem:[%s308 + $0x50] sm:$0xff]
      %v1929 = vld [vmem:[%s308 + $0x58] sm:$0xff]
      %v1930 = vld [vmem:[%s308 + $0x60] sm:$0xff]
      %v1931 = vld [vmem:[%s308 + $0x68] sm:$0xff]
      %v1932 = vld [vmem:[%s308 + $0x70] sm:$0xff]
      %v1933 = vld [vmem:[%s308 + $0x78] sm:$0xff]
      %v1934 = vld [vmem:[%s308 + $0x80] sm:$0xff]
      %v1935 = vld [vmem:[%s308 + $0x88] sm:$0xff]
      %v1936 = vld [vmem:[%s308 + $0x90] sm:$0xff]
      %v1937 = vld [vmem:[%s308 + $0x98] sm:$0xff]
      %v1938 = vld [vmem:[%s308 + $0xa0] sm:$0xff]
      %v1939 = vld [vmem:[%s308 + $0xa8] sm:$0xff]
      %v1940 = vld [vmem:[%s308 + $0xb0] sm:$0xff]
      %v1941 = vld [vmem:[%s308 + $0xb8] sm:$0xff]
      %v1942 = vld [vmem:[%s308 + $0xc0] sm:$0xff]
      %v1943 = vld [vmem:[%s308 + $0xc8] sm:$0xff]
      %v1944 = vld [vmem:[%s308 + $0xd0] sm:$0xff]
      %v1945 = vld [vmem:[%s308 + $0xd8] sm:$0xff]
      %v1946 = vld [vmem:[%s308 + $0xe0] sm:$0xff]
      %v1947 = vld [vmem:[%s308 + $0xe8] sm:$0xff]
      %v1948 = vld [vmem:[%s308 + $0xf0] sm:$0xff]
      %v1949 = vld [vmem:[%s308 + $0xf8] sm:$0xff]
      %v1982 = vunpack.c.l.b16 %v1918
      %v1983 = vunpack.c.h.b16 %v1918
      %v1984 = vunpack.c.l.b16 %v1919
      %v1985 = vunpack.c.h.b16 %v1919
      %v1986 = vunpack.c.l.b16 %v1920
      %v1987 = vunpack.c.h.b16 %v1920
      %v1988 = vunpack.c.l.b16 %v1921
      %v1989 = vunpack.c.h.b16 %v1921
      %v1990 = vunpack.c.l.b16 %v1922
      %v1991 = vunpack.c.h.b16 %v1922
      %v1992 = vunpack.c.l.b16 %v1923
      %v1993 = vunpack.c.h.b16 %v1923
      %v1994 = vunpack.c.l.b16 %v1924
      %v1995 = vunpack.c.h.b16 %v1924
      %v1996 = vunpack.c.l.b16 %v1925
      %v1997 = vunpack.c.h.b16 %v1925
      %v1998 = vunpack.c.l.b16 %v1926
      %v1999 = vunpack.c.h.b16 %v1926
      %v2000 = vunpack.c.l.b16 %v1927
      %v2001 = vunpack.c.h.b16 %v1927
      %v2002 = vunpack.c.l.b16 %v1928
      %v2003 = vunpack.c.h.b16 %v1928
      %v2004 = vunpack.c.l.b16 %v1929
      %v2005 = vunpack.c.h.b16 %v1929
      %v2006 = vunpack.c.l.b16 %v1930
      %v2007 = vunpack.c.h.b16 %v1930
      %v2008 = vunpack.c.l.b16 %v1931
      %v2009 = vunpack.c.h.b16 %v1931
      %v2010 = vunpack.c.l.b16 %v1932
      %v2011 = vunpack.c.h.b16 %v1932
      %v2012 = vunpack.c.l.b16 %v1933
      %v2013 = vunpack.c.h.b16 %v1933
      %v2014 = vunpack.c.l.b16 %v1934
      %v2015 = vunpack.c.h.b16 %v1934
      %v2016 = vunpack.c.l.b16 %v1935
      %v2017 = vunpack.c.h.b16 %v1935
      %v2018 = vunpack.c.l.b16 %v1936
      %v2019 = vunpack.c.h.b16 %v1936
      %v2020 = vunpack.c.l.b16 %v1937
      %v2021 = vunpack.c.h.b16 %v1937
      %v2022 = vunpack.c.l.b16 %v1938
      %v2023 = vunpack.c.h.b16 %v1938
      %v2024 = vunpack.c.l.b16 %v1939
      %v2025 = vunpack.c.h.b16 %v1939
      %v2026 = vunpack.c.l.b16 %v1940
      %v2027 = vunpack.c.h.b16 %v1940
      %v2028 = vunpack.c.l.b16 %v1941
      %v2029 = vunpack.c.h.b16 %v1941
      %v2030 = vunpack.c.l.b16 %v1942
      %v2031 = vunpack.c.h.b16 %v1942
      %v2032 = vunpack.c.l.b16 %v1943
      %v2033 = vunpack.c.h.b16 %v1943
      %v2034 = vunpack.c.l.b16 %v1944
      %v2035 = vunpack.c.h.b16 %v1944
      %v2036 = vunpack.c.l.b16 %v1945
      %v2037 = vunpack.c.h.b16 %v1945
      %v2038 = vunpack.c.l.b16 %v1946
      %v2039 = vunpack.c.h.b16 %v1946
      %v2040 = vunpack.c.l.b16 %v1947
      %v2041 = vunpack.c.h.b16 %v1947
      %v2042 = vunpack.c.l.b16 %v1948
      %v2043 = vunpack.c.h.b16 %v1948
      %v2044 = vunpack.c.l.b16 %v1949
      %v2045 = vunpack.c.h.b16 %v1949
      %v2046 = vpack.c.b16 %v1986, %v1982
      %v2047 = vpack.c.b16 %v1987, %v1983
      %v2048 = vpack.c.b16 %v1988, %v1984
      %v2049 = vpack.c.b16 %v1989, %v1985
      %v2050 = vpack.c.b16 %v1994, %v1990
      %v2051 = vpack.c.b16 %v1995, %v1991
      %v2052 = vpack.c.b16 %v1996, %v1992
      %v2053 = vpack.c.b16 %v1997, %v1993
      %v2054 = vpack.c.b16 %v2002, %v1998
      %v2055 = vpack.c.b16 %v2003, %v1999
      %v2056 = vpack.c.b16 %v2004, %v2000
      %v2057 = vpack.c.b16 %v2005, %v2001
      %v2058 = vpack.c.b16 %v2010, %v2006
      %v2059 = vpack.c.b16 %v2011, %v2007
      %v2060 = vpack.c.b16 %v2012, %v2008
      %v2061 = vpack.c.b16 %v2013, %v2009
      %v2062 = vpack.c.b16 %v2018, %v2014
      %v2063 = vpack.c.b16 %v2019, %v2015
      %v2064 = vpack.c.b16 %v2020, %v2016
      %v2065 = vpack.c.b16 %v2021, %v2017
      %v2066 = vpack.c.b16 %v2026, %v2022
      %v2067 = vpack.c.b16 %v2027, %v2023
      %v2068 = vpack.c.b16 %v2028, %v2024
      %v2069 = vpack.c.b16 %v2029, %v2025
      %v2070 = vpack.c.b16 %v2034, %v2030
      %v2071 = vpack.c.b16 %v2035, %v2031
      %v2072 = vpack.c.b16 %v2036, %v2032
      %v2073 = vpack.c.b16 %v2037, %v2033
      %v2074 = vpack.c.b16 %v2042, %v2038
      %v2075 = vpack.c.b16 %v2043, %v2039
      %v2076 = vpack.c.b16 %v2044, %v2040
      %v2077 = vpack.c.b16 %v2045, %v2041
      %2110 = vmatprep.subr.bf16.mxu0 %v2075
      %2111 = vmatpush1.bf16.msra.mxu0 %v2074
      %2112 = vmatprep.subr.bf16.mxu0 %v2071
      %2113 = vmatpush1.bf16.msra.mxu0 %v2070
      %2114 = vmatprep.subr.bf16.mxu0 %v2067
      %2115 = vmatpush1.bf16.msra.mxu0 %v2066
      %2116 = vmatprep.subr.bf16.mxu0 %v2063
      %2117 = vmatpush1.bf16.msra.mxu0 %v2062
      %2118 = vmatprep.subr.bf16.mxu0 %v2059
      %2119 = vmatpush1.bf16.msra.mxu0 %v2058
      %2120 = vmatprep.subr.bf16.mxu0 %v2055
      %2121 = vmatpush1.bf16.msra.mxu0 %v2054
      %2122 = vmatprep.subr.bf16.mxu0 %v2051
      %2123 = vmatpush1.bf16.msra.mxu0 %v2050
      %2124 = vmatprep.subr.bf16.mxu0 %v2047
      %2125 = vmatpush1.bf16.msra.mxu0 %v2046
      %2126 = vmatprep.subr.bf16.mxu0 0
      %2127 = vmatpush2.bf16.msra.mxu0 0
      %2128 = vmatprep.subr.bf16.mxu0 0
      %2129 = vmatpush2.bf16.msra.mxu0 0
      %2130 = vmatprep.subr.bf16.mxu0 0
      %2131 = vmatpush2.bf16.msra.mxu0 0
      %2132 = vmatprep.subr.bf16.mxu0 0
      %2133 = vmatpush2.bf16.msra.mxu0 0
      %2134 = vmatprep.subr.bf16.mxu0 0
      %2135 = vmatpush2.bf16.msra.mxu0 0
      %2136 = vmatprep.subr.bf16.mxu0 0
      %2137 = vmatpush2.bf16.msra.mxu0 0
      %2138 = vmatprep.subr.bf16.mxu0 0
      %2139 = vmatpush2.bf16.msra.mxu0 0
      %2140 = vmatprep.subr.bf16.mxu0 0
      %2141 = vmatpush2.bf16.msra.mxu0 0
      %2142 = vmatprep.mubr.bf16.mxu0 0
      %2143 = vmatmul.mubr.bf16.gmra.mxu0 %v1917
      %v2144 = vpop.f32.mrf.mxu0
      %v2145 = vadd.f32 0.0, %v2144
      %v2146 = vpop.f32.mrf.mxu0
      %v2147 = vadd.f32 0.0, %v2146
      %v2148 = vpop.f32.mrf.mxu0
      %v2149 = vadd.f32 0.0, %v2148
      %v2150 = vpop.f32.mrf.mxu0
      %v2151 = vadd.f32 0.0, %v2150
      %2152 = vdwg.mxu0
      %2153 = vmatprep.subr.bf16.mxu0 %v2077
      %2154 = vmatpush1.bf16.msra.mxu0 %v2076
      %2155 = vmatprep.subr.bf16.mxu0 %v2073
      %2156 = vmatpush1.bf16.msra.mxu0 %v2072
      %2157 = vmatprep.subr.bf16.mxu0 %v2069
      %2158 = vmatpush1.bf16.msra.mxu0 %v2068
      %2159 = vmatprep.subr.bf16.mxu0 %v2065
      %2160 = vmatpush1.bf16.msra.mxu0 %v2064
      %2161 = vmatprep.subr.bf16.mxu0 %v2061
      %2162 = vmatpush1.bf16.msra.mxu0 %v2060
      %2163 = vmatprep.subr.bf16.mxu0 %v2057
      %2164 = vmatpush1.bf16.msra.mxu0 %v2056
      %2165 = vmatprep.subr.bf16.mxu0 %v2053
      %2166 = vmatpush1.bf16.msra.mxu0 %v2052
      %2167 = vmatprep.subr.bf16.mxu0 %v2049
      %2168 = vmatpush1.bf16.msra.mxu0 %v2048
      %2169 = vmatprep.subr.bf16.mxu0 0
      %2170 = vmatpush2.bf16.msra.mxu0 0
      %2171 = vmatprep.subr.bf16.mxu0 0
      %2172 = vmatpush2.bf16.msra.mxu0 0
      %2173 = vmatprep.subr.bf16.mxu0 0
      %2174 = vmatpush2.bf16.msra.mxu0 0
      %2175 = vmatprep.subr.bf16.mxu0 0
      %2176 = vmatpush2.bf16.msra.mxu0 0
      %2177 = vmatprep.subr.bf16.mxu0 0
      %2178 = vmatpush2.bf16.msra.mxu0 0
      %2179 = vmatprep.subr.bf16.mxu0 0
      %2180 = vmatpush2.bf16.msra.mxu0 0
      %2181 = vmatprep.subr.bf16.mxu0 0
      %2182 = vmatpush2.bf16.msra.mxu0 0
      %2183 = vmatprep.subr.bf16.mxu0 0
      %2184 = vmatpush2.bf16.msra.mxu0 0
      %2185 = vmatprep.mubr.bf16.mxu0 0
      %2186 = vmatmul.mubr.bf16.gmra.mxu0 %v1917
      %v2187 = vpop.f32.mrf.mxu0
      %v2188 = vadd.f32 0.0, %v2187
      %v2189 = vpop.f32.mrf.mxu0
      %v2190 = vadd.f32 0.0, %v2189
      %v2191 = vpop.f32.mrf.mxu0
      %v2192 = vadd.f32 0.0, %v2191
      %v2193 = vpop.f32.mrf.mxu0
      %v2194 = vadd.f32 0.0, %v2193
      %2195 = vdwg.mxu0
      %v2196 = vadd.f32 %v1907, %v2145
      %v2197 = vadd.f32 %v1908, %v2147
      %v2198 = vadd.f32 %v1909, %v2188
      %v2199 = vadd.f32 %v1910, %v2190
      %v2200 = vadd.f32 %v1911, %v2149
      %v2201 = vadd.f32 %v1912, %v2151
      %v2202 = vadd.f32 %v1913, %v2192
      %v2203 = vadd.f32 %v1914, %v2194
      %v2204 = vxor.u32 %v2196, 2147483648
      %v2205 = vxor.u32 %v2197, 2147483648
      %v2206 = vxor.u32 %v2198, 2147483648
      %v2207 = vxor.u32 %v2200, 2147483648
      %v2208 = vxor.u32 %v2201, 2147483648
      %v2209 = vxor.u32 %v2202, 2147483648
      %v2210 = vmul.f32 %v2204, 1.442695
      %v2211 = vpow.pop %v2210
      %v2212 = vmul.f32 %v2205, 1.442695
      %v2213 = vpow.pop %v2212
      %v2214 = vmul.f32 %v2206, 1.442695
      %v2215 = vpow.pop %v2214
      %v2216 = vmul.f32 %v2207, 1.442695
      %v2217 = vpow.pop %v2216
      %v2218 = vmul.f32 %v2208, 1.442695
      %v2219 = vpow.pop %v2218
      %v2220 = vmul.f32 %v2209, 1.442695
      %v2221 = vpow.pop %v2220
      %v2222 = vadd.f32 %v2211, 1.0
      %v2223 = vadd.f32 %v2213, 1.0
      %v2224 = vadd.f32 %v2215, 1.0
      %v2225 = vadd.f32 %v2217, 1.0
      %v2226 = vadd.f32 %v2219, 1.0
      %v2227 = vadd.f32 %v2221, 1.0
      %v2228 = vrcp.pop %v2222
      %v2229 = vmul.f32 1.0, %v2228
      %v2230 = vrcp.pop %v2223
      %v2231 = vmul.f32 1.0, %v2230
      %v2232 = vrcp.pop %v2224
      %v2233 = vmul.f32 1.0, %v2232
      %v2234 = vrcp.pop %v2225
      %v2235 = vmul.f32 1.0, %v2234
      %v2236 = vrcp.pop %v2226
      %v2237 = vmul.f32 1.0, %v2236
      %v2238 = vrcp.pop %v2227
      %v2239 = vmul.f32 1.0, %v2238
      %v2240 = vtanh.pop %v2199
      %v2241 = vtanh.pop %v2203
      %v2242 = vld [vmem:[#allocation3] sm:$0xff]
      %v2243 = vld [vmem:[#allocation3 + $0x8] sm:$0xff]
      %v2244 = vmul.f32 %v2231, %v2242
      %v2245 = vmul.f32 %v2237, %v2243
      %v2246 = vmul.f32 %v2229, %v2240
      %v2247 = vmul.f32 %v2235, %v2241
      %v2248 = vadd.f32 %v2244, %v2246
      %v2249 = vadd.f32 %v2245, %v2247
      %v2250 = vtanh.pop %v2248
      %v2251 = vtanh.pop %v2249
      %v2252 = vmul.f32 %v2233, %v2250
      %v2253 = vmul.f32 %v2239, %v2251
      %s2254 = sadd.s32 %s351, %s1899
      %v2255 = vstv %s2254
      %vm2256 = vcmp.gt.s32.totalorder %v344, %v2255
      %vm2257 = vcmp.gt.s32.totalorder %v345, %v2255
      %v2258 = vsel %vm2256, 1, 0
      %v2259 = vsel %vm2257, 1, 0
      %2260 = vset.pattern.permute.xlu0 0
      %2261 = vperm.xlu0 %2260, %v2258
      %v2262 = vpop.permute.xlu0 %2261
      %2263 = vset.pattern.permute.xlu0 0
      %2264 = vperm.xlu0 %2263, %v2259
      %v2265 = vpop.permute.xlu0 %2264
      %vm2266 = vcmp.eq.s32.totalorder %v2262, 1
      %vm2267 = vcmp.eq.s32.totalorder %v2265, 1
      %v2268 = vsel %vm2266, %v2252, %v1915
      %v2269 = vsel %vm2267, %v2253, %v1916
      %2270 = vst [vmem:[#allocation2] sm:$0xff] %v2268
      %2271 = vst [vmem:[#allocation2 + $0x8] sm:$0xff] %v2269
      %v2272 = vld [vmem:[#allocation3] sm:$0xff]
      %v2273 = vld [vmem:[#allocation3 + $0x8] sm:$0xff]
      %v2274 = vsel %vm2266, %v2248, %v2272
      %v2275 = vsel %vm2267, %v2249, %v2273
      %2276 = vst [vmem:[#allocation3] sm:$0xff] %v2274
      %2277 = vst [vmem:[#allocation3 + $0x8] sm:$0xff] %v2275
      %v2278 = vsel %vm2266, %v2252, 0.0
      %v2279 = vsel %vm2267, %v2253, 0.0
      %s2280 = smul.u32 %s1899, 16
      %s2281 = scalar_lea.vmem %s323, %s2280
      %2282 = vst [vmem:[%s2281] sm:$0xff] %v2278
      %2283 = vst [vmem:[%s2281 + $0x8] sm:$0xff] %v2279
      %s2284 = smul.u32 %s346, 5
      %s2285 = smul.u32 %s20, 2
      %s2286 = sadd.s32 %s2284, %s2285
      %s2287 = smul.u32 %s2286, 8
      %s2288 = smul.addr %s2287, 4
      %s2289 = scalar_lea.vmem %s297, %s2288
      %v2290 = vld [vmem:[%s2289] sm:$0xff]
      %v2291 = vld [vmem:[%s2289 + $0x8] sm:$0xff]
      %v2292 = vld [vmem:[%s2289 + $0x10] sm:$0xff]
      %v2293 = vld [vmem:[%s2289 + $0x18] sm:$0xff]
      %v2294 = vunpack.c.l.bf16 %v2290
      %v2295 = vunpack.c.h.bf16 %v2290
      %v2296 = vunpack.c.l.bf16 %v2291
      %v2297 = vunpack.c.h.bf16 %v2291
      %v2298 = vunpack.c.l.bf16 %v2292
      %v2299 = vunpack.c.h.bf16 %v2292
      %v2300 = vunpack.c.l.bf16 %v2293
      %v2301 = vunpack.c.h.bf16 %v2293
      %v2302 = vld [vmem:[#allocation2] sm:$0xff]
      %v2303 = vld [vmem:[#allocation2 + $0x8] sm:$0xff]
      %v2304 = vpack.c.bf16 %v2303, %v2302
      %v2305 = vld [vmem:[%s308] sm:$0xff]
      %v2306 = vld [vmem:[%s308 + $0x8] sm:$0xff]
      %v2307 = vld [vmem:[%s308 + $0x10] sm:$0xff]
      %v2308 = vld [vmem:[%s308 + $0x18] sm:$0xff]
      %v2309 = vld [vmem:[%s308 + $0x20] sm:$0xff]
      %v2310 = vld [vmem:[%s308 + $0x28] sm:$0xff]
      %v2311 = vld [vmem:[%s308 + $0x30] sm:$0xff]
      %v2312 = vld [vmem:[%s308 + $0x38] sm:$0xff]
      %v2313 = vld [vmem:[%s308 + $0x40] sm:$0xff]
      %v2314 = vld [vmem:[%s308 + $0x48] sm:$0xff]
      %v2315 = vld [vmem:[%s308 + $0x50] sm:$0xff]
      %v2316 = vld [vmem:[%s308 + $0x58] sm:$0xff]
      %v2317 = vld [vmem:[%s308 + $0x60] sm:$0xff]
      %v2318 = vld [vmem:[%s308 + $0x68] sm:$0xff]
      %v2319 = vld [vmem:[%s308 + $0x70] sm:$0xff]
      %v2320 = vld [vmem:[%s308 + $0x78] sm:$0xff]
      %v2321 = vld [vmem:[%s308 + $0x80] sm:$0xff]
      %v2322 = vld [vmem:[%s308 + $0x88] sm:$0xff]
      %v2323 = vld [vmem:[%s308 + $0x90] sm:$0xff]
      %v2324 = vld [vmem:[%s308 + $0x98] sm:$0xff]
      %v2325 = vld [vmem:[%s308 + $0xa0] sm:$0xff]
      %v2326 = vld [vmem:[%s308 + $0xa8] sm:$0xff]
      %v2327 = vld [vmem:[%s308 + $0xb0] sm:$0xff]
      %v2328 = vld [vmem:[%s308 + $0xb8] sm:$0xff]
      %v2329 = vld [vmem:[%s308 + $0xc0] sm:$0xff]
      %v2330 = vld [vmem:[%s308 + $0xc8] sm:$0xff]
      %v2331 = vld [vmem:[%s308 + $0xd0] sm:$0xff]
      %v2332 = vld [vmem:[%s308 + $0xd8] sm:$0xff]
      %v2333 = vld [vmem:[%s308 + $0xe0] sm:$0xff]
      %v2334 = vld [vmem:[%s308 + $0xe8] sm:$0xff]
      %v2335 = vld [vmem:[%s308 + $0xf0] sm:$0xff]
      %v2336 = vld [vmem:[%s308 + $0xf8] sm:$0xff]
      %v2369 = vunpack.c.l.b16 %v2305
      %v2370 = vunpack.c.h.b16 %v2305
      %v2371 = vunpack.c.l.b16 %v2306
      %v2372 = vunpack.c.h.b16 %v2306
      %v2373 = vunpack.c.l.b16 %v2307
      %v2374 = vunpack.c.h.b16 %v2307
      %v2375 = vunpack.c.l.b16 %v2308
      %v2376 = vunpack.c.h.b16 %v2308
      %v2377 = vunpack.c.l.b16 %v2309
      %v2378 = vunpack.c.h.b16 %v2309
      %v2379 = vunpack.c.l.b16 %v2310
      %v2380 = vunpack.c.h.b16 %v2310
      %v2381 = vunpack.c.l.b16 %v2311
      %v2382 = vunpack.c.h.b16 %v2311
      %v2383 = vunpack.c.l.b16 %v2312
      %v2384 = vunpack.c.h.b16 %v2312
      %v2385 = vunpack.c.l.b16 %v2313
      %v2386 = vunpack.c.h.b16 %v2313
      %v2387 = vunpack.c.l.b16 %v2314
      %v2388 = vunpack.c.h.b16 %v2314
      %v2389 = vunpack.c.l.b16 %v2315
      %v2390 = vunpack.c.h.b16 %v2315
      %v2391 = vunpack.c.l.b16 %v2316
      %v2392 = vunpack.c.h.b16 %v2316
      %v2393 = vunpack.c.l.b16 %v2317
      %v2394 = vunpack.c.h.b16 %v2317
      %v2395 = vunpack.c.l.b16 %v2318
      %v2396 = vunpack.c.h.b16 %v2318
      %v2397 = vunpack.c.l.b16 %v2319
      %v2398 = vunpack.c.h.b16 %v2319
      %v2399 = vunpack.c.l.b16 %v2320
      %v2400 = vunpack.c.h.b16 %v2320
      %v2401 = vunpack.c.l.b16 %v2321
      %v2402 = vunpack.c.h.b16 %v2321
      %v2403 = vunpack.c.l.b16 %v2322
      %v2404 = vunpack.c.h.b16 %v2322
      %v2405 = vunpack.c.l.b16 %v2323
      %v2406 = vunpack.c.h.b16 %v2323
      %v2407 = vunpack.c.l.b16 %v2324
      %v2408 = vunpack.c.h.b16 %v2324
      %v2409 = vunpack.c.l.b16 %v2325
      %v2410 = vunpack.c.h.b16 %v2325
      %v2411 = vunpack.c.l.b16 %v2326
      %v2412 = vunpack.c.h.b16 %v2326
      %v2413 = vunpack.c.l.b16 %v2327
      %v2414 = vunpack.c.h.b16 %v2327
      %v2415 = vunpack.c.l.b16 %v2328
      %v2416 = vunpack.c.h.b16 %v2328
      %v2417 = vunpack.c.l.b16 %v2329
      %v2418 = vunpack.c.h.b16 %v2329
      %v2419 = vunpack.c.l.b16 %v2330
      %v2420 = vunpack.c.h.b16 %v2330
      %v2421 = vunpack.c.l.b16 %v2331
      %v2422 = vunpack.c.h.b16 %v2331
      %v2423 = vunpack.c.l.b16 %v2332
      %v2424 = vunpack.c.h.b16 %v2332
      %v2425 = vunpack.c.l.b16 %v2333
      %v2426 = vunpack.c.h.b16 %v2333
      %v2427 = vunpack.c.l.b16 %v2334
      %v2428 = vunpack.c.h.b16 %v2334
      %v2429 = vunpack.c.l.b16 %v2335
      %v2430 = vunpack.c.h.b16 %v2335
      %v2431 = vunpack.c.l.b16 %v2336
      %v2432 = vunpack.c.h.b16 %v2336
      %v2433 = vpack.c.b16 %v2373, %v2369
      %v2434 = vpack.c.b16 %v2374, %v2370
      %v2435 = vpack.c.b16 %v2375, %v2371
      %v2436 = vpack.c.b16 %v2376, %v2372
      %v2437 = vpack.c.b16 %v2381, %v2377
      %v2438 = vpack.c.b16 %v2382, %v2378
      %v2439 = vpack.c.b16 %v2383, %v2379
      %v2440 = vpack.c.b16 %v2384, %v2380
      %v2441 = vpack.c.b16 %v2389, %v2385
      %v2442 = vpack.c.b16 %v2390, %v2386
      %v2443 = vpack.c.b16 %v2391, %v2387
      %v2444 = vpack.c.b16 %v2392, %v2388
      %v2445 = vpack.c.b16 %v2397, %v2393
      %v2446 = vpack.c.b16 %v2398, %v2394
      %v2447 = vpack.c.b16 %v2399, %v2395
      %v2448 = vpack.c.b16 %v2400, %v2396
      %v2449 = vpack.c.b16 %v2405, %v2401
      %v2450 = vpack.c.b16 %v2406, %v2402
      %v2451 = vpack.c.b16 %v2407, %v2403
      %v2452 = vpack.c.b16 %v2408, %v2404
      %v2453 = vpack.c.b16 %v2413, %v2409
      %v2454 = vpack.c.b16 %v2414, %v2410
      %v2455 = vpack.c.b16 %v2415, %v2411
      %v2456 = vpack.c.b16 %v2416, %v2412
      %v2457 = vpack.c.b16 %v2421, %v2417
      %v2458 = vpack.c.b16 %v2422, %v2418
      %v2459 = vpack.c.b16 %v2423, %v2419
      %v2460 = vpack.c.b16 %v2424, %v2420
      %v2461 = vpack.c.b16 %v2429, %v2425
      %v2462 = vpack.c.b16 %v2430, %v2426
      %v2463 = vpack.c.b16 %v2431, %v2427
      %v2464 = vpack.c.b16 %v2432, %v2428
      %2497 = vmatprep.subr.bf16.mxu0 %v2462
      %2498 = vmatpush1.bf16.msra.mxu0 %v2461
      %2499 = vmatprep.subr.bf16.mxu0 %v2458
      %2500 = vmatpush1.bf16.msra.mxu0 %v2457
      %2501 = vmatprep.subr.bf16.mxu0 %v2454
      %2502 = vmatpush1.bf16.msra.mxu0 %v2453
      %2503 = vmatprep.subr.bf16.mxu0 %v2450
      %2504 = vmatpush1.bf16.msra.mxu0 %v2449
      %2505 = vmatprep.subr.bf16.mxu0 %v2446
      %2506 = vmatpush1.bf16.msra.mxu0 %v2445
      %2507 = vmatprep.subr.bf16.mxu0 %v2442
      %2508 = vmatpush1.bf16.msra.mxu0 %v2441
      %2509 = vmatprep.subr.bf16.mxu0 %v2438
      %2510 = vmatpush1.bf16.msra.mxu0 %v2437
      %2511 = vmatprep.subr.bf16.mxu0 %v2434
      %2512 = vmatpush1.bf16.msra.mxu0 %v2433
      %2513 = vmatprep.subr.bf16.mxu0 0
      %2514 = vmatpush2.bf16.msra.mxu0 0
      %2515 = vmatprep.subr.bf16.mxu0 0
      %2516 = vmatpush2.bf16.msra.mxu0 0
      %2517 = vmatprep.subr.bf16.mxu0 0
      %2518 = vmatpush2.bf16.msra.mxu0 0
      %2519 = vmatprep.subr.bf16.mxu0 0
      %2520 = vmatpush2.bf16.msra.mxu0 0
      %2521 = vmatprep.subr.bf16.mxu0 0
      %2522 = vmatpush2.bf16.msra.mxu0 0
      %2523 = vmatprep.subr.bf16.mxu0 0
      %2524 = vmatpush2.bf16.msra.mxu0 0
      %2525 = vmatprep.subr.bf16.mxu0 0
      %2526 = vmatpush2.bf16.msra.mxu0 0
      %2527 = vmatprep.subr.bf16.mxu0 0
      %2528 = vmatpush2.bf16.msra.mxu0 0
      %2529 = vmatprep.mubr.bf16.mxu0 0
      %2530 = vmatmul.mubr.bf16.gmra.mxu0 %v2304
      %v2531 = vpop.f32.mrf.mxu0
      %v2532 = vadd.f32 0.0, %v2531
      %v2533 = vpop.f32.mrf.mxu0
      %v2534 = vadd.f32 0.0, %v2533
      %v2535 = vpop.f32.mrf.mxu0
      %v2536 = vadd.f32 0.0, %v2535
      %v2537 = vpop.f32.mrf.mxu0
      %v2538 = vadd.f32 0.0, %v2537
      %2539 = vdwg.mxu0
      %2540 = vmatprep.subr.bf16.mxu0 %v2464
      %2541 = vmatpush1.bf16.msra.mxu0 %v2463
      %2542 = vmatprep.subr.bf16.mxu0 %v2460
      %2543 = vmatpush1.bf16.msra.mxu0 %v2459
      %2544 = vmatprep.subr.bf16.mxu0 %v2456
      %2545 = vmatpush1.bf16.msra.mxu0 %v2455
      %2546 = vmatprep.subr.bf16.mxu0 %v2452
      %2547 = vmatpush1.bf16.msra.mxu0 %v2451
      %2548 = vmatprep.subr.bf16.mxu0 %v2448
      %2549 = vmatpush1.bf16.msra.mxu0 %v2447
      %2550 = vmatprep.subr.bf16.mxu0 %v2444
      %2551 = vmatpush1.bf16.msra.mxu0 %v2443
      %2552 = vmatprep.subr.bf16.mxu0 %v2440
      %2553 = vmatpush1.bf16.msra.mxu0 %v2439
      %2554 = vmatprep.subr.bf16.mxu0 %v2436
      %2555 = vmatpush1.bf16.msra.mxu0 %v2435
      %2556 = vmatprep.subr.bf16.mxu0 0
      %2557 = vmatpush2.bf16.msra.mxu0 0
      %2558 = vmatprep.subr.bf16.mxu0 0
      %2559 = vmatpush2.bf16.msra.mxu0 0
      %2560 = vmatprep.subr.bf16.mxu0 0
      %2561 = vmatpush2.bf16.msra.mxu0 0
      %2562 = vmatprep.subr.bf16.mxu0 0
      %2563 = vmatpush2.bf16.msra.mxu0 0
      %2564 = vmatprep.subr.bf16.mxu0 0
      %2565 = vmatpush2.bf16.msra.mxu0 0
      %2566 = vmatprep.subr.bf16.mxu0 0
      %2567 = vmatpush2.bf16.msra.mxu0 0
      %2568 = vmatprep.subr.bf16.mxu0 0
      %2569 = vmatpush2.bf16.msra.mxu0 0
      %2570 = vmatprep.subr.bf16.mxu0 0
      %2571 = vmatpush2.bf16.msra.mxu0 0
      %2572 = vmatprep.mubr.bf16.mxu0 0
      %2573 = vmatmul.mubr.bf16.gmra.mxu0 %v2304
      %v2574 = vpop.f32.mrf.mxu0
      %v2575 = vadd.f32 0.0, %v2574
      %v2576 = vpop.f32.mrf.mxu0
      %v2577 = vadd.f32 0.0, %v2576
      %v2578 = vpop.f32.mrf.mxu0
      %v2579 = vadd.f32 0.0, %v2578
      %v2580 = vpop.f32.mrf.mxu0
      %v2581 = vadd.f32 0.0, %v2580
      %2582 = vdwg.mxu0
      %v2583 = vadd.f32 %v2294, %v2532
      %v2584 = vadd.f32 %v2295, %v2534
      %v2585 = vadd.f32 %v2296, %v2575
      %v2586 = vadd.f32 %v2297, %v2577
      %v2587 = vadd.f32 %v2298, %v2536
      %v2588 = vadd.f32 %v2299, %v2538
      %v2589 = vadd.f32 %v2300, %v2579
      %v2590 = vadd.f32 %v2301, %v2581
      %v2591 = vxor.u32 %v2583, 2147483648
      %v2592 = vxor.u32 %v2584, 2147483648
      %v2593 = vxor.u32 %v2585, 2147483648
      %v2594 = vxor.u32 %v2587, 2147483648
      %v2595 = vxor.u32 %v2588, 2147483648
      %v2596 = vxor.u32 %v2589, 2147483648
      %v2597 = vmul.f32 %v2591, 1.442695
      %v2598 = vpow.pop %v2597
      %v2599 = vmul.f32 %v2592, 1.442695
      %v2600 = vpow.pop %v2599
      %v2601 = vmul.f32 %v2593, 1.442695
      %v2602 = vpow.pop %v2601
      %v2603 = vmul.f32 %v2594, 1.442695
      %v2604 = vpow.pop %v2603
      %v2605 = vmul.f32 %v2595, 1.442695
      %v2606 = vpow.pop %v2605
      %v2607 = vmul.f32 %v2596, 1.442695
      %v2608 = vpow.pop %v2607
      %v2609 = vadd.f32 %v2598, 1.0
      %v2610 = vadd.f32 %v2600, 1.0
      %v2611 = vadd.f32 %v2602, 1.0
      %v2612 = vadd.f32 %v2604, 1.0
      %v2613 = vadd.f32 %v2606, 1.0
      %v2614 = vadd.f32 %v2608, 1.0
      %v2615 = vrcp.pop %v2609
      %v2616 = vmul.f32 1.0, %v2615
      %v2617 = vrcp.pop %v2610
      %v2618 = vmul.f32 1.0, %v2617
      %v2619 = vrcp.pop %v2611
      %v2620 = vmul.f32 1.0, %v2619
      %v2621 = vrcp.pop %v2612
      %v2622 = vmul.f32 1.0, %v2621
      %v2623 = vrcp.pop %v2613
      %v2624 = vmul.f32 1.0, %v2623
      %v2625 = vrcp.pop %v2614
      %v2626 = vmul.f32 1.0, %v2625
      %v2627 = vtanh.pop %v2586
      %v2628 = vtanh.pop %v2590
      %v2629 = vld [vmem:[#allocation3] sm:$0xff]
      %v2630 = vld [vmem:[#allocation3 + $0x8] sm:$0xff]
      %v2631 = vmul.f32 %v2618, %v2629
      %v2632 = vmul.f32 %v2624, %v2630
      %v2633 = vmul.f32 %v2616, %v2627
      %v2634 = vmul.f32 %v2622, %v2628
      %v2635 = vadd.f32 %v2631, %v2633
      %v2636 = vadd.f32 %v2632, %v2634
      %v2637 = vtanh.pop %v2635
      %v2638 = vtanh.pop %v2636
      %v2639 = vmul.f32 %v2620, %v2637
      %v2640 = vmul.f32 %v2626, %v2638
      %s2641 = sadd.s32 %s351, %s2286
      %v2642 = vstv %s2641
      %vm2643 = vcmp.gt.s32.totalorder %v344, %v2642
      %vm2644 = vcmp.gt.s32.totalorder %v345, %v2642
      %v2645 = vsel %vm2643, 1, 0
      %v2646 = vsel %vm2644, 1, 0
      %2647 = vset.pattern.permute.xlu0 0
      %2648 = vperm.xlu0 %2647, %v2645
      %v2649 = vpop.permute.xlu0 %2648
      %2650 = vset.pattern.permute.xlu0 0
      %2651 = vperm.xlu0 %2650, %v2646
      %v2652 = vpop.permute.xlu0 %2651
      %vm2653 = vcmp.eq.s32.totalorder %v2649, 1
      %vm2654 = vcmp.eq.s32.totalorder %v2652, 1
      %v2655 = vsel %vm2653, %v2639, %v2302
      %v2656 = vsel %vm2654, %v2640, %v2303
      %2657 = vst [vmem:[#allocation2] sm:$0xff] %v2655
      %2658 = vst [vmem:[#allocation2 + $0x8] sm:$0xff] %v2656
      %v2659 = vld [vmem:[#allocation3] sm:$0xff]
      %v2660 = vld [vmem:[#allocation3 + $0x8] sm:$0xff]
      %v2661 = vsel %vm2653, %v2635, %v2659
      %v2662 = vsel %vm2654, %v2636, %v2660
      %2663 = vst [vmem:[#allocation3] sm:$0xff] %v2661
      %2664 = vst [vmem:[#allocation3 + $0x8] sm:$0xff] %v2662
      %v2665 = vsel %vm2653, %v2639, 0.0
      %v2666 = vsel %vm2654, %v2640, 0.0
      %s2667 = smul.u32 %s2286, 16
      %s2668 = scalar_lea.vmem %s323, %s2667
      %2669 = vst [vmem:[%s2668] sm:$0xff] %v2665
      %2670 = vst [vmem:[%s2668 + $0x8] sm:$0xff] %v2666
      %s2671 = smul.u32 %s346, 6
      %s2672 = sadd.s32 %s2671, %s20
      %s2673 = smul.u32 %s2672, 8
      %s2674 = smul.addr %s2673, 4
      %s2675 = scalar_lea.vmem %s297, %s2674
      %v2676 = vld [vmem:[%s2675] sm:$0xff]
      %v2677 = vld [vmem:[%s2675 + $0x8] sm:$0xff]
      %v2678 = vld [vmem:[%s2675 + $0x10] sm:$0xff]
      %v2679 = vld [vmem:[%s2675 + $0x18] sm:$0xff]
      %v2680 = vunpack.c.l.bf16 %v2676
      %v2681 = vunpack.c.h.bf16 %v2676
      %v2682 = vunpack.c.l.bf16 %v2677
      %v2683 = vunpack.c.h.bf16 %v2677
      %v2684 = vunpack.c.l.bf16 %v2678
      %v2685 = vunpack.c.h.bf16 %v2678
      %v2686 = vunpack.c.l.bf16 %v2679
      %v2687 = vunpack.c.h.bf16 %v2679
      %v2688 = vld [vmem:[#allocation2] sm:$0xff]
      %v2689 = vld [vmem:[#allocation2 + $0x8] sm:$0xff]
      %v2690 = vpack.c.bf16 %v2689, %v2688
      %v2691 = vld [vmem:[%s308] sm:$0xff]
      %v2692 = vld [vmem:[%s308 + $0x8] sm:$0xff]
      %v2693 = vld [vmem:[%s308 + $0x10] sm:$0xff]
      %v2694 = vld [vmem:[%s308 + $0x18] sm:$0xff]
      %v2695 = vld [vmem:[%s308 + $0x20] sm:$0xff]
      %v2696 = vld [vmem:[%s308 + $0x28] sm:$0xff]
      %v2697 = vld [vmem:[%s308 + $0x30] sm:$0xff]
      %v2698 = vld [vmem:[%s308 + $0x38] sm:$0xff]
      %v2699 = vld [vmem:[%s308 + $0x40] sm:$0xff]
      %v2700 = vld [vmem:[%s308 + $0x48] sm:$0xff]
      %v2701 = vld [vmem:[%s308 + $0x50] sm:$0xff]
      %v2702 = vld [vmem:[%s308 + $0x58] sm:$0xff]
      %v2703 = vld [vmem:[%s308 + $0x60] sm:$0xff]
      %v2704 = vld [vmem:[%s308 + $0x68] sm:$0xff]
      %v2705 = vld [vmem:[%s308 + $0x70] sm:$0xff]
      %v2706 = vld [vmem:[%s308 + $0x78] sm:$0xff]
      %v2707 = vld [vmem:[%s308 + $0x80] sm:$0xff]
      %v2708 = vld [vmem:[%s308 + $0x88] sm:$0xff]
      %v2709 = vld [vmem:[%s308 + $0x90] sm:$0xff]
      %v2710 = vld [vmem:[%s308 + $0x98] sm:$0xff]
      %v2711 = vld [vmem:[%s308 + $0xa0] sm:$0xff]
      %v2712 = vld [vmem:[%s308 + $0xa8] sm:$0xff]
      %v2713 = vld [vmem:[%s308 + $0xb0] sm:$0xff]
      %v2714 = vld [vmem:[%s308 + $0xb8] sm:$0xff]
      %v2715 = vld [vmem:[%s308 + $0xc0] sm:$0xff]
      %v2716 = vld [vmem:[%s308 + $0xc8] sm:$0xff]
      %v2717 = vld [vmem:[%s308 + $0xd0] sm:$0xff]
      %v2718 = vld [vmem:[%s308 + $0xd8] sm:$0xff]
      %v2719 = vld [vmem:[%s308 + $0xe0] sm:$0xff]
      %v2720 = vld [vmem:[%s308 + $0xe8] sm:$0xff]
      %v2721 = vld [vmem:[%s308 + $0xf0] sm:$0xff]
      %v2722 = vld [vmem:[%s308 + $0xf8] sm:$0xff]
      %v2755 = vunpack.c.l.b16 %v2691
      %v2756 = vunpack.c.h.b16 %v2691
      %v2757 = vunpack.c.l.b16 %v2692
      %v2758 = vunpack.c.h.b16 %v2692
      %v2759 = vunpack.c.l.b16 %v2693
      %v2760 = vunpack.c.h.b16 %v2693
      %v2761 = vunpack.c.l.b16 %v2694
      %v2762 = vunpack.c.h.b16 %v2694
      %v2763 = vunpack.c.l.b16 %v2695
      %v2764 = vunpack.c.h.b16 %v2695
      %v2765 = vunpack.c.l.b16 %v2696
      %v2766 = vunpack.c.h.b16 %v2696
      %v2767 = vunpack.c.l.b16 %v2697
      %v2768 = vunpack.c.h.b16 %v2697
      %v2769 = vunpack.c.l.b16 %v2698
      %v2770 = vunpack.c.h.b16 %v2698
      %v2771 = vunpack.c.l.b16 %v2699
      %v2772 = vunpack.c.h.b16 %v2699
      %v2773 = vunpack.c.l.b16 %v2700
      %v2774 = vunpack.c.h.b16 %v2700
      %v2775 = vunpack.c.l.b16 %v2701
      %v2776 = vunpack.c.h.b16 %v2701
      %v2777 = vunpack.c.l.b16 %v2702
      %v2778 = vunpack.c.h.b16 %v2702
      %v2779 = vunpack.c.l.b16 %v2703
      %v2780 = vunpack.c.h.b16 %v2703
      %v2781 = vunpack.c.l.b16 %v2704
      %v2782 = vunpack.c.h.b16 %v2704
      %v2783 = vunpack.c.l.b16 %v2705
      %v2784 = vunpack.c.h.b16 %v2705
      %v2785 = vunpack.c.l.b16 %v2706
      %v2786 = vunpack.c.h.b16 %v2706
      %v2787 = vunpack.c.l.b16 %v2707
      %v2788 = vunpack.c.h.b16 %v2707
      %v2789 = vunpack.c.l.b16 %v2708
      %v2790 = vunpack.c.h.b16 %v2708
      %v2791 = vunpack.c.l.b16 %v2709
      %v2792 = vunpack.c.h.b16 %v2709
      %v2793 = vunpack.c.l.b16 %v2710
      %v2794 = vunpack.c.h.b16 %v2710
      %v2795 = vunpack.c.l.b16 %v2711
      %v2796 = vunpack.c.h.b16 %v2711
      %v2797 = vunpack.c.l.b16 %v2712
      %v2798 = vunpack.c.h.b16 %v2712
      %v2799 = vunpack.c.l.b16 %v2713
      %v2800 = vunpack.c.h.b16 %v2713
      %v2801 = vunpack.c.l.b16 %v2714
      %v2802 = vunpack.c.h.b16 %v2714
      %v2803 = vunpack.c.l.b16 %v2715
      %v2804 = vunpack.c.h.b16 %v2715
      %v2805 = vunpack.c.l.b16 %v2716
      %v2806 = vunpack.c.h.b16 %v2716
      %v2807 = vunpack.c.l.b16 %v2717
      %v2808 = vunpack.c.h.b16 %v2717
      %v2809 = vunpack.c.l.b16 %v2718
      %v2810 = vunpack.c.h.b16 %v2718
      %v2811 = vunpack.c.l.b16 %v2719
      %v2812 = vunpack.c.h.b16 %v2719
      %v2813 = vunpack.c.l.b16 %v2720
      %v2814 = vunpack.c.h.b16 %v2720
      %v2815 = vunpack.c.l.b16 %v2721
      %v2816 = vunpack.c.h.b16 %v2721
      %v2817 = vunpack.c.l.b16 %v2722
      %v2818 = vunpack.c.h.b16 %v2722
      %v2819 = vpack.c.b16 %v2759, %v2755
      %v2820 = vpack.c.b16 %v2760, %v2756
      %v2821 = vpack.c.b16 %v2761, %v2757
      %v2822 = vpack.c.b16 %v2762, %v2758
      %v2823 = vpack.c.b16 %v2767, %v2763
      %v2824 = vpack.c.b16 %v2768, %v2764
      %v2825 = vpack.c.b16 %v2769, %v2765
      %v2826 = vpack.c.b16 %v2770, %v2766
      %v2827 = vpack.c.b16 %v2775, %v2771
      %v2828 = vpack.c.b16 %v2776, %v2772
      %v2829 = vpack.c.b16 %v2777, %v2773
      %v2830 = vpack.c.b16 %v2778, %v2774
      %v2831 = vpack.c.b16 %v2783, %v2779
      %v2832 = vpack.c.b16 %v2784, %v2780
      %v2833 = vpack.c.b16 %v2785, %v2781
      %v2834 = vpack.c.b16 %v2786, %v2782
      %v2835 = vpack.c.b16 %v2791, %v2787
      %v2836 = vpack.c.b16 %v2792, %v2788
      %v2837 = vpack.c.b16 %v2793, %v2789
      %v2838 = vpack.c.b16 %v2794, %v2790
      %v2839 = vpack.c.b16 %v2799, %v2795
      %v2840 = vpack.c.b16 %v2800, %v2796
      %v2841 = vpack.c.b16 %v2801, %v2797
      %v2842 = vpack.c.b16 %v2802, %v2798
      %v2843 = vpack.c.b16 %v2807, %v2803
      %v2844 = vpack.c.b16 %v2808, %v2804
      %v2845 = vpack.c.b16 %v2809, %v2805
      %v2846 = vpack.c.b16 %v2810, %v2806
      %v2847 = vpack.c.b16 %v2815, %v2811
      %v2848 = vpack.c.b16 %v2816, %v2812
      %v2849 = vpack.c.b16 %v2817, %v2813
      %v2850 = vpack.c.b16 %v2818, %v2814
      %2883 = vmatprep.subr.bf16.mxu0 %v2848
      %2884 = vmatpush1.bf16.msra.mxu0 %v2847
      %2885 = vmatprep.subr.bf16.mxu0 %v2844
      %2886 = vmatpush1.bf16.msra.mxu0 %v2843
      %2887 = vmatprep.subr.bf16.mxu0 %v2840
      %2888 = vmatpush1.bf16.msra.mxu0 %v2839
      %2889 = vmatprep.subr.bf16.mxu0 %v2836
      %2890 = vmatpush1.bf16.msra.mxu0 %v2835
      %2891 = vmatprep.subr.bf16.mxu0 %v2832
      %2892 = vmatpush1.bf16.msra.mxu0 %v2831
      %2893 = vmatprep.subr.bf16.mxu0 %v2828
      %2894 = vmatpush1.bf16.msra.mxu0 %v2827
      %2895 = vmatprep.subr.bf16.mxu0 %v2824
      %2896 = vmatpush1.bf16.msra.mxu0 %v2823
      %2897 = vmatprep.subr.bf16.mxu0 %v2820
      %2898 = vmatpush1.bf16.msra.mxu0 %v2819
      %2899 = vmatprep.subr.bf16.mxu0 0
      %2900 = vmatpush2.bf16.msra.mxu0 0
      %2901 = vmatprep.subr.bf16.mxu0 0
      %2902 = vmatpush2.bf16.msra.mxu0 0
      %2903 = vmatprep.subr.bf16.mxu0 0
      %2904 = vmatpush2.bf16.msra.mxu0 0
      %2905 = vmatprep.subr.bf16.mxu0 0
      %2906 = vmatpush2.bf16.msra.mxu0 0
      %2907 = vmatprep.subr.bf16.mxu0 0
      %2908 = vmatpush2.bf16.msra.mxu0 0
      %2909 = vmatprep.subr.bf16.mxu0 0
      %2910 = vmatpush2.bf16.msra.mxu0 0
      %2911 = vmatprep.subr.bf16.mxu0 0
      %2912 = vmatpush2.bf16.msra.mxu0 0
      %2913 = vmatprep.subr.bf16.mxu0 0
      %2914 = vmatpush2.bf16.msra.mxu0 0
      %2915 = vmatprep.mubr.bf16.mxu0 0
      %2916 = vmatmul.mubr.bf16.gmra.mxu0 %v2690
      %v2917 = vpop.f32.mrf.mxu0
      %v2918 = vadd.f32 0.0, %v2917
      %v2919 = vpop.f32.mrf.mxu0
      %v2920 = vadd.f32 0.0, %v2919
      %v2921 = vpop.f32.mrf.mxu0
      %v2922 = vadd.f32 0.0, %v2921
      %v2923 = vpop.f32.mrf.mxu0
      %v2924 = vadd.f32 0.0, %v2923
      %2925 = vdwg.mxu0
      %2926 = vmatprep.subr.bf16.mxu0 %v2850
      %2927 = vmatpush1.bf16.msra.mxu0 %v2849
      %2928 = vmatprep.subr.bf16.mxu0 %v2846
      %2929 = vmatpush1.bf16.msra.mxu0 %v2845
      %2930 = vmatprep.subr.bf16.mxu0 %v2842
      %2931 = vmatpush1.bf16.msra.mxu0 %v2841
      %2932 = vmatprep.subr.bf16.mxu0 %v2838
      %2933 = vmatpush1.bf16.msra.mxu0 %v2837
      %2934 = vmatprep.subr.bf16.mxu0 %v2834
      %2935 = vmatpush1.bf16.msra.mxu0 %v2833
      %2936 = vmatprep.subr.bf16.mxu0 %v2830
      %2937 = vmatpush1.bf16.msra.mxu0 %v2829
      %2938 = vmatprep.subr.bf16.mxu0 %v2826
      %2939 = vmatpush1.bf16.msra.mxu0 %v2825
      %2940 = vmatprep.subr.bf16.mxu0 %v2822
      %2941 = vmatpush1.bf16.msra.mxu0 %v2821
      %2942 = vmatprep.subr.bf16.mxu0 0
      %2943 = vmatpush2.bf16.msra.mxu0 0
      %2944 = vmatprep.subr.bf16.mxu0 0
      %2945 = vmatpush2.bf16.msra.mxu0 0
      %2946 = vmatprep.subr.bf16.mxu0 0
      %2947 = vmatpush2.bf16.msra.mxu0 0
      %2948 = vmatprep.subr.bf16.mxu0 0
      %2949 = vmatpush2.bf16.msra.mxu0 0
      %2950 = vmatprep.subr.bf16.mxu0 0
      %2951 = vmatpush2.bf16.msra.mxu0 0
      %2952 = vmatprep.subr.bf16.mxu0 0
      %2953 = vmatpush2.bf16.msra.mxu0 0
      %2954 = vmatprep.subr.bf16.mxu0 0
      %2955 = vmatpush2.bf16.msra.mxu0 0
      %2956 = vmatprep.subr.bf16.mxu0 0
      %2957 = vmatpush2.bf16.msra.mxu0 0
      %2958 = vmatprep.mubr.bf16.mxu0 0
      %2959 = vmatmul.mubr.bf16.gmra.mxu0 %v2690
      %v2960 = vpop.f32.mrf.mxu0
      %v2961 = vadd.f32 0.0, %v2960
      %v2962 = vpop.f32.mrf.mxu0
      %v2963 = vadd.f32 0.0, %v2962
      %v2964 = vpop.f32.mrf.mxu0
      %v2965 = vadd.f32 0.0, %v2964
      %v2966 = vpop.f32.mrf.mxu0
      %v2967 = vadd.f32 0.0, %v2966
      %2968 = vdwg.mxu0
      %v2969 = vadd.f32 %v2680, %v2918
      %v2970 = vadd.f32 %v2681, %v2920
      %v2971 = vadd.f32 %v2682, %v2961
      %v2972 = vadd.f32 %v2683, %v2963
      %v2973 = vadd.f32 %v2684, %v2922
      %v2974 = vadd.f32 %v2685, %v2924
      %v2975 = vadd.f32 %v2686, %v2965
      %v2976 = vadd.f32 %v2687, %v2967
      %v2977 = vxor.u32 %v2969, 2147483648
      %v2978 = vxor.u32 %v2970, 2147483648
      %v2979 = vxor.u32 %v2971, 2147483648
      %v2980 = vxor.u32 %v2973, 2147483648
      %v2981 = vxor.u32 %v2974, 2147483648
      %v2982 = vxor.u32 %v2975, 2147483648
      %v2983 = vmul.f32 %v2977, 1.442695
      %v2984 = vpow.pop %v2983
      %v2985 = vmul.f32 %v2978, 1.442695
      %v2986 = vpow.pop %v2985
      %v2987 = vmul.f32 %v2979, 1.442695
      %v2988 = vpow.pop %v2987
      %v2989 = vmul.f32 %v2980, 1.442695
      %v2990 = vpow.pop %v2989
      %v2991 = vmul.f32 %v2981, 1.442695
      %v2992 = vpow.pop %v2991
      %v2993 = vmul.f32 %v2982, 1.442695
      %v2994 = vpow.pop %v2993
      %v2995 = vadd.f32 %v2984, 1.0
      %v2996 = vadd.f32 %v2986, 1.0
      %v2997 = vadd.f32 %v2988, 1.0
      %v2998 = vadd.f32 %v2990, 1.0
      %v2999 = vadd.f32 %v2992, 1.0
      %v3000 = vadd.f32 %v2994, 1.0
      %v3001 = vrcp.pop %v2995
      %v3002 = vmul.f32 1.0, %v3001
      %v3003 = vrcp.pop %v2996
      %v3004 = vmul.f32 1.0, %v3003
      %v3005 = vrcp.pop %v2997
      %v3006 = vmul.f32 1.0, %v3005
      %v3007 = vrcp.pop %v2998
      %v3008 = vmul.f32 1.0, %v3007
      %v3009 = vrcp.pop %v2999
      %v3010 = vmul.f32 1.0, %v3009
      %v3011 = vrcp.pop %v3000
      %v3012 = vmul.f32 1.0, %v3011
      %v3013 = vtanh.pop %v2972
      %v3014 = vtanh.pop %v2976
      %v3015 = vld [vmem:[#allocation3] sm:$0xff]
      %v3016 = vld [vmem:[#allocation3 + $0x8] sm:$0xff]
      %v3017 = vmul.f32 %v3004, %v3015
      %v3018 = vmul.f32 %v3010, %v3016
      %v3019 = vmul.f32 %v3002, %v3013
      %v3020 = vmul.f32 %v3008, %v3014
      %v3021 = vadd.f32 %v3017, %v3019
      %v3022 = vadd.f32 %v3018, %v3020
      %v3023 = vtanh.pop %v3021
      %v3024 = vtanh.pop %v3022
      %v3025 = vmul.f32 %v3006, %v3023
      %v3026 = vmul.f32 %v3012, %v3024
      %s3027 = sadd.s32 %s351, %s2672
      %v3028 = vstv %s3027
      %vm3029 = vcmp.gt.s32.totalorder %v344, %v3028
      %vm3030 = vcmp.gt.s32.totalorder %v345, %v3028
      %v3031 = vsel %vm3029, 1, 0
      %v3032 = vsel %vm3030, 1, 0
      %3033 = vset.pattern.permute.xlu0 0
      %3034 = vperm.xlu0 %3033, %v3031
      %v3035 = vpop.permute.xlu0 %3034
      %3036 = vset.pattern.permute.xlu0 0
      %3037 = vperm.xlu0 %3036, %v3032
      %v3038 = vpop.permute.xlu0 %3037
      %vm3039 = vcmp.eq.s32.totalorder %v3035, 1
      %vm3040 = vcmp.eq.s32.totalorder %v3038, 1
      %v3041 = vsel %vm3039, %v3025, %v2688
      %v3042 = vsel %vm3040, %v3026, %v2689
      %3043 = vst [vmem:[#allocation2] sm:$0xff] %v3041
      %3044 = vst [vmem:[#allocation2 + $0x8] sm:$0xff] %v3042
      %v3045 = vld [vmem:[#allocation3] sm:$0xff]
      %v3046 = vld [vmem:[#allocation3 + $0x8] sm:$0xff]
      %v3047 = vsel %vm3039, %v3021, %v3045
      %v3048 = vsel %vm3040, %v3022, %v3046
      %3049 = vst [vmem:[#allocation3] sm:$0xff] %v3047
      %3050 = vst [vmem:[#allocation3 + $0x8] sm:$0xff] %v3048
      %v3051 = vsel %vm3039, %v3025, 0.0
      %v3052 = vsel %vm3040, %v3026, 0.0
      %s3053 = smul.u32 %s2672, 16
      %s3054 = scalar_lea.vmem %s323, %s3053
      %3055 = vst [vmem:[%s3054] sm:$0xff] %v3051
      %3056 = vst [vmem:[%s3054 + $0x8] sm:$0xff] %v3052
      %s3057 = smul.u32 %s346, 7
      %s3058 = smul.u32 %s3057, 8
      %s3059 = smul.addr %s3058, 4
      %s3060 = scalar_lea.vmem %s297, %s3059
      %v3061 = vld [vmem:[%s3060] sm:$0xff]
      %v3062 = vld [vmem:[%s3060 + $0x8] sm:$0xff]
      %v3063 = vld [vmem:[%s3060 + $0x10] sm:$0xff]
      %v3064 = vld [vmem:[%s3060 + $0x18] sm:$0xff]
      %v3065 = vunpack.c.l.bf16 %v3061
      %v3066 = vunpack.c.h.bf16 %v3061
      %v3067 = vunpack.c.l.bf16 %v3062
      %v3068 = vunpack.c.h.bf16 %v3062
      %v3069 = vunpack.c.l.bf16 %v3063
      %v3070 = vunpack.c.h.bf16 %v3063
      %v3071 = vunpack.c.l.bf16 %v3064
      %v3072 = vunpack.c.h.bf16 %v3064
      %v3073 = vld [vmem:[#allocation2] sm:$0xff]
      %v3074 = vld [vmem:[#allocation2 + $0x8] sm:$0xff]
      %v3075 = vpack.c.bf16 %v3074, %v3073
      %v3076 = vld [vmem:[%s308] sm:$0xff]
      %v3077 = vld [vmem:[%s308 + $0x8] sm:$0xff]
      %v3078 = vld [vmem:[%s308 + $0x10] sm:$0xff]
      %v3079 = vld [vmem:[%s308 + $0x18] sm:$0xff]
      %v3080 = vld [vmem:[%s308 + $0x20] sm:$0xff]
      %v3081 = vld [vmem:[%s308 + $0x28] sm:$0xff]
      %v3082 = vld [vmem:[%s308 + $0x30] sm:$0xff]
      %v3083 = vld [vmem:[%s308 + $0x38] sm:$0xff]
      %v3084 = vld [vmem:[%s308 + $0x40] sm:$0xff]
      %v3085 = vld [vmem:[%s308 + $0x48] sm:$0xff]
      %v3086 = vld [vmem:[%s308 + $0x50] sm:$0xff]
      %v3087 = vld [vmem:[%s308 + $0x58] sm:$0xff]
      %v3088 = vld [vmem:[%s308 + $0x60] sm:$0xff]
      %v3089 = vld [vmem:[%s308 + $0x68] sm:$0xff]
      %v3090 = vld [vmem:[%s308 + $0x70] sm:$0xff]
      %v3091 = vld [vmem:[%s308 + $0x78] sm:$0xff]
      %v3092 = vld [vmem:[%s308 + $0x80] sm:$0xff]
      %v3093 = vld [vmem:[%s308 + $0x88] sm:$0xff]
      %v3094 = vld [vmem:[%s308 + $0x90] sm:$0xff]
      %v3095 = vld [vmem:[%s308 + $0x98] sm:$0xff]
      %v3096 = vld [vmem:[%s308 + $0xa0] sm:$0xff]
      %v3097 = vld [vmem:[%s308 + $0xa8] sm:$0xff]
      %v3098 = vld [vmem:[%s308 + $0xb0] sm:$0xff]
      %v3099 = vld [vmem:[%s308 + $0xb8] sm:$0xff]
      %v3100 = vld [vmem:[%s308 + $0xc0] sm:$0xff]
      %v3101 = vld [vmem:[%s308 + $0xc8] sm:$0xff]
      %v3102 = vld [vmem:[%s308 + $0xd0] sm:$0xff]
      %v3103 = vld [vmem:[%s308 + $0xd8] sm:$0xff]
      %v3104 = vld [vmem:[%s308 + $0xe0] sm:$0xff]
      %v3105 = vld [vmem:[%s308 + $0xe8] sm:$0xff]
      %v3106 = vld [vmem:[%s308 + $0xf0] sm:$0xff]
      %v3107 = vld [vmem:[%s308 + $0xf8] sm:$0xff]
      %v3140 = vunpack.c.l.b16 %v3076
      %v3141 = vunpack.c.h.b16 %v3076
      %v3142 = vunpack.c.l.b16 %v3077
      %v3143 = vunpack.c.h.b16 %v3077
      %v3144 = vunpack.c.l.b16 %v3078
      %v3145 = vunpack.c.h.b16 %v3078
      %v3146 = vunpack.c.l.b16 %v3079
      %v3147 = vunpack.c.h.b16 %v3079
      %v3148 = vunpack.c.l.b16 %v3080
      %v3149 = vunpack.c.h.b16 %v3080
      %v3150 = vunpack.c.l.b16 %v3081
      %v3151 = vunpack.c.h.b16 %v3081
      %v3152 = vunpack.c.l.b16 %v3082
      %v3153 = vunpack.c.h.b16 %v3082
      %v3154 = vunpack.c.l.b16 %v3083
      %v3155 = vunpack.c.h.b16 %v3083
      %v3156 = vunpack.c.l.b16 %v3084
      %v3157 = vunpack.c.h.b16 %v3084
      %v3158 = vunpack.c.l.b16 %v3085
      %v3159 = vunpack.c.h.b16 %v3085
      %v3160 = vunpack.c.l.b16 %v3086
      %v3161 = vunpack.c.h.b16 %v3086
      %v3162 = vunpack.c.l.b16 %v3087
      %v3163 = vunpack.c.h.b16 %v3087
      %v3164 = vunpack.c.l.b16 %v3088
      %v3165 = vunpack.c.h.b16 %v3088
      %v3166 = vunpack.c.l.b16 %v3089
      %v3167 = vunpack.c.h.b16 %v3089
      %v3168 = vunpack.c.l.b16 %v3090
      %v3169 = vunpack.c.h.b16 %v3090
      %v3170 = vunpack.c.l.b16 %v3091
      %v3171 = vunpack.c.h.b16 %v3091
      %v3172 = vunpack.c.l.b16 %v3092
      %v3173 = vunpack.c.h.b16 %v3092
      %v3174 = vunpack.c.l.b16 %v3093
      %v3175 = vunpack.c.h.b16 %v3093
      %v3176 = vunpack.c.l.b16 %v3094
      %v3177 = vunpack.c.h.b16 %v3094
      %v3178 = vunpack.c.l.b16 %v3095
      %v3179 = vunpack.c.h.b16 %v3095
      %v3180 = vunpack.c.l.b16 %v3096
      %v3181 = vunpack.c.h.b16 %v3096
      %v3182 = vunpack.c.l.b16 %v3097
      %v3183 = vunpack.c.h.b16 %v3097
      %v3184 = vunpack.c.l.b16 %v3098
      %v3185 = vunpack.c.h.b16 %v3098
      %v3186 = vunpack.c.l.b16 %v3099
      %v3187 = vunpack.c.h.b16 %v3099
      %v3188 = vunpack.c.l.b16 %v3100
      %v3189 = vunpack.c.h.b16 %v3100
      %v3190 = vunpack.c.l.b16 %v3101
      %v3191 = vunpack.c.h.b16 %v3101
      %v3192 = vunpack.c.l.b16 %v3102
      %v3193 = vunpack.c.h.b16 %v3102
      %v3194 = vunpack.c.l.b16 %v3103
      %v3195 = vunpack.c.h.b16 %v3103
      %v3196 = vunpack.c.l.b16 %v3104
      %v3197 = vunpack.c.h.b16 %v3104
      %v3198 = vunpack.c.l.b16 %v3105
      %v3199 = vunpack.c.h.b16 %v3105
      %v3200 = vunpack.c.l.b16 %v3106
      %v3201 = vunpack.c.h.b16 %v3106
      %v3202 = vunpack.c.l.b16 %v3107
      %v3203 = vunpack.c.h.b16 %v3107
      %v3204 = vpack.c.b16 %v3144, %v3140
      %v3205 = vpack.c.b16 %v3145, %v3141
      %v3206 = vpack.c.b16 %v3146, %v3142
      %v3207 = vpack.c.b16 %v3147, %v3143
      %v3208 = vpack.c.b16 %v3152, %v3148
      %v3209 = vpack.c.b16 %v3153, %v3149
      %v3210 = vpack.c.b16 %v3154, %v3150
      %v3211 = vpack.c.b16 %v3155, %v3151
      %v3212 = vpack.c.b16 %v3160, %v3156
      %v3213 = vpack.c.b16 %v3161, %v3157
      %v3214 = vpack.c.b16 %v3162, %v3158
      %v3215 = vpack.c.b16 %v3163, %v3159
      %v3216 = vpack.c.b16 %v3168, %v3164
      %v3217 = vpack.c.b16 %v3169, %v3165
      %v3218 = vpack.c.b16 %v3170, %v3166
      %v3219 = vpack.c.b16 %v3171, %v3167
      %v3220 = vpack.c.b16 %v3176, %v3172
      %v3221 = vpack.c.b16 %v3177, %v3173
      %v3222 = vpack.c.b16 %v3178, %v3174
      %v3223 = vpack.c.b16 %v3179, %v3175
      %v3224 = vpack.c.b16 %v3184, %v3180
      %v3225 = vpack.c.b16 %v3185, %v3181
      %v3226 = vpack.c.b16 %v3186, %v3182
      %v3227 = vpack.c.b16 %v3187, %v3183
      %v3228 = vpack.c.b16 %v3192, %v3188
      %v3229 = vpack.c.b16 %v3193, %v3189
      %v3230 = vpack.c.b16 %v3194, %v3190
      %v3231 = vpack.c.b16 %v3195, %v3191
      %v3232 = vpack.c.b16 %v3200, %v3196
      %v3233 = vpack.c.b16 %v3201, %v3197
      %v3234 = vpack.c.b16 %v3202, %v3198
      %v3235 = vpack.c.b16 %v3203, %v3199
      %3268 = vmatprep.subr.bf16.mxu0 %v3233
      %3269 = vmatpush1.bf16.msra.mxu0 %v3232
      %3270 = vmatprep.subr.bf16.mxu0 %v3229
      %3271 = vmatpush1.bf16.msra.mxu0 %v3228
      %3272 = vmatprep.subr.bf16.mxu0 %v3225
      %3273 = vmatpush1.bf16.msra.mxu0 %v3224
      %3274 = vmatprep.subr.bf16.mxu0 %v3221
      %3275 = vmatpush1.bf16.msra.mxu0 %v3220
      %3276 = vmatprep.subr.bf16.mxu0 %v3217
      %3277 = vmatpush1.bf16.msra.mxu0 %v3216
      %3278 = vmatprep.subr.bf16.mxu0 %v3213
      %3279 = vmatpush1.bf16.msra.mxu0 %v3212
      %3280 = vmatprep.subr.bf16.mxu0 %v3209
      %3281 = vmatpush1.bf16.msra.mxu0 %v3208
      %3282 = vmatprep.subr.bf16.mxu0 %v3205
      %3283 = vmatpush1.bf16.msra.mxu0 %v3204
      %3284 = vmatprep.subr.bf16.mxu0 0
      %3285 = vmatpush2.bf16.msra.mxu0 0
      %3286 = vmatprep.subr.bf16.mxu0 0
      %3287 = vmatpush2.bf16.msra.mxu0 0
      %3288 = vmatprep.subr.bf16.mxu0 0
      %3289 = vmatpush2.bf16.msra.mxu0 0
      %3290 = vmatprep.subr.bf16.mxu0 0
      %3291 = vmatpush2.bf16.msra.mxu0 0
      %3292 = vmatprep.subr.bf16.mxu0 0
      %3293 = vmatpush2.bf16.msra.mxu0 0
      %3294 = vmatprep.subr.bf16.mxu0 0
      %3295 = vmatpush2.bf16.msra.mxu0 0
      %3296 = vmatprep.subr.bf16.mxu0 0
      %3297 = vmatpush2.bf16.msra.mxu0 0
      %3298 = vmatprep.subr.bf16.mxu0 0
      %3299 = vmatpush2.bf16.msra.mxu0 0
      %3300 = vmatprep.mubr.bf16.mxu0 0
      %3301 = vmatmul.mubr.bf16.gmra.mxu0 %v3075
      %v3302 = vpop.f32.mrf.mxu0
      %v3303 = vadd.f32 0.0, %v3302
      %v3304 = vpop.f32.mrf.mxu0
      %v3305 = vadd.f32 0.0, %v3304
      %v3306 = vpop.f32.mrf.mxu0
      %v3307 = vadd.f32 0.0, %v3306
      %v3308 = vpop.f32.mrf.mxu0
      %v3309 = vadd.f32 0.0, %v3308
      %3310 = vdwg.mxu0
      %3311 = vmatprep.subr.bf16.mxu0 %v3235
      %3312 = vmatpush1.bf16.msra.mxu0 %v3234
      %3313 = vmatprep.subr.bf16.mxu0 %v3231
      %3314 = vmatpush1.bf16.msra.mxu0 %v3230
      %3315 = vmatprep.subr.bf16.mxu0 %v3227
      %3316 = vmatpush1.bf16.msra.mxu0 %v3226
      %3317 = vmatprep.subr.bf16.mxu0 %v3223
      %3318 = vmatpush1.bf16.msra.mxu0 %v3222
      %3319 = vmatprep.subr.bf16.mxu0 %v3219
      %3320 = vmatpush1.bf16.msra.mxu0 %v3218
      %3321 = vmatprep.subr.bf16.mxu0 %v3215
      %3322 = vmatpush1.bf16.msra.mxu0 %v3214
      %3323 = vmatprep.subr.bf16.mxu0 %v3211
      %3324 = vmatpush1.bf16.msra.mxu0 %v3210
      %3325 = vmatprep.subr.bf16.mxu0 %v3207
      %3326 = vmatpush1.bf16.msra.mxu0 %v3206
      %3327 = vmatprep.subr.bf16.mxu0 0
      %3328 = vmatpush2.bf16.msra.mxu0 0
      %3329 = vmatprep.subr.bf16.mxu0 0
      %3330 = vmatpush2.bf16.msra.mxu0 0
      %3331 = vmatprep.subr.bf16.mxu0 0
      %3332 = vmatpush2.bf16.msra.mxu0 0
      %3333 = vmatprep.subr.bf16.mxu0 0
      %3334 = vmatpush2.bf16.msra.mxu0 0
      %3335 = vmatprep.subr.bf16.mxu0 0
      %3336 = vmatpush2.bf16.msra.mxu0 0
      %3337 = vmatprep.subr.bf16.mxu0 0
      %3338 = vmatpush2.bf16.msra.mxu0 0
      %3339 = vmatprep.subr.bf16.mxu0 0
      %3340 = vmatpush2.bf16.msra.mxu0 0
      %3341 = vmatprep.subr.bf16.mxu0 0
      %3342 = vmatpush2.bf16.msra.mxu0 0
      %3343 = vmatprep.mubr.bf16.mxu0 0
      %3344 = vmatmul.mubr.bf16.gmra.mxu0 %v3075
      %v3345 = vpop.f32.mrf.mxu0
      %v3346 = vadd.f32 0.0, %v3345
      %v3347 = vpop.f32.mrf.mxu0
      %v3348 = vadd.f32 0.0, %v3347
      %v3349 = vpop.f32.mrf.mxu0
      %v3350 = vadd.f32 0.0, %v3349
      %v3351 = vpop.f32.mrf.mxu0
      %v3352 = vadd.f32 0.0, %v3351
      %3353 = vdwg.mxu0
      %v3354 = vadd.f32 %v3065, %v3303
      %v3355 = vadd.f32 %v3066, %v3305
      %v3356 = vadd.f32 %v3067, %v3346
      %v3357 = vadd.f32 %v3068, %v3348
      %v3358 = vadd.f32 %v3069, %v3307
      %v3359 = vadd.f32 %v3070, %v3309
      %v3360 = vadd.f32 %v3071, %v3350
      %v3361 = vadd.f32 %v3072, %v3352
      %v3362 = vxor.u32 %v3354, 2147483648
      %v3363 = vxor.u32 %v3355, 2147483648
      %v3364 = vxor.u32 %v3356, 2147483648
      %v3365 = vxor.u32 %v3358, 2147483648
      %v3366 = vxor.u32 %v3359, 2147483648
      %v3367 = vxor.u32 %v3360, 2147483648
      %v3368 = vmul.f32 %v3362, 1.442695
      %v3369 = vpow.pop %v3368
      %v3370 = vmul.f32 %v3363, 1.442695
      %v3371 = vpow.pop %v3370
      %v3372 = vmul.f32 %v3364, 1.442695
      %v3373 = vpow.pop %v3372
      %v3374 = vmul.f32 %v3365, 1.442695
      %v3375 = vpow.pop %v3374
      %v3376 = vmul.f32 %v3366, 1.442695
      %v3377 = vpow.pop %v3376
      %v3378 = vmul.f32 %v3367, 1.442695
      %v3379 = vpow.pop %v3378
      %v3380 = vadd.f32 %v3369, 1.0
      %v3381 = vadd.f32 %v3371, 1.0
      %v3382 = vadd.f32 %v3373, 1.0
      %v3383 = vadd.f32 %v3375, 1.0
      %v3384 = vadd.f32 %v3377, 1.0
      %v3385 = vadd.f32 %v3379, 1.0
      %v3386 = vrcp.pop %v3380
      %v3387 = vmul.f32 1.0, %v3386
      %v3388 = vrcp.pop %v3381
      %v3389 = vmul.f32 1.0, %v3388
      %v3390 = vrcp.pop %v3382
      %v3391 = vmul.f32 1.0, %v3390
      %v3392 = vrcp.pop %v3383
      %v3393 = vmul.f32 1.0, %v3392
      %v3394 = vrcp.pop %v3384
      %v3395 = vmul.f32 1.0, %v3394
      %v3396 = vrcp.pop %v3385
      %v3397 = vmul.f32 1.0, %v3396
      %v3398 = vtanh.pop %v3357
      %v3399 = vtanh.pop %v3361
      %v3400 = vld [vmem:[#allocation3] sm:$0xff]
      %v3401 = vld [vmem:[#allocation3 + $0x8] sm:$0xff]
      %v3402 = vmul.f32 %v3389, %v3400
      %v3403 = vmul.f32 %v3395, %v3401
      %v3404 = vmul.f32 %v3387, %v3398
      %v3405 = vmul.f32 %v3393, %v3399
      %v3406 = vadd.f32 %v3402, %v3404
      %v3407 = vadd.f32 %v3403, %v3405
      %v3408 = vtanh.pop %v3406
      %v3409 = vtanh.pop %v3407
      %v3410 = vmul.f32 %v3391, %v3408
      %v3411 = vmul.f32 %v3397, %v3409
      %s3412 = sadd.s32 %s351, %s3057
      %v3413 = vstv %s3412
      %vm3414 = vcmp.gt.s32.totalorder %v344, %v3413
      %vm3415 = vcmp.gt.s32.totalorder %v345, %v3413
      %v3416 = vsel %vm3414, 1, 0
      %v3417 = vsel %vm3415, 1, 0
      %3418 = vset.pattern.permute.xlu0 0
      %3419 = vperm.xlu0 %3418, %v3416
      %v3420 = vpop.permute.xlu0 %3419
      %3421 = vset.pattern.permute.xlu0 0
      %3422 = vperm.xlu0 %3421, %v3417
      %v3423 = vpop.permute.xlu0 %3422
      %vm3424 = vcmp.eq.s32.totalorder %v3420, 1
      %vm3425 = vcmp.eq.s32.totalorder %v3423, 1
      %v3426 = vsel %vm3424, %v3410, %v3073
      %v3427 = vsel %vm3425, %v3411, %v3074
      %3428 = vst [vmem:[#allocation2] sm:$0xff] %v3426
      %3429 = vst [vmem:[#allocation2 + $0x8] sm:$0xff] %v3427
      %v3430 = vld [vmem:[#allocation3] sm:$0xff]
      %v3431 = vld [vmem:[#allocation3 + $0x8] sm:$0xff]
      %v3432 = vsel %vm3424, %v3406, %v3430
      %v3433 = vsel %vm3425, %v3407, %v3431
      %3434 = vst [vmem:[#allocation3] sm:$0xff] %v3432
      %3435 = vst [vmem:[#allocation3 + $0x8] sm:$0xff] %v3433
      %v3436 = vsel %vm3424, %v3410, 0.0
      %v3437 = vsel %vm3425, %v3411, 0.0
      %s3438 = smul.u32 %s3057, 16
      %s3439 = scalar_lea.vmem %s323, %s3438
      %3440 = vst [vmem:[%s3439] sm:$0xff] %v3436
      %3441 = vst [vmem:[%s3439 + $0x8] sm:$0xff] %v3437
      // Predicated region
      $region37: #{_lambda_.1} parent=31 // pred_check
        %p3442 = pneg %p336
      $region38: #{_lambda_.1} parent=31 // pred_check_branch
        %3444 = sbr.rel (%p3442) target = $region40
      $region39: #{_lambda_.1} parent=31 // pred_region
        %v3445 = vld [vmem:[#allocation2] sm:$0xff]
        %v3446 = vld [vmem:[#allocation2 + $0x8] sm:$0xff]
        %3447 = vst [vmem:[%s334] sm:$0xff] %v3445
        %3448 = vst [vmem:[%s334 + $0x8] sm:$0xff] %v3446
      $region40: #{_lambda_.1} parent=31 // pred_fallthru
        _
      %s3449 = ssub.s32 1, %s20
      %s3450 = smul.u32 %s3449, %s21
      %s3451 = ssub.s32 0, %s21
      %s3452 = smul.u32 %s20, %s3451
      %s3453 = sadd.s32 %s3450, %s3452
      %s3454 = smul.u32 8, %s3453
      %p3455 = scmp.lt.s32.totalorder %s20, 1
      %s3456 = scalar_select %p3455, %s20, 1
      %p3457 = scmp.lt.s32.totalorder %s3454, 7
      %s3458 = scalar_select %p3457, %s3454, 7
      %s3459 = smul.addr %s3458, 2
      %s3460 = smul.addr %s3456, 16
      %s3461 = sadd.s32 %s3459, %s3460
      %s3462 = smul.addr %s3461, 8
      %s3463 = scalar_lea.vmem %s3, %s3462
      %p3464 = scmp.lt.s32.totalorder %s20, 1
      %s3465 = scalar_select %p3464, %s20, 1
      %s3466 = smul.addr %s3465, 2
      %s3467 = smul.addr %s3466, 8
      %s3468 = scalar_lea.vmem %s4, %s3467
      // Predicated region
      $region41: #{_lambda_.1} parent=31 // pred_check
        %p3469 = pneg %p143
      $region42: #{_lambda_.1} parent=31 // pred_check_branch
        %3471 = sbr.rel (%p3469) target = $region44
      $region43: #{_lambda_.1} parent=31 // pred_region
        %s3472 = ssub.s32 1, %s20
        %s3473 = smul.u32 %s3472, %s21
        %s3474 = ssub.s32 0, %s21
        %s3475 = smul.u32 %s20, %s3474
        %s3476 = sadd.s32 %s3473, %s3475
        %s3477 = smul.u32 8, %s3476
      $region44: #{_lambda_.1} parent=31 // pred_fallthru
        _
      // Predicated region
      $region45: #{_lambda_.1} parent=31 // pred_check
        %p3478 = pneg %p169
      $region46: #{_lambda_.1} parent=31 // pred_check_branch
        %3480 = sbr.rel (%p3478) target = $region48
      $region47: #{_lambda_.1} parent=31 // pred_region
        _
      $region48: #{_lambda_.1} parent=31 // pred_fallthru
        _
    $region32: #{_lambda_.1} parent=5 // pred_fallthru
      _
    %p3481 = scmp.le.s32.totalorder 2, %s11
    // Predicated region
    $region49: #{_lambda_.1} parent=5 // pred_check
      %p3482 = pneg %p3481
    $region50: #{_lambda_.1} parent=5 // pred_check_branch
      %3484 = sbr.rel (%p3482) target = $region52
    $region51: #{_lambda_.1} parent=5 // pred_region
      %s3485 = ssub.s32 %s11, 2
      // Predicated region
      $region53: #{_lambda_.1} parent=51 // pred_check
        %p3486 = pneg %p149
      $region54: #{_lambda_.1} parent=51 // pred_check_branch
        %3488 = sbr.rel (%p3486) target = $region56
      $region55: #{_lambda_.1} parent=51 // pred_region
        %s3489 = ssub.s32 1, %s22
        %s3490 = smul.u32 %s3489, %s23
        %s3491 = ssub.s32 0, %s23
        %s3492 = smul.u32 %s22, %s3491
        %s3493 = sadd.s32 %s3490, %s3492
        %s3494 = smul.u32 8, %s3493
        %p3495 = scmp.lt.s32.totalorder %s22, 1
        %s3496 = scalar_select %p3495, %s22, 1
        %p3497 = scmp.lt.s32.totalorder %s3494, 7
        %s3498 = scalar_select %p3497, %s3494, 7
        %s3499 = smul.addr %s3498, 2
        %s3500 = smul.addr %s3496, 16
        %s3501 = sadd.s32 %s3499, %s3500
        %s3502 = smul.addr %s3501, 8
        %s3503 = scalar_lea.vmem %s3, %s3502
      $region56: #{_lambda_.1} parent=51 // pred_fallthru
        _
      // Predicated region
      $region57: #{_lambda_.1} parent=51 // pred_check
        %p3504 = pneg %p175
      $region58: #{_lambda_.1} parent=51 // pred_check_branch
        %3506 = sbr.rel (%p3504) target = $region60
      $region59: #{_lambda_.1} parent=51 // pred_region
        %p3507 = scmp.lt.s32.totalorder %s22, 1
        %s3508 = scalar_select %p3507, %s22, 1
        %s3509 = smul.addr %s3508, 2
        %s3510 = smul.addr %s3509, 8
        %s3511 = scalar_lea.vmem %s4, %s3510
      $region60: #{_lambda_.1} parent=51 // pred_fallthru
        _
    $region52: #{_lambda_.1} parent=5 // pred_fallthru
      _
  $region6: #{_lambda_.1} parent=0 // loop_footer
    %s15 = sadd.s32 1, %s11
  $region7: #{_lambda_.1} parent=0 // loop_footer_branch
    %10 = sbr.rel target = $region3
  $region8: #{_lambda_.1} parent=0 // loop_exit
    _

</llo_original>
